<compile_context>
chip_gen: v6e
topology: v6e:2x2x1
jax: 0.10.0
libtpu: 0.0.40
codegen_flags: <defaults>
</compile_context>

<pallas_src>
import jax
import jax.numpy as jnp
from jax import lax
from jax.experimental import pallas as pl
from jax.experimental.pallas import tpu as pltpu

E_LAMBDA = 1e-4      # simam e_lambda
BN_EPS = 1e-5        # PyTorch BatchNorm2d default eps


def _round_up(x, m):
    return ((x + m - 1) // m) * m


def _make_bfam_kernel(C, H, W, NB):
    HW = H * W
    PADF = 4 * W + 4                          # max |drow*W + dcol|, dilation<=4
    PADL = _round_up(PADF, 128)               # aligned image base inside slabs
    XPW = _round_up(PADL + HW + PADF, 128)    # padded slab lane width

    def kernel(i1_ref, i2_ref, wf_ref, fsh_ref, ow_ref, osh_ref, out_ref,
               xpad, spad, cslab, oslab):
        # ---- zero the static pad regions of the shift slabs (cheap, done
        #      every step so each core's scratch is always valid) ------------
        xpad[:, 0:PADL] = jnp.zeros((2 * C, PADL), jnp.float32)
        xpad[:, PADL + HW:XPW] = jnp.zeros((2 * C, XPW - PADL - HW), jnp.float32)
        spad[:, 0:PADL] = jnp.zeros((C, PADL), jnp.float32)
        spad[:, PADL + HW:XPW] = jnp.zeros((C, XPW - PADL - HW), jnp.float32)

        col = lax.broadcasted_iota(jnp.int32, (1, HW), 1) % W
        mask_cache = {}

        def col_mask(dcol):
            # lanes whose source pixel stays inside the same image row
            if dcol not in mask_cache:
                mask_cache[dcol] = (col < (W - dcol)) if dcol > 0 else (col >= -dcol)
            return mask_cache[dcol]

        def window(slab_val, off, dcol):
            # slab_val[:, PADL+off : PADL+off+HW]; pads are zero so row
            # over/underflow is handled for free, only column wrap is masked.
            win = slab_val[:, PADL + off: PADL + off + HW]
            if dcol != 0:
                win = jnp.where(col_mask(dcol), win, 0.0)
            return win

        def simam(x):
            mu = jnp.mean(x, axis=1, keepdims=True)
            d2 = (x - mu) ** 2
            denom = 4.0 * (jnp.sum(d2, axis=1, keepdims=True)
                           * (1.0 / (HW - 1)) + E_LAMBDA)
            y = d2 * pl.reciprocal(denom, approx=False) + 0.5
            return x * jax.nn.sigmoid(y)

        # ---- pass 1: im2col of the 36 dilated taps for every image ---------
        for b in range(NB):
            xpad[0:C, PADL:PADL + HW] = i1_ref[b]
            xpad[C:2 * C, PADL:PADL + HW] = i2_ref[b]
            xa = xpad[...]                                      # (2C, XPW)
            t = 0
            for d in (1, 2, 3, 4):
                for kh in (-1, 0, 1):
                    for kw in (-1, 0, 1):
                        cslab[t * 2 * C:(t + 1) * 2 * C,
                              b * HW:(b + 1) * HW] = window(xa, d * (kh * W + kw),
                                                            d * kw)
                        t += 1

        # ---- grouped dilated convs + fuse 1x1 conv + BN + ReLU, all as one
        #      MXU matmul against the offline-folded (C, 72C) weight ---------
        fuse_all = jnp.dot(wf_ref[...], cslab[...],
                           preferred_element_type=jnp.float32)
        fuse_all = jnp.maximum(fuse_all + fsh_ref[...], 0.0)    # (C, NB*HW)

        # ---- pass 2: SimAM mixing + im2col of the 3x3 out conv -------------
        for b in range(NB):
            fuse = fuse_all[:, b * HW:(b + 1) * HW]
            i1 = i1_ref[b]
            i2 = i2_ref[b]
            s = (simam(fuse) + i1 + i2
                 + simam(i2) * fuse + simam(i1) * fuse)         # (C, HW)
            spad[:, PADL:PADL + HW] = s
            sa = spad[...]                                      # (C, XPW)
            t = 0
            for kh in (-1, 0, 1):
                for kw in (-1, 0, 1):
                    oslab[t * C:(t + 1) * C,
                          b * HW:(b + 1) * HW] = window(sa, kh * W + kw, kw)
                    t += 1

        # ---- out 3x3 conv (single im2col matmul) + BN + ReLU + SimAM -------
        o_all = jnp.dot(ow_ref[...], oslab[...],
                        preferred_element_type=jnp.float32)
        o_all = jnp.maximum(o_all + osh_ref[...], 0.0)          # (C, NB*HW)
        for b in range(NB):
            out_ref[b] = simam(o_all[:, b * HW:(b + 1) * HW])

    return kernel, XPW


def _choose_images_per_block(B):
    """Images folded into one grid step: fat single step on single-TC chips,
    a 2-way parallel split on v7x (2 TensorCores)."""
    kind = ""
    try:
        kind = jax.devices()[0].device_kind.lower()
    except Exception:
        pass
    n_tc = 2 if "v7" in kind else 1
    nb = B // n_tc if (n_tc > 1 and B % n_tc == 0) else B
    nb = max(1, min(nb, 8))          # cap the VMEM im2col slab (~576 KB/image)
    while B % nb:
        nb -= 1
    return nb


def bfam_forward(inp1, inp2, p):
    B, C, H, W = inp1.shape
    HW = H * W
    NB = _choose_images_per_block(B)
    kernel, XPW = _make_bfam_kernel(C, H, W, NB)

    i1 = inp1.astype(jnp.float32).reshape(B, C, HW)
    i2 = inp2.astype(jnp.float32).reshape(B, C, HW)

    # --- fold grouped dilated-conv weights + fuse 1x1 weight + BN scale into
    #     one (C, 4*9*2C) matrix whose column order matches the in-kernel
    #     im2col slab row order (k, kh, kw, x-channel = 2c+g). ---------------
    f_scale = p["g_fuse"] / jnp.sqrt(p["v_fuse"] + BN_EPS)            # (C,)
    fw = p["w_fuse"][:, :, 0, 0]                                      # (C, 4C)
    parts = []
    for ki in range(4):
        wk = p[f"w{ki + 1}"].reshape(C, 2, 9)                         # (c, g, tap)
        fwk = fw[:, ki * C:(ki + 1) * C]                              # (o, c)
        blk = jnp.einsum("oc,cgt->otcg", fwk, wk)                     # (o, 9, c, 2)
        parts.append(blk.reshape(C, 9, 2 * C))
    wf_s = (jnp.concatenate(parts, axis=1).reshape(C, 72 * C)
            * f_scale[:, None])                                       # (C, 72C)
    b_cat = jnp.concatenate([p[f"b{k}"] for k in (1, 2, 3, 4)])       # (4C,)
    f_shift = (p["be_fuse"]
               + (p["b_fuse"] + fw @ b_cat - p["m_fuse"]) * f_scale).reshape(C, 1)

    # --- out 3x3 conv packed for im2col ((kh, kw, c_in) along K) + BN fold --
    o_scale = p["g_out"] / jnp.sqrt(p["v_out"] + BN_EPS)
    ow_s = (p["w_out"].transpose(0, 2, 3, 1).reshape(C, 9 * C)
            * o_scale[:, None])                                       # (C, 9C)
    o_shift = (p["be_out"] + (p["b_out"] - p["m_out"]) * o_scale).reshape(C, 1)

    out = pl.pallas_call(
        kernel,
        out_shape=jax.ShapeDtypeStruct((B, C, HW), jnp.float32),
        grid_spec=pltpu.PrefetchScalarGridSpec(
            num_scalar_prefetch=0,
            grid=(B // NB,),
            in_specs=[
                pl.BlockSpec((NB, C, HW), lambda g: (g, 0, 0)),       # inp1
                pl.BlockSpec((NB, C, HW), lambda g: (g, 0, 0)),       # inp2
                pl.BlockSpec((C, 72 * C), lambda g: (0, 0)),          # folded fuse W
                pl.BlockSpec((C, 1), lambda g: (0, 0)),               # fuse shift
                pl.BlockSpec((C, 9 * C), lambda g: (0, 0)),           # out conv W
                pl.BlockSpec((C, 1), lambda g: (0, 0)),               # out shift
            ],
            out_specs=pl.BlockSpec((NB, C, HW), lambda g: (g, 0, 0)),
            scratch_shapes=[
                pltpu.VMEM((2 * C, XPW), jnp.float32),                # padded input slab
                pltpu.VMEM((C, XPW), jnp.float32),                    # padded s slab
                pltpu.VMEM((72 * C, NB * HW), jnp.float32),           # conv+fuse im2col
                pltpu.VMEM((9 * C, NB * HW), jnp.float32),            # out-conv im2col
            ],
        ),
        compiler_params=pltpu.CompilerParams(
            dimension_semantics=("parallel",)),
    )(i1, i2, wf_s, f_shift, ow_s, o_shift)
    return out.reshape(B, C, H, W)


bfam_forward_jit = jax.jit(bfam_forward)


# --------------------------- pure-JAX reference ------------------------------
def _simam_ref(x):
    _, _, h, w = x.shape
    n = h * w - 1
    mu = x.mean(axis=(2, 3), keepdims=True)
    d2 = (x - mu) ** 2
    y = d2 / (4 * (d2.sum(axis=(2, 3), keepdims=True) / n + E_LAMBDA)) + 0.5
    return x * jax.nn.sigmoid(y)


def _conv_ref(x, w, b, padding, dilation, groups):
    y = lax.conv_general_dilated(
        x, w, window_strides=(1, 1),
        padding=((padding, padding), (padding, padding)),
        rhs_dilation=(dilation, dilation),
        dimension_numbers=("NCHW", "OIHW", "NCHW"),
        feature_group_count=groups,
        precision=lax.Precision.HIGHEST)
    return y + b[None, :, None, None]


def _bn_relu_ref(x, gamma, beta, mean, var):
    y = (x - mean[None, :, None, None]) / jnp.sqrt(var[None, :, None, None] + BN_EPS)
    y = y * gamma[None, :, None, None] + beta[None, :, None, None]
    return jnp.maximum(y, 0.0)


def bfam_ref(inp1, inp2, p):
    C = inp1.shape[1]
    x = jnp.concatenate([inp1, inp2], axis=1)
    cs = [_conv_ref(x, p[f"w{k}"], p[f"b{k}"], k, k, C) for k in (1, 2, 3, 4)]
    cat = jnp.concatenate(cs, axis=1)
    fuse = _conv_ref(cat, p["w_fuse"], p["b_fuse"], 0, 1, 1)
    fuse = _bn_relu_ref(fuse, p["g_fuse"], p["be_fuse"], p["m_fuse"], p["v_fuse"])
    i1s = _simam_ref(inp1)
    i2s = _simam_ref(inp2)
    i1m = i1s * fuse
    i2m = i2s * fuse
    fuse = _simam_ref(fuse)
    out = _conv_ref(fuse + inp1 + inp2 + i2m + i1m, p["w_out"], p["b_out"], 1, 1, 1)
    out = _bn_relu_ref(out, p["g_out"], p["be_out"], p["m_out"], p["v_out"])
    return _simam_ref(out)


if __name__ == "__main__":
    key = jax.random.PRNGKey(0)
    B, C, H, W = 2, 8, 16, 16      # BFAM(inp=8, out=8); inp1/inp2 are (B, C, H, W)
    keys = iter(jax.random.split(key, 24))

    inp1 = jax.random.normal(next(keys), (B, C, H, W), jnp.float32)
    inp2 = jax.random.normal(next(keys), (B, C, H, W), jnp.float32)

    params = {}
    for k in (1, 2, 3, 4):
        params[f"w{k}"] = 0.2 * jax.random.normal(next(keys), (C, 2, 3, 3), jnp.float32)
        params[f"b{k}"] = 0.1 * jax.random.normal(next(keys), (C,), jnp.float32)
    params["w_fuse"] = 0.2 * jax.random.normal(next(keys), (C, 4 * C, 1, 1), jnp.float32)
    params["b_fuse"] = 0.1 * jax.random.normal(next(keys), (C,), jnp.float32)
    params["g_fuse"] = 1.0 + 0.1 * jax.random.normal(next(keys), (C,), jnp.float32)
    params["be_fuse"] = 0.1 * jax.random.normal(next(keys), (C,), jnp.float32)
    params["m_fuse"] = 0.1 * jax.random.normal(next(keys), (C,), jnp.float32)
    params["v_fuse"] = jax.random.uniform(next(keys), (C,), jnp.float32, 0.5, 1.5)
    params["w_out"] = 0.2 * jax.random.normal(next(keys), (C, C, 3, 3), jnp.float32)
    params["b_out"] = 0.1 * jax.random.normal(next(keys), (C,), jnp.float32)
    params["g_out"] = 1.0 + 0.1 * jax.random.normal(next(keys), (C,), jnp.float32)
    params["be_out"] = 0.1 * jax.random.normal(next(keys), (C,), jnp.float32)
    params["m_out"] = 0.1 * jax.random.normal(next(keys), (C,), jnp.float32)
    params["v_out"] = jax.random.uniform(next(keys), (C,), jnp.float32, 0.5, 1.5)

    out = jax.block_until_ready(bfam_forward_jit(inp1, inp2, params))
    ref = jax.block_until_ready(bfam_ref(inp1, inp2, params))
    assert out.shape == (B, C, H, W), out.shape
    err = float(jnp.max(jnp.abs(out - ref)))
    if err > 2e-3:
        raise AssertionError(f"mismatch vs reference: max abs err {err}")
    print("KERNEL_OK")
</pallas_src>

<mosaic_0001>
module attributes {stable_mosaic.version = 11 : i64} {
  func.func @kernel(%arg0: i32, %arg1: memref<2x8x256xf32, #tpu.memory_space<vmem>>, %arg2: memref<2x8x256xf32, #tpu.memory_space<vmem>>, %arg3: memref<8x576xf32, #tpu.memory_space<vmem>>, %arg4: memref<8x1xf32, #tpu.memory_space<vmem>>, %arg5: memref<8x72xf32, #tpu.memory_space<vmem>>, %arg6: memref<8x1xf32, #tpu.memory_space<vmem>>, %arg7: memref<2x8x256xf32, #tpu.memory_space<vmem>>, %arg8: memref<16x512xf32, #tpu.memory_space<vmem>>, %arg9: memref<8x512xf32, #tpu.memory_space<vmem>>, %arg10: memref<576x512xf32, #tpu.memory_space<vmem>>, %arg11: memref<72x512xf32, #tpu.memory_space<vmem>>) attributes {dimension_semantics = [#tpu.dimension_semantics<parallel>], iteration_bounds = array<i64: 1>, scalar_prefetch = 0 : i64, scratch_operands = 4 : i64, tpu.core_type = #tpu.core_type<tc>, window_params = [{transform_indices = @transform_0, window_bounds = array<i64: 2, 8, 256>}, {transform_indices = @transform_1, window_bounds = array<i64: 2, 8, 256>}, {pipeline_mode = #tpu.pipeline_mode<synchronous>, transform_indices = @transform_2, window_bounds = array<i64: 8, 576>}, {pipeline_mode = #tpu.pipeline_mode<synchronous>, transform_indices = @transform_3, window_bounds = array<i64: 8, 1>}, {pipeline_mode = #tpu.pipeline_mode<synchronous>, transform_indices = @transform_4, window_bounds = array<i64: 8, 72>}, {pipeline_mode = #tpu.pipeline_mode<synchronous>, transform_indices = @transform_5, window_bounds = array<i64: 8, 1>}, {transform_indices = @transform_6, window_bounds = array<i64: 2, 8, 256>}]} {
    %cst = arith.constant 0.000000e+00 : f32
    %0 = vector.broadcast %cst : f32 to vector<16x128xf32>
    %c0 = arith.constant 0 : index
    %c0_0 = arith.constant 0 : index
    %1 = vector.load %arg8[%c0, %c0_0] : memref<16x512xf32, #tpu.memory_space<vmem>>, vector<16x128xf32>
    tpu.vector_store %arg8[%c0, %c0_0], %0 {strides = array<i32>} : memref<16x512xf32, #tpu.memory_space<vmem>>, vector<16x128xf32>,
    %cst_1 = arith.constant 0.000000e+00 : f32
    %2 = vector.broadcast %cst_1 : f32 to vector<16x128xf32>
    %c0_2 = arith.constant 0 : index
    %c384 = arith.constant 384 : index
    %3 = vector.load %arg8[%c0_2, %c384] : memref<16x512xf32, #tpu.memory_space<vmem>>, vector<16x128xf32>
    tpu.vector_store %arg8[%c0_2, %c384], %2 {strides = array<i32>} : memref<16x512xf32, #tpu.memory_space<vmem>>, vector<16x128xf32>,
    %cst_3 = arith.constant 0.000000e+00 : f32
    %4 = vector.broadcast %cst_3 : f32 to vector<8x128xf32>
    %c0_4 = arith.constant 0 : index
    %c0_5 = arith.constant 0 : index
    %5 = vector.load %arg9[%c0_4, %c0_5] : memref<8x512xf32, #tpu.memory_space<vmem>>, vector<8x128xf32>
    tpu.vector_store %arg9[%c0_4, %c0_5], %4 {strides = array<i32>} : memref<8x512xf32, #tpu.memory_space<vmem>>, vector<8x128xf32>,
    %cst_6 = arith.constant 0.000000e+00 : f32
    %6 = vector.broadcast %cst_6 : f32 to vector<8x128xf32>
    %c0_7 = arith.constant 0 : index
    %c384_8 = arith.constant 384 : index
    %7 = vector.load %arg9[%c0_7, %c384_8] : memref<8x512xf32, #tpu.memory_space<vmem>>, vector<8x128xf32>
    tpu.vector_store %arg9[%c0_7, %c384_8], %6 {strides = array<i32>} : memref<8x512xf32, #tpu.memory_space<vmem>>, vector<8x128xf32>,
    %8 = tpu.iota {dimensions = array<i32: 1>} : vector<1x256xi32>
    %c16_i32 = arith.constant 16 : i32
    %c0_i32 = arith.constant 0 : i32
    %9 = arith.cmpi eq, %c16_i32, %c0_i32 : i32
    %c1_i32 = arith.constant 1 : i32
    %10 = arith.select %9, %c1_i32, %c16_i32 : i32
    %11 = vector.broadcast %10 : i32 to vector<1x256xi32>
    %12 = arith.remsi %8, %11 : vector<1x256xi32>
    %c0_i32_9 = arith.constant 0 : i32
    %13 = vector.broadcast %c0_i32_9 : i32 to vector<1x256xi32>
    %14 = arith.cmpi ne, %12, %13 : vector<1x256xi32>
    %c0_i32_10 = arith.constant 0 : i32
    %15 = vector.broadcast %c0_i32_10 : i32 to vector<1x256xi32>
    %16 = arith.cmpi slt, %12, %15 : vector<1x256xi32>
    %c0_i32_11 = arith.constant 0 : i32
    %17 = arith.cmpi slt, %10, %c0_i32_11 : i32
    %18 = vector.broadcast %17 : i1 to vector<1x256xi1>
    %19 = vector.broadcast %18 : vector<1x256xi1> to vector<1x256xi1>
    %20 = arith.xori %16, %19 : vector<1x256xi1>
    %21 = arith.andi %20, %14 : vector<1x256xi1>
    %22 = vector.broadcast %10 : i32 to vector<1x256xi32>
    %23 = arith.addi %12, %22 : vector<1x256xi32>
    %24 = arith.select %21, %23, %12 : vector<1x256xi1>, vector<1x256xi32>
    %c0_12 = arith.constant 0 : index
    %c0_13 = arith.constant 0 : index
    %c0_14 = arith.constant 0 : index
    %25 = vector.load %arg1[%c0_12, %c0_13, %c0_14] : memref<2x8x256xf32, #tpu.memory_space<vmem>>, vector<1x8x256xf32>
    %26 = vector.shape_cast %25 : vector<1x8x256xf32> to vector<8x256xf32>
    %c0_15 = arith.constant 0 : index
    %c128 = arith.constant 128 : index
    %27 = vector.load %arg8[%c0_15, %c128] : memref<16x512xf32, #tpu.memory_space<vmem>>, vector<8x256xf32>
    tpu.vector_store %arg8[%c0_15, %c128], %26 {strides = array<i32>} : memref<16x512xf32, #tpu.memory_space<vmem>>, vector<8x256xf32>,
    %c0_16 = arith.constant 0 : index
    %c0_17 = arith.constant 0 : index
    %c0_18 = arith.constant 0 : index
    %28 = vector.load %arg2[%c0_16, %c0_17, %c0_18] : memref<2x8x256xf32, #tpu.memory_space<vmem>>, vector<1x8x256xf32>
    %29 = vector.shape_cast %28 : vector<1x8x256xf32> to vector<8x256xf32>
    %c8 = arith.constant 8 : index
    %c128_19 = arith.constant 128 : index
    %30 = vector.load %arg8[%c8, %c128_19] : memref<16x512xf32, #tpu.memory_space<vmem>>, vector<8x256xf32>
    tpu.vector_store %arg8[%c8, %c128_19], %29 {strides = array<i32>} : memref<16x512xf32, #tpu.memory_space<vmem>>, vector<8x256xf32>,
    %c0_20 = arith.constant 0 : index
    %c0_21 = arith.constant 0 : index
    %31 = vector.load %arg8[%c0_20, %c0_21] : memref<16x512xf32, #tpu.memory_space<vmem>>, vector<16x512xf32>
    %32 = vector.extract_strided_slice %31 {offsets = [0, 111], sizes = [16, 256], strides = [1, 1]} : vector<16x512xf32> to vector<16x256xf32>
    %c1_i32_22 = arith.constant 1 : i32
    %33 = vector.broadcast %c1_i32_22 : i32 to vector<1x256xi32>
    %34 = arith.cmpi sge, %24, %33 : vector<1x256xi32>
    %cst_23 = arith.constant 0.000000e+00 : f32
    %35 = vector.shape_cast %34 : vector<1x256xi1> to vector<1x256xi1>
    %36 = vector.broadcast %35 : vector<1x256xi1> to vector<16x256xi1>
    %37 = vector.broadcast %cst_23 : f32 to vector<16x256xf32>
    %38 = arith.select %36, %32, %37 : vector<16x256xi1>, vector<16x256xf32>
    %c0_24 = arith.constant 0 : index
    %c0_25 = arith.constant 0 : index
    %39 = vector.load %arg10[%c0_24, %c0_25] : memref<576x512xf32, #tpu.memory_space<vmem>>, vector<16x256xf32>
    tpu.vector_store %arg10[%c0_24, %c0_25], %38 {strides = array<i32>} : memref<576x512xf32, #tpu.memory_space<vmem>>, vector<16x256xf32>,
    %40 = vector.extract_strided_slice %31 {offsets = [0, 112], sizes = [16, 256], strides = [1, 1]} : vector<16x512xf32> to vector<16x256xf32>
    %c16 = arith.constant 16 : index
    %c0_26 = arith.constant 0 : index
    %41 = vector.load %arg10[%c16, %c0_26] : memref<576x512xf32, #tpu.memory_space<vmem>>, vector<16x256xf32>
    tpu.vector_store %arg10[%c16, %c0_26], %40 {strides = array<i32>} : memref<576x512xf32, #tpu.memory_space<vmem>>, vector<16x256xf32>,
    %42 = vector.extract_strided_slice %31 {offsets = [0, 113], sizes = [16, 256], strides = [1, 1]} : vector<16x512xf32> to vector<16x256xf32>
    %c15_i32 = arith.constant 15 : i32
    %43 = vector.broadcast %c15_i32 : i32 to vector<1x256xi32>
    %44 = arith.cmpi slt, %24, %43 : vector<1x256xi32>
    %cst_27 = arith.constant 0.000000e+00 : f32
    %45 = vector.shape_cast %44 : vector<1x256xi1> to vector<1x256xi1>
    %46 = vector.broadcast %45 : vector<1x256xi1> to vector<16x256xi1>
    %47 = vector.broadcast %cst_27 : f32 to vector<16x256xf32>
    %48 = arith.select %46, %42, %47 : vector<16x256xi1>, vector<16x256xf32>
    %c32 = arith.constant 32 : index
    %c0_28 = arith.constant 0 : index
    %49 = vector.load %arg10[%c32, %c0_28] : memref<576x512xf32, #tpu.memory_space<vmem>>, vector<16x256xf32>
    tpu.vector_store %arg10[%c32, %c0_28], %48 {strides = array<i32>} : memref<576x512xf32, #tpu.memory_space<vmem>>, vector<16x256xf32>,
    %50 = vector.extract_strided_slice %31 {offsets = [0, 127], sizes = [16, 256], strides = [1, 1]} : vector<16x512xf32> to vector<16x256xf32>
    %cst_29 = arith.constant 0.000000e+00 : f32
    %51 = vector.shape_cast %34 : vector<1x256xi1> to vector<1x256xi1>
    %52 = vector.broadcast %51 : vector<1x256xi1> to vector<16x256xi1>
    %53 = vector.broadcast %cst_29 : f32 to vector<16x256xf32>
    %54 = arith.select %52, %50, %53 : vector<16x256xi1>, vector<16x256xf32>
    %c48 = arith.constant 48 : index
    %c0_30 = arith.constant 0 : index
    %55 = vector.load %arg10[%c48, %c0_30] : memref<576x512xf32, #tpu.memory_space<vmem>>, vector<16x256xf32>
    tpu.vector_store %arg10[%c48, %c0_30], %54 {strides = array<i32>} : memref<576x512xf32, #tpu.memory_space<vmem>>, vector<16x256xf32>,
    %56 = vector.extract_strided_slice %31 {offsets = [0, 128], sizes = [16, 256], strides = [1, 1]} : vector<16x512xf32> to vector<16x256xf32>
    %c64 = arith.constant 64 : index
    %c0_31 = arith.constant 0 : index
    %57 = vector.load %arg10[%c64, %c0_31] : memref<576x512xf32, #tpu.memory_space<vmem>>, vector<16x256xf32>
    tpu.vector_store %arg10[%c64, %c0_31], %56 {strides = array<i32>} : memref<576x512xf32, #tpu.memory_space<vmem>>, vector<16x256xf32>,
    %58 = vector.extract_strided_slice %31 {offsets = [0, 129], sizes = [16, 256], strides = [1, 1]} : vector<16x512xf32> to vector<16x256xf32>
    %cst_32 = arith.constant 0.000000e+00 : f32
    %59 = vector.shape_cast %44 : vector<1x256xi1> to vector<1x256xi1>
    %60 = vector.broadcast %59 : vector<1x256xi1> to vector<16x256xi1>
    %61 = vector.broadcast %cst_32 : f32 to vector<16x256xf32>
    %62 = arith.select %60, %58, %61 : vector<16x256xi1>, vector<16x256xf32>
    %c80 = arith.constant 80 : index
    %c0_33 = arith.constant 0 : index
    %63 = vector.load %arg10[%c80, %c0_33] : memref<576x512xf32, #tpu.memory_space<vmem>>, vector<16x256xf32>
    tpu.vector_store %arg10[%c80, %c0_33], %62 {strides = array<i32>} : memref<576x512xf32, #tpu.memory_space<vmem>>, vector<16x256xf32>,
    %64 = vector.extract_strided_slice %31 {offsets = [0, 143], sizes = [16, 256], strides = [1, 1]} : vector<16x512xf32> to vector<16x256xf32>
    %cst_34 = arith.constant 0.000000e+00 : f32
    %65 = vector.shape_cast %34 : vector<1x256xi1> to vector<1x256xi1>
    %66 = vector.broadcast %65 : vector<1x256xi1> to vector<16x256xi1>
    %67 = vector.broadcast %cst_34 : f32 to vector<16x256xf32>
    %68 = arith.select %66, %64, %67 : vector<16x256xi1>, vector<16x256xf32>
    %c96 = arith.constant 96 : index
    %c0_35 = arith.constant 0 : index
    %69 = vector.load %arg10[%c96, %c0_35] : memref<576x512xf32, #tpu.memory_space<vmem>>, vector<16x256xf32>
    tpu.vector_store %arg10[%c96, %c0_35], %68 {strides = array<i32>} : memref<576x512xf32, #tpu.memory_space<vmem>>, vector<16x256xf32>,
    %70 = vector.extract_strided_slice %31 {offsets = [0, 144], sizes = [16, 256], strides = [1, 1]} : vector<16x512xf32> to vector<16x256xf32>
    %c112 = arith.constant 112 : index
    %c0_36 = arith.constant 0 : index
    %71 = vector.load %arg10[%c112, %c0_36] : memref<576x512xf32, #tpu.memory_space<vmem>>, vector<16x256xf32>
    tpu.vector_store %arg10[%c112, %c0_36], %70 {strides = array<i32>} : memref<576x512xf32, #tpu.memory_space<vmem>>, vector<16x256xf32>,
    %72 = vector.extract_strided_slice %31 {offsets = [0, 145], sizes = [16, 256], strides = [1, 1]} : vector<16x512xf32> to vector<16x256xf32>
    %cst_37 = arith.constant 0.000000e+00 : f32
    %73 = vector.shape_cast %44 : vector<1x256xi1> to vector<1x256xi1>
    %74 = vector.broadcast %73 : vector<1x256xi1> to vector<16x256xi1>
    %75 = vector.broadcast %cst_37 : f32 to vector<16x256xf32>
    %76 = arith.select %74, %72, %75 : vector<16x256xi1>, vector<16x256xf32>
    %c128_38 = arith.constant 128 : index
    %c0_39 = arith.constant 0 : index
    %77 = vector.load %arg10[%c128_38, %c0_39] : memref<576x512xf32, #tpu.memory_space<vmem>>, vector<16x256xf32>
    tpu.vector_store %arg10[%c128_38, %c0_39], %76 {strides = array<i32>} : memref<576x512xf32, #tpu.memory_space<vmem>>, vector<16x256xf32>,
    %78 = vector.extract_strided_slice %31 {offsets = [0, 94], sizes = [16, 256], strides = [1, 1]} : vector<16x512xf32> to vector<16x256xf32>
    %c2_i32 = arith.constant 2 : i32
    %79 = vector.broadcast %c2_i32 : i32 to vector<1x256xi32>
    %80 = arith.cmpi sge, %24, %79 : vector<1x256xi32>
    %cst_40 = arith.constant 0.000000e+00 : f32
    %81 = vector.shape_cast %80 : vector<1x256xi1> to vector<1x256xi1>
    %82 = vector.broadcast %81 : vector<1x256xi1> to vector<16x256xi1>
    %83 = vector.broadcast %cst_40 : f32 to vector<16x256xf32>
    %84 = arith.select %82, %78, %83 : vector<16x256xi1>, vector<16x256xf32>
    %c144 = arith.constant 144 : index
    %c0_41 = arith.constant 0 : index
    %85 = vector.load %arg10[%c144, %c0_41] : memref<576x512xf32, #tpu.memory_space<vmem>>, vector<16x256xf32>
    tpu.vector_store %arg10[%c144, %c0_41], %84 {strides = array<i32>} : memref<576x512xf32, #tpu.memory_space<vmem>>, vector<16x256xf32>,
    %86 = vector.extract_strided_slice %31 {offsets = [0, 96], sizes = [16, 256], strides = [1, 1]} : vector<16x512xf32> to vector<16x256xf32>
    %c160 = arith.constant 160 : index
    %c0_42 = arith.constant 0 : index
    %87 = vector.load %arg10[%c160, %c0_42] : memref<576x512xf32, #tpu.memory_space<vmem>>, vector<16x256xf32>
    tpu.vector_store %arg10[%c160, %c0_42], %86 {strides = array<i32>} : memref<576x512xf32, #tpu.memory_space<vmem>>, vector<16x256xf32>,
    %88 = vector.extract_strided_slice %31 {offsets = [0, 98], sizes = [16, 256], strides = [1, 1]} : vector<16x512xf32> to vector<16x256xf32>
    %c14_i32 = arith.constant 14 : i32
    %89 = vector.broadcast %c14_i32 : i32 to vector<1x256xi32>
    %90 = arith.cmpi slt, %24, %89 : vector<1x256xi32>
    %cst_43 = arith.constant 0.000000e+00 : f32
    %91 = vector.shape_cast %90 : vector<1x256xi1> to vector<1x256xi1>
    %92 = vector.broadcast %91 : vector<1x256xi1> to vector<16x256xi1>
    %93 = vector.broadcast %cst_43 : f32 to vector<16x256xf32>
    %94 = arith.select %92, %88, %93 : vector<16x256xi1>, vector<16x256xf32>
    %c176 = arith.constant 176 : index
    %c0_44 = arith.constant 0 : index
    %95 = vector.load %arg10[%c176, %c0_44] : memref<576x512xf32, #tpu.memory_space<vmem>>, vector<16x256xf32>
    tpu.vector_store %arg10[%c176, %c0_44], %94 {strides = array<i32>} : memref<576x512xf32, #tpu.memory_space<vmem>>, vector<16x256xf32>,
    %96 = vector.extract_strided_slice %31 {offsets = [0, 126], sizes = [16, 256], strides = [1, 1]} : vector<16x512xf32> to vector<16x256xf32>
    %cst_45 = arith.constant 0.000000e+00 : f32
    %97 = vector.shape_cast %80 : vector<1x256xi1> to vector<1x256xi1>
    %98 = vector.broadcast %97 : vector<1x256xi1> to vector<16x256xi1>
    %99 = vector.broadcast %cst_45 : f32 to vector<16x256xf32>
    %100 = arith.select %98, %96, %99 : vector<16x256xi1>, vector<16x256xf32>
    %c192 = arith.constant 192 : index
    %c0_46 = arith.constant 0 : index
    %101 = vector.load %arg10[%c192, %c0_46] : memref<576x512xf32, #tpu.memory_space<vmem>>, vector<16x256xf32>
    tpu.vector_store %arg10[%c192, %c0_46], %100 {strides = array<i32>} : memref<576x512xf32, #tpu.memory_space<vmem>>, vector<16x256xf32>,
    %102 = vector.extract_strided_slice %31 {offsets = [0, 128], sizes = [16, 256], strides = [1, 1]} : vector<16x512xf32> to vector<16x256xf32>
    %c208 = arith.constant 208 : index
    %c0_47 = arith.constant 0 : index
    %103 = vector.load %arg10[%c208, %c0_47] : memref<576x512xf32, #tpu.memory_space<vmem>>, vector<16x256xf32>
    tpu.vector_store %arg10[%c208, %c0_47], %102 {strides = array<i32>} : memref<576x512xf32, #tpu.memory_space<vmem>>, vector<16x256xf32>,
    %104 = vector.extract_strided_slice %31 {offsets = [0, 130], sizes = [16, 256], strides = [1, 1]} : vector<16x512xf32> to vector<16x256xf32>
    %cst_48 = arith.constant 0.000000e+00 : f32
    %105 = vector.shape_cast %90 : vector<1x256xi1> to vector<1x256xi1>
    %106 = vector.broadcast %105 : vector<1x256xi1> to vector<16x256xi1>
    %107 = vector.broadcast %cst_48 : f32 to vector<16x256xf32>
    %108 = arith.select %106, %104, %107 : vector<16x256xi1>, vector<16x256xf32>
    %c224 = arith.constant 224 : index
    %c0_49 = arith.constant 0 : index
    %109 = vector.load %arg10[%c224, %c0_49] : memref<576x512xf32, #tpu.memory_space<vmem>>, vector<16x256xf32>
    tpu.vector_store %arg10[%c224, %c0_49], %108 {strides = array<i32>} : memref<576x512xf32, #tpu.memory_space<vmem>>, vector<16x256xf32>,
    %110 = vector.extract_strided_slice %31 {offsets = [0, 158], sizes = [16, 256], strides = [1, 1]} : vector<16x512xf32> to vector<16x256xf32>
    %cst_50 = arith.constant 0.000000e+00 : f32
    %111 = vector.shape_cast %80 : vector<1x256xi1> to vector<1x256xi1>
    %112 = vector.broadcast %111 : vector<1x256xi1> to vector<16x256xi1>
    %113 = vector.broadcast %cst_50 : f32 to vector<16x256xf32>
    %114 = arith.select %112, %110, %113 : vector<16x256xi1>, vector<16x256xf32>
    %c240 = arith.constant 240 : index
    %c0_51 = arith.constant 0 : index
    %115 = vector.load %arg10[%c240, %c0_51] : memref<576x512xf32, #tpu.memory_space<vmem>>, vector<16x256xf32>
    tpu.vector_store %arg10[%c240, %c0_51], %114 {strides = array<i32>} : memref<576x512xf32, #tpu.memory_space<vmem>>, vector<16x256xf32>,
    %116 = vector.extract_strided_slice %31 {offsets = [0, 160], sizes = [16, 256], strides = [1, 1]} : vector<16x512xf32> to vector<16x256xf32>
    %c256 = arith.constant 256 : index
    %c0_52 = arith.constant 0 : index
    %117 = vector.load %arg10[%c256, %c0_52] : memref<576x512xf32, #tpu.memory_space<vmem>>, vector<16x256xf32>
    tpu.vector_store %arg10[%c256, %c0_52], %116 {strides = array<i32>} : memref<576x512xf32, #tpu.memory_space<vmem>>, vector<16x256xf32>,
    %118 = vector.extract_strided_slice %31 {offsets = [0, 162], sizes = [16, 256], strides = [1, 1]} : vector<16x512xf32> to vector<16x256xf32>
    %cst_53 = arith.constant 0.000000e+00 : f32
    %119 = vector.shape_cast %90 : vector<1x256xi1> to vector<1x256xi1>
    %120 = vector.broadcast %119 : vector<1x256xi1> to vector<16x256xi1>
    %121 = vector.broadcast %cst_53 : f32 to vector<16x256xf32>
    %122 = arith.select %120, %118, %121 : vector<16x256xi1>, vector<16x256xf32>
    %c272 = arith.constant 272 : index
    %c0_54 = arith.constant 0 : index
    %123 = vector.load %arg10[%c272, %c0_54] : memref<576x512xf32, #tpu.memory_space<vmem>>, vector<16x256xf32>
    tpu.vector_store %arg10[%c272, %c0_54], %122 {strides = array<i32>} : memref<576x512xf32, #tpu.memory_space<vmem>>, vector<16x256xf32>,
    %124 = vector.extract_strided_slice %31 {offsets = [0, 77], sizes = [16, 256], strides = [1, 1]} : vector<16x512xf32> to vector<16x256xf32>
    %c3_i32 = arith.constant 3 : i32
    %125 = vector.broadcast %c3_i32 : i32 to vector<1x256xi32>
    %126 = arith.cmpi sge, %24, %125 : vector<1x256xi32>
    %cst_55 = arith.constant 0.000000e+00 : f32
    %127 = vector.shape_cast %126 : vector<1x256xi1> to vector<1x256xi1>
    %128 = vector.broadcast %127 : vector<1x256xi1> to vector<16x256xi1>
    %129 = vector.broadcast %cst_55 : f32 to vector<16x256xf32>
    %130 = arith.select %128, %124, %129 : vector<16x256xi1>, vector<16x256xf32>
    %c288 = arith.constant 288 : index
    %c0_56 = arith.constant 0 : index
    %131 = vector.load %arg10[%c288, %c0_56] : memref<576x512xf32, #tpu.memory_space<vmem>>, vector<16x256xf32>
    tpu.vector_store %arg10[%c288, %c0_56], %130 {strides = array<i32>} : memref<576x512xf32, #tpu.memory_space<vmem>>, vector<16x256xf32>,
    %132 = vector.extract_strided_slice %31 {offsets = [0, 80], sizes = [16, 256], strides = [1, 1]} : vector<16x512xf32> to vector<16x256xf32>
    %c304 = arith.constant 304 : index
    %c0_57 = arith.constant 0 : index
    %133 = vector.load %arg10[%c304, %c0_57] : memref<576x512xf32, #tpu.memory_space<vmem>>, vector<16x256xf32>
    tpu.vector_store %arg10[%c304, %c0_57], %132 {strides = array<i32>} : memref<576x512xf32, #tpu.memory_space<vmem>>, vector<16x256xf32>,
    %134 = vector.extract_strided_slice %31 {offsets = [0, 83], sizes = [16, 256], strides = [1, 1]} : vector<16x512xf32> to vector<16x256xf32>
    %c13_i32 = arith.constant 13 : i32
    %135 = vector.broadcast %c13_i32 : i32 to vector<1x256xi32>
    %136 = arith.cmpi slt, %24, %135 : vector<1x256xi32>
    %cst_58 = arith.constant 0.000000e+00 : f32
    %137 = vector.shape_cast %136 : vector<1x256xi1> to vector<1x256xi1>
    %138 = vector.broadcast %137 : vector<1x256xi1> to vector<16x256xi1>
    %139 = vector.broadcast %cst_58 : f32 to vector<16x256xf32>
    %140 = arith.select %138, %134, %139 : vector<16x256xi1>, vector<16x256xf32>
    %c320 = arith.constant 320 : index
    %c0_59 = arith.constant 0 : index
    %141 = vector.load %arg10[%c320, %c0_59] : memref<576x512xf32, #tpu.memory_space<vmem>>, vector<16x256xf32>
    tpu.vector_store %arg10[%c320, %c0_59], %140 {strides = array<i32>} : memref<576x512xf32, #tpu.memory_space<vmem>>, vector<16x256xf32>,
    %142 = vector.extract_strided_slice %31 {offsets = [0, 125], sizes = [16, 256], strides = [1, 1]} : vector<16x512xf32> to vector<16x256xf32>
    %cst_60 = arith.constant 0.000000e+00 : f32
    %143 = vector.shape_cast %126 : vector<1x256xi1> to vector<1x256xi1>
    %144 = vector.broadcast %143 : vector<1x256xi1> to vector<16x256xi1>
    %145 = vector.broadcast %cst_60 : f32 to vector<16x256xf32>
    %146 = arith.select %144, %142, %145 : vector<16x256xi1>, vector<16x256xf32>
    %c336 = arith.constant 336 : index
    %c0_61 = arith.constant 0 : index
    %147 = vector.load %arg10[%c336, %c0_61] : memref<576x512xf32, #tpu.memory_space<vmem>>, vector<16x256xf32>
    tpu.vector_store %arg10[%c336, %c0_61], %146 {strides = array<i32>} : memref<576x512xf32, #tpu.memory_space<vmem>>, vector<16x256xf32>,
    %148 = vector.extract_strided_slice %31 {offsets = [0, 128], sizes = [16, 256], strides = [1, 1]} : vector<16x512xf32> to vector<16x256xf32>
    %c352 = arith.constant 352 : index
    %c0_62 = arith.constant 0 : index
    %149 = vector.load %arg10[%c352, %c0_62] : memref<576x512xf32, #tpu.memory_space<vmem>>, vector<16x256xf32>
    tpu.vector_store %arg10[%c352, %c0_62], %148 {strides = array<i32>} : memref<576x512xf32, #tpu.memory_space<vmem>>, vector<16x256xf32>,
    %150 = vector.extract_strided_slice %31 {offsets = [0, 131], sizes = [16, 256], strides = [1, 1]} : vector<16x512xf32> to vector<16x256xf32>
    %cst_63 = arith.constant 0.000000e+00 : f32
    %151 = vector.shape_cast %136 : vector<1x256xi1> to vector<1x256xi1>
    %152 = vector.broadcast %151 : vector<1x256xi1> to vector<16x256xi1>
    %153 = vector.broadcast %cst_63 : f32 to vector<16x256xf32>
    %154 = arith.select %152, %150, %153 : vector<16x256xi1>, vector<16x256xf32>
    %c368 = arith.constant 368 : index
    %c0_64 = arith.constant 0 : index
    %155 = vector.load %arg10[%c368, %c0_64] : memref<576x512xf32, #tpu.memory_space<vmem>>, vector<16x256xf32>
    tpu.vector_store %arg10[%c368, %c0_64], %154 {strides = array<i32>} : memref<576x512xf32, #tpu.memory_space<vmem>>, vector<16x256xf32>,
    %156 = vector.extract_strided_slice %31 {offsets = [0, 173], sizes = [16, 256], strides = [1, 1]} : vector<16x512xf32> to vector<16x256xf32>
    %cst_65 = arith.constant 0.000000e+00 : f32
    %157 = vector.shape_cast %126 : vector<1x256xi1> to vector<1x256xi1>
    %158 = vector.broadcast %157 : vector<1x256xi1> to vector<16x256xi1>
    %159 = vector.broadcast %cst_65 : f32 to vector<16x256xf32>
    %160 = arith.select %158, %156, %159 : vector<16x256xi1>, vector<16x256xf32>
    %c384_66 = arith.constant 384 : index
    %c0_67 = arith.constant 0 : index
    %161 = vector.load %arg10[%c384_66, %c0_67] : memref<576x512xf32, #tpu.memory_space<vmem>>, vector<16x256xf32>
    tpu.vector_store %arg10[%c384_66, %c0_67], %160 {strides = array<i32>} : memref<576x512xf32, #tpu.memory_space<vmem>>, vector<16x256xf32>,
    %162 = vector.extract_strided_slice %31 {offsets = [0, 176], sizes = [16, 256], strides = [1, 1]} : vector<16x512xf32> to vector<16x256xf32>
    %c400 = arith.constant 400 : index
    %c0_68 = arith.constant 0 : index
    %163 = vector.load %arg10[%c400, %c0_68] : memref<576x512xf32, #tpu.memory_space<vmem>>, vector<16x256xf32>
    tpu.vector_store %arg10[%c400, %c0_68], %162 {strides = array<i32>} : memref<576x512xf32, #tpu.memory_space<vmem>>, vector<16x256xf32>,
    %164 = vector.extract_strided_slice %31 {offsets = [0, 179], sizes = [16, 256], strides = [1, 1]} : vector<16x512xf32> to vector<16x256xf32>
    %cst_69 = arith.constant 0.000000e+00 : f32
    %165 = vector.shape_cast %136 : vector<1x256xi1> to vector<1x256xi1>
    %166 = vector.broadcast %165 : vector<1x256xi1> to vector<16x256xi1>
    %167 = vector.broadcast %cst_69 : f32 to vector<16x256xf32>
    %168 = arith.select %166, %164, %167 : vector<16x256xi1>, vector<16x256xf32>
    %c416 = arith.constant 416 : index
    %c0_70 = arith.constant 0 : index
    %169 = vector.load %arg10[%c416, %c0_70] : memref<576x512xf32, #tpu.memory_space<vmem>>, vector<16x256xf32>
    tpu.vector_store %arg10[%c416, %c0_70], %168 {strides = array<i32>} : memref<576x512xf32, #tpu.memory_space<vmem>>, vector<16x256xf32>,
    %170 = vector.extract_strided_slice %31 {offsets = [0, 60], sizes = [16, 256], strides = [1, 1]} : vector<16x512xf32> to vector<16x256xf32>
    %c4_i32 = arith.constant 4 : i32
    %171 = vector.broadcast %c4_i32 : i32 to vector<1x256xi32>
    %172 = arith.cmpi sge, %24, %171 : vector<1x256xi32>
    %cst_71 = arith.constant 0.000000e+00 : f32
    %173 = vector.shape_cast %172 : vector<1x256xi1> to vector<1x256xi1>
    %174 = vector.broadcast %173 : vector<1x256xi1> to vector<16x256xi1>
    %175 = vector.broadcast %cst_71 : f32 to vector<16x256xf32>
    %176 = arith.select %174, %170, %175 : vector<16x256xi1>, vector<16x256xf32>
    %c432 = arith.constant 432 : index
    %c0_72 = arith.constant 0 : index
    %177 = vector.load %arg10[%c432, %c0_72] : memref<576x512xf32, #tpu.memory_space<vmem>>, vector<16x256xf32>
    tpu.vector_store %arg10[%c432, %c0_72], %176 {strides = array<i32>} : memref<576x512xf32, #tpu.memory_space<vmem>>, vector<16x256xf32>,
    %178 = vector.extract_strided_slice %31 {offsets = [0, 64], sizes = [16, 256], strides = [1, 1]} : vector<16x512xf32> to vector<16x256xf32>
    %c448 = arith.constant 448 : index
    %c0_73 = arith.constant 0 : index
    %179 = vector.load %arg10[%c448, %c0_73] : memref<576x512xf32, #tpu.memory_space<vmem>>, vector<16x256xf32>
    tpu.vector_store %arg10[%c448, %c0_73], %178 {strides = array<i32>} : memref<576x512xf32, #tpu.memory_space<vmem>>, vector<16x256xf32>,
    %180 = vector.extract_strided_slice %31 {offsets = [0, 68], sizes = [16, 256], strides = [1, 1]} : vector<16x512xf32> to vector<16x256xf32>
    %c12_i32 = arith.constant 12 : i32
    %181 = vector.broadcast %c12_i32 : i32 to vector<1x256xi32>
    %182 = arith.cmpi slt, %24, %181 : vector<1x256xi32>
    %cst_74 = arith.constant 0.000000e+00 : f32
    %183 = vector.shape_cast %182 : vector<1x256xi1> to vector<1x256xi1>
    %184 = vector.broadcast %183 : vector<1x256xi1> to vector<16x256xi1>
    %185 = vector.broadcast %cst_74 : f32 to vector<16x256xf32>
    %186 = arith.select %184, %180, %185 : vector<16x256xi1>, vector<16x256xf32>
    %c464 = arith.constant 464 : index
    %c0_75 = arith.constant 0 : index
    %187 = vector.load %arg10[%c464, %c0_75] : memref<576x512xf32, #tpu.memory_space<vmem>>, vector<16x256xf32>
    tpu.vector_store %arg10[%c464, %c0_75], %186 {strides = array<i32>} : memref<576x512xf32, #tpu.memory_space<vmem>>, vector<16x256xf32>,
    %188 = vector.extract_strided_slice %31 {offsets = [0, 124], sizes = [16, 256], strides = [1, 1]} : vector<16x512xf32> to vector<16x256xf32>
    %cst_76 = arith.constant 0.000000e+00 : f32
    %189 = vector.shape_cast %172 : vector<1x256xi1> to vector<1x256xi1>
    %190 = vector.broadcast %189 : vector<1x256xi1> to vector<16x256xi1>
    %191 = vector.broadcast %cst_76 : f32 to vector<16x256xf32>
    %192 = arith.select %190, %188, %191 : vector<16x256xi1>, vector<16x256xf32>
    %c480 = arith.constant 480 : index
    %c0_77 = arith.constant 0 : index
    %193 = vector.load %arg10[%c480, %c0_77] : memref<576x512xf32, #tpu.memory_space<vmem>>, vector<16x256xf32>
    tpu.vector_store %arg10[%c480, %c0_77], %192 {strides = array<i32>} : memref<576x512xf32, #tpu.memory_space<vmem>>, vector<16x256xf32>,
    %194 = vector.extract_strided_slice %31 {offsets = [0, 128], sizes = [16, 256], strides = [1, 1]} : vector<16x512xf32> to vector<16x256xf32>
    %c496 = arith.constant 496 : index
    %c0_78 = arith.constant 0 : index
    %195 = vector.load %arg10[%c496, %c0_78] : memref<576x512xf32, #tpu.memory_space<vmem>>, vector<16x256xf32>
    tpu.vector_store %arg10[%c496, %c0_78], %194 {strides = array<i32>} : memref<576x512xf32, #tpu.memory_space<vmem>>, vector<16x256xf32>,
    %196 = vector.extract_strided_slice %31 {offsets = [0, 132], sizes = [16, 256], strides = [1, 1]} : vector<16x512xf32> to vector<16x256xf32>
    %cst_79 = arith.constant 0.000000e+00 : f32
    %197 = vector.shape_cast %182 : vector<1x256xi1> to vector<1x256xi1>
    %198 = vector.broadcast %197 : vector<1x256xi1> to vector<16x256xi1>
    %199 = vector.broadcast %cst_79 : f32 to vector<16x256xf32>
    %200 = arith.select %198, %196, %199 : vector<16x256xi1>, vector<16x256xf32>
    %c512 = arith.constant 512 : index
    %c0_80 = arith.constant 0 : index
    %201 = vector.load %arg10[%c512, %c0_80] : memref<576x512xf32, #tpu.memory_space<vmem>>, vector<16x256xf32>
    tpu.vector_store %arg10[%c512, %c0_80], %200 {strides = array<i32>} : memref<576x512xf32, #tpu.memory_space<vmem>>, vector<16x256xf32>,
    %202 = vector.extract_strided_slice %31 {offsets = [0, 188], sizes = [16, 256], strides = [1, 1]} : vector<16x512xf32> to vector<16x256xf32>
    %cst_81 = arith.constant 0.000000e+00 : f32
    %203 = vector.shape_cast %172 : vector<1x256xi1> to vector<1x256xi1>
    %204 = vector.broadcast %203 : vector<1x256xi1> to vector<16x256xi1>
    %205 = vector.broadcast %cst_81 : f32 to vector<16x256xf32>
    %206 = arith.select %204, %202, %205 : vector<16x256xi1>, vector<16x256xf32>
    %c528 = arith.constant 528 : index
    %c0_82 = arith.constant 0 : index
    %207 = vector.load %arg10[%c528, %c0_82] : memref<576x512xf32, #tpu.memory_space<vmem>>, vector<16x256xf32>
    tpu.vector_store %arg10[%c528, %c0_82], %206 {strides = array<i32>} : memref<576x512xf32, #tpu.memory_space<vmem>>, vector<16x256xf32>,
    %208 = vector.extract_strided_slice %31 {offsets = [0, 192], sizes = [16, 256], strides = [1, 1]} : vector<16x512xf32> to vector<16x256xf32>
    %c544 = arith.constant 544 : index
    %c0_83 = arith.constant 0 : index
    %209 = vector.load %arg10[%c544, %c0_83] : memref<576x512xf32, #tpu.memory_space<vmem>>, vector<16x256xf32>
    tpu.vector_store %arg10[%c544, %c0_83], %208 {strides = array<i32>} : memref<576x512xf32, #tpu.memory_space<vmem>>, vector<16x256xf32>,
    %210 = vector.extract_strided_slice %31 {offsets = [0, 196], sizes = [16, 256], strides = [1, 1]} : vector<16x512xf32> to vector<16x256xf32>
    %cst_84 = arith.constant 0.000000e+00 : f32
    %211 = vector.shape_cast %182 : vector<1x256xi1> to vector<1x256xi1>
    %212 = vector.broadcast %211 : vector<1x256xi1> to vector<16x256xi1>
    %213 = vector.broadcast %cst_84 : f32 to vector<16x256xf32>
    %214 = arith.select %212, %210, %213 : vector<16x256xi1>, vector<16x256xf32>
    %c560 = arith.constant 560 : index
    %c0_85 = arith.constant 0 : index
    %215 = vector.load %arg10[%c560, %c0_85] : memref<576x512xf32, #tpu.memory_space<vmem>>, vector<16x256xf32>
    tpu.vector_store %arg10[%c560, %c0_85], %214 {strides = array<i32>} : memref<576x512xf32, #tpu.memory_space<vmem>>, vector<16x256xf32>,
    %c1 = arith.constant 1 : index
    %c0_86 = arith.constant 0 : index
    %c0_87 = arith.constant 0 : index
    %216 = vector.load %arg1[%c1, %c0_86, %c0_87] : memref<2x8x256xf32, #tpu.memory_space<vmem>>, vector<1x8x256xf32>
    %217 = vector.shape_cast %216 : vector<1x8x256xf32> to vector<8x256xf32>
    %c0_88 = arith.constant 0 : index
    %c128_89 = arith.constant 128 : index
    %218 = vector.load %arg8[%c0_88, %c128_89] : memref<16x512xf32, #tpu.memory_space<vmem>>, vector<8x256xf32>
    tpu.vector_store %arg8[%c0_88, %c128_89], %217 {strides = array<i32>} : memref<16x512xf32, #tpu.memory_space<vmem>>, vector<8x256xf32>,
    %c1_90 = arith.constant 1 : index
    %c0_91 = arith.constant 0 : index
    %c0_92 = arith.constant 0 : index
    %219 = vector.load %arg2[%c1_90, %c0_91, %c0_92] : memref<2x8x256xf32, #tpu.memory_space<vmem>>, vector<1x8x256xf32>
    %220 = vector.shape_cast %219 : vector<1x8x256xf32> to vector<8x256xf32>
    %c8_93 = arith.constant 8 : index
    %c128_94 = arith.constant 128 : index
    %221 = vector.load %arg8[%c8_93, %c128_94] : memref<16x512xf32, #tpu.memory_space<vmem>>, vector<8x256xf32>
    tpu.vector_store %arg8[%c8_93, %c128_94], %220 {strides = array<i32>} : memref<16x512xf32, #tpu.memory_space<vmem>>, vector<8x256xf32>,
    %c0_95 = arith.constant 0 : index
    %c0_96 = arith.constant 0 : index
    %222 = vector.load %arg8[%c0_95, %c0_96] : memref<16x512xf32, #tpu.memory_space<vmem>>, vector<16x512xf32>
    %223 = vector.extract_strided_slice %222 {offsets = [0, 111], sizes = [16, 256], strides = [1, 1]} : vector<16x512xf32> to vector<16x256xf32>
    %cst_97 = arith.constant 0.000000e+00 : f32
    %224 = vector.shape_cast %34 : vector<1x256xi1> to vector<1x256xi1>
    %225 = vector.broadcast %224 : vector<1x256xi1> to vector<16x256xi1>
    %226 = vector.broadcast %cst_97 : f32 to vector<16x256xf32>
    %227 = arith.select %225, %223, %226 : vector<16x256xi1>, vector<16x256xf32>
    %c0_98 = arith.constant 0 : index
    %c256_99 = arith.constant 256 : index
    %228 = vector.load %arg10[%c0_98, %c256_99] : memref<576x512xf32, #tpu.memory_space<vmem>>, vector<16x256xf32>
    tpu.vector_store %arg10[%c0_98, %c256_99], %227 {strides = array<i32>} : memref<576x512xf32, #tpu.memory_space<vmem>>, vector<16x256xf32>,
    %229 = vector.extract_strided_slice %222 {offsets = [0, 112], sizes = [16, 256], strides = [1, 1]} : vector<16x512xf32> to vector<16x256xf32>
    %c16_100 = arith.constant 16 : index
    %c256_101 = arith.constant 256 : index
    %230 = vector.load %arg10[%c16_100, %c256_101] : memref<576x512xf32, #tpu.memory_space<vmem>>, vector<16x256xf32>
    tpu.vector_store %arg10[%c16_100, %c256_101], %229 {strides = array<i32>} : memref<576x512xf32, #tpu.memory_space<vmem>>, vector<16x256xf32>,
    %231 = vector.extract_strided_slice %222 {offsets = [0, 113], sizes = [16, 256], strides = [1, 1]} : vector<16x512xf32> to vector<16x256xf32>
    %cst_102 = arith.constant 0.000000e+00 : f32
    %232 = vector.shape_cast %44 : vector<1x256xi1> to vector<1x256xi1>
    %233 = vector.broadcast %232 : vector<1x256xi1> to vector<16x256xi1>
    %234 = vector.broadcast %cst_102 : f32 to vector<16x256xf32>
    %235 = arith.select %233, %231, %234 : vector<16x256xi1>, vector<16x256xf32>
    %c32_103 = arith.constant 32 : index
    %c256_104 = arith.constant 256 : index
    %236 = vector.load %arg10[%c32_103, %c256_104] : memref<576x512xf32, #tpu.memory_space<vmem>>, vector<16x256xf32>
    tpu.vector_store %arg10[%c32_103, %c256_104], %235 {strides = array<i32>} : memref<576x512xf32, #tpu.memory_space<vmem>>, vector<16x256xf32>,
    %237 = vector.extract_strided_slice %222 {offsets = [0, 127], sizes = [16, 256], strides = [1, 1]} : vector<16x512xf32> to vector<16x256xf32>
    %cst_105 = arith.constant 0.000000e+00 : f32
    %238 = vector.shape_cast %34 : vector<1x256xi1> to vector<1x256xi1>
    %239 = vector.broadcast %238 : vector<1x256xi1> to vector<16x256xi1>
    %240 = vector.broadcast %cst_105 : f32 to vector<16x256xf32>
    %241 = arith.select %239, %237, %240 : vector<16x256xi1>, vector<16x256xf32>
    %c48_106 = arith.constant 48 : index
    %c256_107 = arith.constant 256 : index
    %242 = vector.load %arg10[%c48_106, %c256_107] : memref<576x512xf32, #tpu.memory_space<vmem>>, vector<16x256xf32>
    tpu.vector_store %arg10[%c48_106, %c256_107], %241 {strides = array<i32>} : memref<576x512xf32, #tpu.memory_space<vmem>>, vector<16x256xf32>,
    %243 = vector.extract_strided_slice %222 {offsets = [0, 128], sizes = [16, 256], strides = [1, 1]} : vector<16x512xf32> to vector<16x256xf32>
    %c64_108 = arith.constant 64 : index
    %c256_109 = arith.constant 256 : index
    %244 = vector.load %arg10[%c64_108, %c256_109] : memref<576x512xf32, #tpu.memory_space<vmem>>, vector<16x256xf32>
    tpu.vector_store %arg10[%c64_108, %c256_109], %243 {strides = array<i32>} : memref<576x512xf32, #tpu.memory_space<vmem>>, vector<16x256xf32>,
    %245 = vector.extract_strided_slice %222 {offsets = [0, 129], sizes = [16, 256], strides = [1, 1]} : vector<16x512xf32> to vector<16x256xf32>
    %cst_110 = arith.constant 0.000000e+00 : f32
    %246 = vector.shape_cast %44 : vector<1x256xi1> to vector<1x256xi1>
    %247 = vector.broadcast %246 : vector<1x256xi1> to vector<16x256xi1>
    %248 = vector.broadcast %cst_110 : f32 to vector<16x256xf32>
    %249 = arith.select %247, %245, %248 : vector<16x256xi1>, vector<16x256xf32>
    %c80_111 = arith.constant 80 : index
    %c256_112 = arith.constant 256 : index
    %250 = vector.load %arg10[%c80_111, %c256_112] : memref<576x512xf32, #tpu.memory_space<vmem>>, vector<16x256xf32>
    tpu.vector_store %arg10[%c80_111, %c256_112], %249 {strides = array<i32>} : memref<576x512xf32, #tpu.memory_space<vmem>>, vector<16x256xf32>,
    %251 = vector.extract_strided_slice %222 {offsets = [0, 143], sizes = [16, 256], strides = [1, 1]} : vector<16x512xf32> to vector<16x256xf32>
    %cst_113 = arith.constant 0.000000e+00 : f32
    %252 = vector.shape_cast %34 : vector<1x256xi1> to vector<1x256xi1>
    %253 = vector.broadcast %252 : vector<1x256xi1> to vector<16x256xi1>
    %254 = vector.broadcast %cst_113 : f32 to vector<16x256xf32>
    %255 = arith.select %253, %251, %254 : vector<16x256xi1>, vector<16x256xf32>
    %c96_114 = arith.constant 96 : index
    %c256_115 = arith.constant 256 : index
    %256 = vector.load %arg10[%c96_114, %c256_115] : memref<576x512xf32, #tpu.memory_space<vmem>>, vector<16x256xf32>
    tpu.vector_store %arg10[%c96_114, %c256_115], %255 {strides = array<i32>} : memref<576x512xf32, #tpu.memory_space<vmem>>, vector<16x256xf32>,
    %257 = vector.extract_strided_slice %222 {offsets = [0, 144], sizes = [16, 256], strides = [1, 1]} : vector<16x512xf32> to vector<16x256xf32>
    %c112_116 = arith.constant 112 : index
    %c256_117 = arith.constant 256 : index
    %258 = vector.load %arg10[%c112_116, %c256_117] : memref<576x512xf32, #tpu.memory_space<vmem>>, vector<16x256xf32>
    tpu.vector_store %arg10[%c112_116, %c256_117], %257 {strides = array<i32>} : memref<576x512xf32, #tpu.memory_space<vmem>>, vector<16x256xf32>,
    %259 = vector.extract_strided_slice %222 {offsets = [0, 145], sizes = [16, 256], strides = [1, 1]} : vector<16x512xf32> to vector<16x256xf32>
    %cst_118 = arith.constant 0.000000e+00 : f32
    %260 = vector.shape_cast %44 : vector<1x256xi1> to vector<1x256xi1>
    %261 = vector.broadcast %260 : vector<1x256xi1> to vector<16x256xi1>
    %262 = vector.broadcast %cst_118 : f32 to vector<16x256xf32>
    %263 = arith.select %261, %259, %262 : vector<16x256xi1>, vector<16x256xf32>
    %c128_119 = arith.constant 128 : index
    %c256_120 = arith.constant 256 : index
    %264 = vector.load %arg10[%c128_119, %c256_120] : memref<576x512xf32, #tpu.memory_space<vmem>>, vector<16x256xf32>
    tpu.vector_store %arg10[%c128_119, %c256_120], %263 {strides = array<i32>} : memref<576x512xf32, #tpu.memory_space<vmem>>, vector<16x256xf32>,
    %265 = vector.extract_strided_slice %222 {offsets = [0, 94], sizes = [16, 256], strides = [1, 1]} : vector<16x512xf32> to vector<16x256xf32>
    %cst_121 = arith.constant 0.000000e+00 : f32
    %266 = vector.shape_cast %80 : vector<1x256xi1> to vector<1x256xi1>
    %267 = vector.broadcast %266 : vector<1x256xi1> to vector<16x256xi1>
    %268 = vector.broadcast %cst_121 : f32 to vector<16x256xf32>
    %269 = arith.select %267, %265, %268 : vector<16x256xi1>, vector<16x256xf32>
    %c144_122 = arith.constant 144 : index
    %c256_123 = arith.constant 256 : index
    %270 = vector.load %arg10[%c144_122, %c256_123] : memref<576x512xf32, #tpu.memory_space<vmem>>, vector<16x256xf32>
    tpu.vector_store %arg10[%c144_122, %c256_123], %269 {strides = array<i32>} : memref<576x512xf32, #tpu.memory_space<vmem>>, vector<16x256xf32>,
    %271 = vector.extract_strided_slice %222 {offsets = [0, 96], sizes = [16, 256], strides = [1, 1]} : vector<16x512xf32> to vector<16x256xf32>
    %c160_124 = arith.constant 160 : index
    %c256_125 = arith.constant 256 : index
    %272 = vector.load %arg10[%c160_124, %c256_125] : memref<576x512xf32, #tpu.memory_space<vmem>>, vector<16x256xf32>
    tpu.vector_store %arg10[%c160_124, %c256_125], %271 {strides = array<i32>} : memref<576x512xf32, #tpu.memory_space<vmem>>, vector<16x256xf32>,
    %273 = vector.extract_strided_slice %222 {offsets = [0, 98], sizes = [16, 256], strides = [1, 1]} : vector<16x512xf32> to vector<16x256xf32>
    %cst_126 = arith.constant 0.000000e+00 : f32
    %274 = vector.shape_cast %90 : vector<1x256xi1> to vector<1x256xi1>
    %275 = vector.broadcast %274 : vector<1x256xi1> to vector<16x256xi1>
    %276 = vector.broadcast %cst_126 : f32 to vector<16x256xf32>
    %277 = arith.select %275, %273, %276 : vector<16x256xi1>, vector<16x256xf32>
    %c176_127 = arith.constant 176 : index
    %c256_128 = arith.constant 256 : index
    %278 = vector.load %arg10[%c176_127, %c256_128] : memref<576x512xf32, #tpu.memory_space<vmem>>, vector<16x256xf32>
    tpu.vector_store %arg10[%c176_127, %c256_128], %277 {strides = array<i32>} : memref<576x512xf32, #tpu.memory_space<vmem>>, vector<16x256xf32>,
    %279 = vector.extract_strided_slice %222 {offsets = [0, 126], sizes = [16, 256], strides = [1, 1]} : vector<16x512xf32> to vector<16x256xf32>
    %cst_129 = arith.constant 0.000000e+00 : f32
    %280 = vector.shape_cast %80 : vector<1x256xi1> to vector<1x256xi1>
    %281 = vector.broadcast %280 : vector<1x256xi1> to vector<16x256xi1>
    %282 = vector.broadcast %cst_129 : f32 to vector<16x256xf32>
    %283 = arith.select %281, %279, %282 : vector<16x256xi1>, vector<16x256xf32>
    %c192_130 = arith.constant 192 : index
    %c256_131 = arith.constant 256 : index
    %284 = vector.load %arg10[%c192_130, %c256_131] : memref<576x512xf32, #tpu.memory_space<vmem>>, vector<16x256xf32>
    tpu.vector_store %arg10[%c192_130, %c256_131], %283 {strides = array<i32>} : memref<576x512xf32, #tpu.memory_space<vmem>>, vector<16x256xf32>,
    %285 = vector.extract_strided_slice %222 {offsets = [0, 128], sizes = [16, 256], strides = [1, 1]} : vector<16x512xf32> to vector<16x256xf32>
    %c208_132 = arith.constant 208 : index
    %c256_133 = arith.constant 256 : index
    %286 = vector.load %arg10[%c208_132, %c256_133] : memref<576x512xf32, #tpu.memory_space<vmem>>, vector<16x256xf32>
    tpu.vector_store %arg10[%c208_132, %c256_133], %285 {strides = array<i32>} : memref<576x512xf32, #tpu.memory_space<vmem>>, vector<16x256xf32>,
    %287 = vector.extract_strided_slice %222 {offsets = [0, 130], sizes = [16, 256], strides = [1, 1]} : vector<16x512xf32> to vector<16x256xf32>
    %cst_134 = arith.constant 0.000000e+00 : f32
    %288 = vector.shape_cast %90 : vector<1x256xi1> to vector<1x256xi1>
    %289 = vector.broadcast %288 : vector<1x256xi1> to vector<16x256xi1>
    %290 = vector.broadcast %cst_134 : f32 to vector<16x256xf32>
    %291 = arith.select %289, %287, %290 : vector<16x256xi1>, vector<16x256xf32>
    %c224_135 = arith.constant 224 : index
    %c256_136 = arith.constant 256 : index
    %292 = vector.load %arg10[%c224_135, %c256_136] : memref<576x512xf32, #tpu.memory_space<vmem>>, vector<16x256xf32>
    tpu.vector_store %arg10[%c224_135, %c256_136], %291 {strides = array<i32>} : memref<576x512xf32, #tpu.memory_space<vmem>>, vector<16x256xf32>,
    %293 = vector.extract_strided_slice %222 {offsets = [0, 158], sizes = [16, 256], strides = [1, 1]} : vector<16x512xf32> to vector<16x256xf32>
    %cst_137 = arith.constant 0.000000e+00 : f32
    %294 = vector.shape_cast %80 : vector<1x256xi1> to vector<1x256xi1>
    %295 = vector.broadcast %294 : vector<1x256xi1> to vector<16x256xi1>
    %296 = vector.broadcast %cst_137 : f32 to vector<16x256xf32>
    %297 = arith.select %295, %293, %296 : vector<16x256xi1>, vector<16x256xf32>
    %c240_138 = arith.constant 240 : index
    %c256_139 = arith.constant 256 : index
    %298 = vector.load %arg10[%c240_138, %c256_139] : memref<576x512xf32, #tpu.memory_space<vmem>>, vector<16x256xf32>
    tpu.vector_store %arg10[%c240_138, %c256_139], %297 {strides = array<i32>} : memref<576x512xf32, #tpu.memory_space<vmem>>, vector<16x256xf32>,
    %299 = vector.extract_strided_slice %222 {offsets = [0, 160], sizes = [16, 256], strides = [1, 1]} : vector<16x512xf32> to vector<16x256xf32>
    %c256_140 = arith.constant 256 : index
    %c256_141 = arith.constant 256 : index
    %300 = vector.load %arg10[%c256_140, %c256_141] : memref<576x512xf32, #tpu.memory_space<vmem>>, vector<16x256xf32>
    tpu.vector_store %arg10[%c256_140, %c256_141], %299 {strides = array<i32>} : memref<576x512xf32, #tpu.memory_space<vmem>>, vector<16x256xf32>,
    %301 = vector.extract_strided_slice %222 {offsets = [0, 162], sizes = [16, 256], strides = [1, 1]} : vector<16x512xf32> to vector<16x256xf32>
    %cst_142 = arith.constant 0.000000e+00 : f32
    %302 = vector.shape_cast %90 : vector<1x256xi1> to vector<1x256xi1>
    %303 = vector.broadcast %302 : vector<1x256xi1> to vector<16x256xi1>
    %304 = vector.broadcast %cst_142 : f32 to vector<16x256xf32>
    %305 = arith.select %303, %301, %304 : vector<16x256xi1>, vector<16x256xf32>
    %c272_143 = arith.constant 272 : index
    %c256_144 = arith.constant 256 : index
    %306 = vector.load %arg10[%c272_143, %c256_144] : memref<576x512xf32, #tpu.memory_space<vmem>>, vector<16x256xf32>
    tpu.vector_store %arg10[%c272_143, %c256_144], %305 {strides = array<i32>} : memref<576x512xf32, #tpu.memory_space<vmem>>, vector<16x256xf32>,
    %307 = vector.extract_strided_slice %222 {offsets = [0, 77], sizes = [16, 256], strides = [1, 1]} : vector<16x512xf32> to vector<16x256xf32>
    %cst_145 = arith.constant 0.000000e+00 : f32
    %308 = vector.shape_cast %126 : vector<1x256xi1> to vector<1x256xi1>
    %309 = vector.broadcast %308 : vector<1x256xi1> to vector<16x256xi1>
    %310 = vector.broadcast %cst_145 : f32 to vector<16x256xf32>
    %311 = arith.select %309, %307, %310 : vector<16x256xi1>, vector<16x256xf32>
    %c288_146 = arith.constant 288 : index
    %c256_147 = arith.constant 256 : index
    %312 = vector.load %arg10[%c288_146, %c256_147] : memref<576x512xf32, #tpu.memory_space<vmem>>, vector<16x256xf32>
    tpu.vector_store %arg10[%c288_146, %c256_147], %311 {strides = array<i32>} : memref<576x512xf32, #tpu.memory_space<vmem>>, vector<16x256xf32>,
    %313 = vector.extract_strided_slice %222 {offsets = [0, 80], sizes = [16, 256], strides = [1, 1]} : vector<16x512xf32> to vector<16x256xf32>
    %c304_148 = arith.constant 304 : index
    %c256_149 = arith.constant 256 : index
    %314 = vector.load %arg10[%c304_148, %c256_149] : memref<576x512xf32, #tpu.memory_space<vmem>>, vector<16x256xf32>
    tpu.vector_store %arg10[%c304_148, %c256_149], %313 {strides = array<i32>} : memref<576x512xf32, #tpu.memory_space<vmem>>, vector<16x256xf32>,
    %315 = vector.extract_strided_slice %222 {offsets = [0, 83], sizes = [16, 256], strides = [1, 1]} : vector<16x512xf32> to vector<16x256xf32>
    %cst_150 = arith.constant 0.000000e+00 : f32
    %316 = vector.shape_cast %136 : vector<1x256xi1> to vector<1x256xi1>
    %317 = vector.broadcast %316 : vector<1x256xi1> to vector<16x256xi1>
    %318 = vector.broadcast %cst_150 : f32 to vector<16x256xf32>
    %319 = arith.select %317, %315, %318 : vector<16x256xi1>, vector<16x256xf32>
    %c320_151 = arith.constant 320 : index
    %c256_152 = arith.constant 256 : index
    %320 = vector.load %arg10[%c320_151, %c256_152] : memref<576x512xf32, #tpu.memory_space<vmem>>, vector<16x256xf32>
    tpu.vector_store %arg10[%c320_151, %c256_152], %319 {strides = array<i32>} : memref<576x512xf32, #tpu.memory_space<vmem>>, vector<16x256xf32>,
    %321 = vector.extract_strided_slice %222 {offsets = [0, 125], sizes = [16, 256], strides = [1, 1]} : vector<16x512xf32> to vector<16x256xf32>
    %cst_153 = arith.constant 0.000000e+00 : f32
    %322 = vector.shape_cast %126 : vector<1x256xi1> to vector<1x256xi1>
    %323 = vector.broadcast %322 : vector<1x256xi1> to vector<16x256xi1>
    %324 = vector.broadcast %cst_153 : f32 to vector<16x256xf32>
    %325 = arith.select %323, %321, %324 : vector<16x256xi1>, vector<16x256xf32>
    %c336_154 = arith.constant 336 : index
    %c256_155 = arith.constant 256 : index
    %326 = vector.load %arg10[%c336_154, %c256_155] : memref<576x512xf32, #tpu.memory_space<vmem>>, vector<16x256xf32>
    tpu.vector_store %arg10[%c336_154, %c256_155], %325 {strides = array<i32>} : memref<576x512xf32, #tpu.memory_space<vmem>>, vector<16x256xf32>,
    %327 = vector.extract_strided_slice %222 {offsets = [0, 128], sizes = [16, 256], strides = [1, 1]} : vector<16x512xf32> to vector<16x256xf32>
    %c352_156 = arith.constant 352 : index
    %c256_157 = arith.constant 256 : index
    %328 = vector.load %arg10[%c352_156, %c256_157] : memref<576x512xf32, #tpu.memory_space<vmem>>, vector<16x256xf32>
    tpu.vector_store %arg10[%c352_156, %c256_157], %327 {strides = array<i32>} : memref<576x512xf32, #tpu.memory_space<vmem>>, vector<16x256xf32>,
    %329 = vector.extract_strided_slice %222 {offsets = [0, 131], sizes = [16, 256], strides = [1, 1]} : vector<16x512xf32> to vector<16x256xf32>
    %cst_158 = arith.constant 0.000000e+00 : f32
    %330 = vector.shape_cast %136 : vector<1x256xi1> to vector<1x256xi1>
    %331 = vector.broadcast %330 : vector<1x256xi1> to vector<16x256xi1>
    %332 = vector.broadcast %cst_158 : f32 to vector<16x256xf32>
    %333 = arith.select %331, %329, %332 : vector<16x256xi1>, vector<16x256xf32>
    %c368_159 = arith.constant 368 : index
    %c256_160 = arith.constant 256 : index
    %334 = vector.load %arg10[%c368_159, %c256_160] : memref<576x512xf32, #tpu.memory_space<vmem>>, vector<16x256xf32>
    tpu.vector_store %arg10[%c368_159, %c256_160], %333 {strides = array<i32>} : memref<576x512xf32, #tpu.memory_space<vmem>>, vector<16x256xf32>,
    %335 = vector.extract_strided_slice %222 {offsets = [0, 173], sizes = [16, 256], strides = [1, 1]} : vector<16x512xf32> to vector<16x256xf32>
    %cst_161 = arith.constant 0.000000e+00 : f32
    %336 = vector.shape_cast %126 : vector<1x256xi1> to vector<1x256xi1>
    %337 = vector.broadcast %336 : vector<1x256xi1> to vector<16x256xi1>
    %338 = vector.broadcast %cst_161 : f32 to vector<16x256xf32>
    %339 = arith.select %337, %335, %338 : vector<16x256xi1>, vector<16x256xf32>
    %c384_162 = arith.constant 384 : index
    %c256_163 = arith.constant 256 : index
    %340 = vector.load %arg10[%c384_162, %c256_163] : memref<576x512xf32, #tpu.memory_space<vmem>>, vector<16x256xf32>
    tpu.vector_store %arg10[%c384_162, %c256_163], %339 {strides = array<i32>} : memref<576x512xf32, #tpu.memory_space<vmem>>, vector<16x256xf32>,
    %341 = vector.extract_strided_slice %222 {offsets = [0, 176], sizes = [16, 256], strides = [1, 1]} : vector<16x512xf32> to vector<16x256xf32>
    %c400_164 = arith.constant 400 : index
    %c256_165 = arith.constant 256 : index
    %342 = vector.load %arg10[%c400_164, %c256_165] : memref<576x512xf32, #tpu.memory_space<vmem>>, vector<16x256xf32>
    tpu.vector_store %arg10[%c400_164, %c256_165], %341 {strides = array<i32>} : memref<576x512xf32, #tpu.memory_space<vmem>>, vector<16x256xf32>,
    %343 = vector.extract_strided_slice %222 {offsets = [0, 179], sizes = [16, 256], strides = [1, 1]} : vector<16x512xf32> to vector<16x256xf32>
    %cst_166 = arith.constant 0.000000e+00 : f32
    %344 = vector.shape_cast %136 : vector<1x256xi1> to vector<1x256xi1>
    %345 = vector.broadcast %344 : vector<1x256xi1> to vector<16x256xi1>
    %346 = vector.broadcast %cst_166 : f32 to vector<16x256xf32>
    %347 = arith.select %345, %343, %346 : vector<16x256xi1>, vector<16x256xf32>
    %c416_167 = arith.constant 416 : index
    %c256_168 = arith.constant 256 : index
    %348 = vector.load %arg10[%c416_167, %c256_168] : memref<576x512xf32, #tpu.memory_space<vmem>>, vector<16x256xf32>
    tpu.vector_store %arg10[%c416_167, %c256_168], %347 {strides = array<i32>} : memref<576x512xf32, #tpu.memory_space<vmem>>, vector<16x256xf32>,
    %349 = vector.extract_strided_slice %222 {offsets = [0, 60], sizes = [16, 256], strides = [1, 1]} : vector<16x512xf32> to vector<16x256xf32>
    %cst_169 = arith.constant 0.000000e+00 : f32
    %350 = vector.shape_cast %172 : vector<1x256xi1> to vector<1x256xi1>
    %351 = vector.broadcast %350 : vector<1x256xi1> to vector<16x256xi1>
    %352 = vector.broadcast %cst_169 : f32 to vector<16x256xf32>
    %353 = arith.select %351, %349, %352 : vector<16x256xi1>, vector<16x256xf32>
    %c432_170 = arith.constant 432 : index
    %c256_171 = arith.constant 256 : index
    %354 = vector.load %arg10[%c432_170, %c256_171] : memref<576x512xf32, #tpu.memory_space<vmem>>, vector<16x256xf32>
    tpu.vector_store %arg10[%c432_170, %c256_171], %353 {strides = array<i32>} : memref<576x512xf32, #tpu.memory_space<vmem>>, vector<16x256xf32>,
    %355 = vector.extract_strided_slice %222 {offsets = [0, 64], sizes = [16, 256], strides = [1, 1]} : vector<16x512xf32> to vector<16x256xf32>
    %c448_172 = arith.constant 448 : index
    %c256_173 = arith.constant 256 : index
    %356 = vector.load %arg10[%c448_172, %c256_173] : memref<576x512xf32, #tpu.memory_space<vmem>>, vector<16x256xf32>
    tpu.vector_store %arg10[%c448_172, %c256_173], %355 {strides = array<i32>} : memref<576x512xf32, #tpu.memory_space<vmem>>, vector<16x256xf32>,
    %357 = vector.extract_strided_slice %222 {offsets = [0, 68], sizes = [16, 256], strides = [1, 1]} : vector<16x512xf32> to vector<16x256xf32>
    %cst_174 = arith.constant 0.000000e+00 : f32
    %358 = vector.shape_cast %182 : vector<1x256xi1> to vector<1x256xi1>
    %359 = vector.broadcast %358 : vector<1x256xi1> to vector<16x256xi1>
    %360 = vector.broadcast %cst_174 : f32 to vector<16x256xf32>
    %361 = arith.select %359, %357, %360 : vector<16x256xi1>, vector<16x256xf32>
    %c464_175 = arith.constant 464 : index
    %c256_176 = arith.constant 256 : index
    %362 = vector.load %arg10[%c464_175, %c256_176] : memref<576x512xf32, #tpu.memory_space<vmem>>, vector<16x256xf32>
    tpu.vector_store %arg10[%c464_175, %c256_176], %361 {strides = array<i32>} : memref<576x512xf32, #tpu.memory_space<vmem>>, vector<16x256xf32>,
    %363 = vector.extract_strided_slice %222 {offsets = [0, 124], sizes = [16, 256], strides = [1, 1]} : vector<16x512xf32> to vector<16x256xf32>
    %cst_177 = arith.constant 0.000000e+00 : f32
    %364 = vector.shape_cast %172 : vector<1x256xi1> to vector<1x256xi1>
    %365 = vector.broadcast %364 : vector<1x256xi1> to vector<16x256xi1>
    %366 = vector.broadcast %cst_177 : f32 to vector<16x256xf32>
    %367 = arith.select %365, %363, %366 : vector<16x256xi1>, vector<16x256xf32>
    %c480_178 = arith.constant 480 : index
    %c256_179 = arith.constant 256 : index
    %368 = vector.load %arg10[%c480_178, %c256_179] : memref<576x512xf32, #tpu.memory_space<vmem>>, vector<16x256xf32>
    tpu.vector_store %arg10[%c480_178, %c256_179], %367 {strides = array<i32>} : memref<576x512xf32, #tpu.memory_space<vmem>>, vector<16x256xf32>,
    %369 = vector.extract_strided_slice %222 {offsets = [0, 128], sizes = [16, 256], strides = [1, 1]} : vector<16x512xf32> to vector<16x256xf32>
    %c496_180 = arith.constant 496 : index
    %c256_181 = arith.constant 256 : index
    %370 = vector.load %arg10[%c496_180, %c256_181] : memref<576x512xf32, #tpu.memory_space<vmem>>, vector<16x256xf32>
    tpu.vector_store %arg10[%c496_180, %c256_181], %369 {strides = array<i32>} : memref<576x512xf32, #tpu.memory_space<vmem>>, vector<16x256xf32>,
    %371 = vector.extract_strided_slice %222 {offsets = [0, 132], sizes = [16, 256], strides = [1, 1]} : vector<16x512xf32> to vector<16x256xf32>
    %cst_182 = arith.constant 0.000000e+00 : f32
    %372 = vector.shape_cast %182 : vector<1x256xi1> to vector<1x256xi1>
    %373 = vector.broadcast %372 : vector<1x256xi1> to vector<16x256xi1>
    %374 = vector.broadcast %cst_182 : f32 to vector<16x256xf32>
    %375 = arith.select %373, %371, %374 : vector<16x256xi1>, vector<16x256xf32>
    %c512_183 = arith.constant 512 : index
    %c256_184 = arith.constant 256 : index
    %376 = vector.load %arg10[%c512_183, %c256_184] : memref<576x512xf32, #tpu.memory_space<vmem>>, vector<16x256xf32>
    tpu.vector_store %arg10[%c512_183, %c256_184], %375 {strides = array<i32>} : memref<576x512xf32, #tpu.memory_space<vmem>>, vector<16x256xf32>,
    %377 = vector.extract_strided_slice %222 {offsets = [0, 188], sizes = [16, 256], strides = [1, 1]} : vector<16x512xf32> to vector<16x256xf32>
    %cst_185 = arith.constant 0.000000e+00 : f32
    %378 = vector.shape_cast %172 : vector<1x256xi1> to vector<1x256xi1>
    %379 = vector.broadcast %378 : vector<1x256xi1> to vector<16x256xi1>
    %380 = vector.broadcast %cst_185 : f32 to vector<16x256xf32>
    %381 = arith.select %379, %377, %380 : vector<16x256xi1>, vector<16x256xf32>
    %c528_186 = arith.constant 528 : index
    %c256_187 = arith.constant 256 : index
    %382 = vector.load %arg10[%c528_186, %c256_187] : memref<576x512xf32, #tpu.memory_space<vmem>>, vector<16x256xf32>
    tpu.vector_store %arg10[%c528_186, %c256_187], %381 {strides = array<i32>} : memref<576x512xf32, #tpu.memory_space<vmem>>, vector<16x256xf32>,
    %383 = vector.extract_strided_slice %222 {offsets = [0, 192], sizes = [16, 256], strides = [1, 1]} : vector<16x512xf32> to vector<16x256xf32>
    %c544_188 = arith.constant 544 : index
    %c256_189 = arith.constant 256 : index
    %384 = vector.load %arg10[%c544_188, %c256_189] : memref<576x512xf32, #tpu.memory_space<vmem>>, vector<16x256xf32>
    tpu.vector_store %arg10[%c544_188, %c256_189], %383 {strides = array<i32>} : memref<576x512xf32, #tpu.memory_space<vmem>>, vector<16x256xf32>,
    %385 = vector.extract_strided_slice %222 {offsets = [0, 196], sizes = [16, 256], strides = [1, 1]} : vector<16x512xf32> to vector<16x256xf32>
    %cst_190 = arith.constant 0.000000e+00 : f32
    %386 = vector.shape_cast %182 : vector<1x256xi1> to vector<1x256xi1>
    %387 = vector.broadcast %386 : vector<1x256xi1> to vector<16x256xi1>
    %388 = vector.broadcast %cst_190 : f32 to vector<16x256xf32>
    %389 = arith.select %387, %385, %388 : vector<16x256xi1>, vector<16x256xf32>
    %c560_191 = arith.constant 560 : index
    %c256_192 = arith.constant 256 : index
    %390 = vector.load %arg10[%c560_191, %c256_192] : memref<576x512xf32, #tpu.memory_space<vmem>>, vector<16x256xf32>
    tpu.vector_store %arg10[%c560_191, %c256_192], %389 {strides = array<i32>} : memref<576x512xf32, #tpu.memory_space<vmem>>, vector<16x256xf32>,
    %c0_193 = arith.constant 0 : index
    %c0_194 = arith.constant 0 : index
    %391 = vector.load %arg3[%c0_193, %c0_194] : memref<8x576xf32, #tpu.memory_space<vmem>>, vector<8x576xf32>
    %c0_195 = arith.constant 0 : index
    %c0_196 = arith.constant 0 : index
    %392 = vector.load %arg10[%c0_195, %c0_196] : memref<576x512xf32, #tpu.memory_space<vmem>>, vector<576x512xf32>
    %cst_197 = arith.constant dense<0.000000e+00> : vector<8x512xf32>
    %393 = tpu.matmul %391, %392, %cst_197 {dimension_numbers = #tpu.dot_dimension_numbers<[1], [0], [0], [1], [0, 0, 1, 1], [], []>} : vector<8x576xf32>, vector<576x512xf32>, vector<8x512xf32> -> vector<8x512xf32>
    %c0_198 = arith.constant 0 : index
    %c0_199 = arith.constant 0 : index
    %394 = vector.load %arg4[%c0_198, %c0_199] : memref<8x1xf32, #tpu.memory_space<vmem>>, vector<8x1xf32>
    %395 = vector.broadcast %394 : vector<8x1xf32> to vector<8x512xf32>
    %396 = arith.addf %393, %395 : vector<8x512xf32>
    %cst_200 = arith.constant 0.000000e+00 : f32
    %397 = vector.broadcast %cst_200 : f32 to vector<8x512xf32>
    %398 = arith.maximumf %396, %397 : vector<8x512xf32>
    %399 = vector.extract_strided_slice %398 {offsets = [0, 0], sizes = [8, 256], strides = [1, 1]} : vector<8x512xf32> to vector<8x256xf32>
    %c0_201 = arith.constant 0 : index
    %c0_202 = arith.constant 0 : index
    %c0_203 = arith.constant 0 : index
    %400 = vector.load %arg1[%c0_201, %c0_202, %c0_203] : memref<2x8x256xf32, #tpu.memory_space<vmem>>, vector<1x8x256xf32>
    %401 = vector.shape_cast %400 : vector<1x8x256xf32> to vector<8x256xf32>
    %c0_204 = arith.constant 0 : index
    %c0_205 = arith.constant 0 : index
    %c0_206 = arith.constant 0 : index
    %402 = vector.load %arg2[%c0_204, %c0_205, %c0_206] : memref<2x8x256xf32, #tpu.memory_space<vmem>>, vector<1x8x256xf32>
    %403 = vector.shape_cast %402 : vector<1x8x256xf32> to vector<8x256xf32>
    %cst_207 = arith.constant dense<0.000000e+00> : vector<8xf32>
    %404 = vector.multi_reduction <add>, %399, %cst_207 [1] : vector<8x256xf32> to vector<8xf32>
    %405 = vector.shape_cast %404 : vector<8xf32> to vector<8x1xf32>
    %cst_208 = arith.constant 2.560000e+02 : f32
    %406 = vector.broadcast %cst_208 : f32 to vector<8x1xf32>
    %407 = arith.divf %405, %406 : vector<8x1xf32>
    %408 = vector.broadcast %407 : vector<8x1xf32> to vector<8x256xf32>
    %409 = arith.subf %399, %408 : vector<8x256xf32>
    %410 = arith.mulf %409, %409 : vector<8x256xf32>
    %cst_209 = arith.constant dense<0.000000e+00> : vector<8xf32>
    %411 = vector.multi_reduction <add>, %410, %cst_209 [1] : vector<8x256xf32> to vector<8xf32>
    %412 = vector.shape_cast %411 : vector<8xf32> to vector<8x1xf32>
    %cst_210 = arith.constant 0.00392156886 : f32
    %413 = vector.broadcast %cst_210 : f32 to vector<8x1xf32>
    %414 = arith.mulf %412, %413 : vector<8x1xf32>
    %cst_211 = arith.constant 9.99999974E-5 : f32
    %415 = vector.broadcast %cst_211 : f32 to vector<8x1xf32>
    %416 = arith.addf %414, %415 : vector<8x1xf32>
    %cst_212 = arith.constant 4.000000e+00 : f32
    %417 = vector.broadcast %cst_212 : f32 to vector<8x1xf32>
    %418 = arith.mulf %417, %416 : vector<8x1xf32>
    %419 = tpu.reciprocal %418 : vector<8x1xf32> -> vector<8x1xf32>
    %420 = vector.broadcast %419 : vector<8x1xf32> to vector<8x256xf32>
    %421 = arith.mulf %410, %420 : vector<8x256xf32>
    %cst_213 = arith.constant 5.000000e-01 : f32
    %422 = vector.broadcast %cst_213 : f32 to vector<8x256xf32>
    %423 = arith.addf %421, %422 : vector<8x256xf32>
    %424 = arith.negf %423 : vector<8x256xf32>
    %425 = math.exp %424 : vector<8x256xf32>
    %cst_214 = arith.constant 1.000000e+00 : f32
    %426 = vector.broadcast %cst_214 : f32 to vector<8x256xf32>
    %427 = arith.addf %426, %425 : vector<8x256xf32>
    %428 = arith.divf %426, %427 : vector<8x256xf32>
    %429 = arith.mulf %399, %428 : vector<8x256xf32>
    %430 = arith.addf %429, %401 : vector<8x256xf32>
    %431 = arith.addf %430, %403 : vector<8x256xf32>
    %cst_215 = arith.constant dense<0.000000e+00> : vector<8xf32>
    %432 = vector.multi_reduction <add>, %403, %cst_215 [1] : vector<8x256xf32> to vector<8xf32>
    %433 = vector.shape_cast %432 : vector<8xf32> to vector<8x1xf32>
    %cst_216 = arith.constant 2.560000e+02 : f32
    %434 = vector.broadcast %cst_216 : f32 to vector<8x1xf32>
    %435 = arith.divf %433, %434 : vector<8x1xf32>
    %436 = vector.broadcast %435 : vector<8x1xf32> to vector<8x256xf32>
    %437 = arith.subf %403, %436 : vector<8x256xf32>
    %438 = arith.mulf %437, %437 : vector<8x256xf32>
    %cst_217 = arith.constant dense<0.000000e+00> : vector<8xf32>
    %439 = vector.multi_reduction <add>, %438, %cst_217 [1] : vector<8x256xf32> to vector<8xf32>
    %440 = vector.shape_cast %439 : vector<8xf32> to vector<8x1xf32>
    %cst_218 = arith.constant 0.00392156886 : f32
    %441 = vector.broadcast %cst_218 : f32 to vector<8x1xf32>
    %442 = arith.mulf %440, %441 : vector<8x1xf32>
    %cst_219 = arith.constant 9.99999974E-5 : f32
    %443 = vector.broadcast %cst_219 : f32 to vector<8x1xf32>
    %444 = arith.addf %442, %443 : vector<8x1xf32>
    %cst_220 = arith.constant 4.000000e+00 : f32
    %445 = vector.broadcast %cst_220 : f32 to vector<8x1xf32>
    %446 = arith.mulf %445, %444 : vector<8x1xf32>
    %447 = tpu.reciprocal %446 : vector<8x1xf32> -> vector<8x1xf32>
    %448 = vector.broadcast %447 : vector<8x1xf32> to vector<8x256xf32>
    %449 = arith.mulf %438, %448 : vector<8x256xf32>
    %cst_221 = arith.constant 5.000000e-01 : f32
    %450 = vector.broadcast %cst_221 : f32 to vector<8x256xf32>
    %451 = arith.addf %449, %450 : vector<8x256xf32>
    %452 = arith.negf %451 : vector<8x256xf32>
    %453 = math.exp %452 : vector<8x256xf32>
    %cst_222 = arith.constant 1.000000e+00 : f32
    %454 = vector.broadcast %cst_222 : f32 to vector<8x256xf32>
    %455 = arith.addf %454, %453 : vector<8x256xf32>
    %456 = arith.divf %454, %455 : vector<8x256xf32>
    %457 = arith.mulf %403, %456 : vector<8x256xf32>
    %458 = arith.mulf %457, %399 : vector<8x256xf32>
    %459 = arith.addf %431, %458 : vector<8x256xf32>
    %cst_223 = arith.constant dense<0.000000e+00> : vector<8xf32>
    %460 = vector.multi_reduction <add>, %401, %cst_223 [1] : vector<8x256xf32> to vector<8xf32>
    %461 = vector.shape_cast %460 : vector<8xf32> to vector<8x1xf32>
    %cst_224 = arith.constant 2.560000e+02 : f32
    %462 = vector.broadcast %cst_224 : f32 to vector<8x1xf32>
    %463 = arith.divf %461, %462 : vector<8x1xf32>
    %464 = vector.broadcast %463 : vector<8x1xf32> to vector<8x256xf32>
    %465 = arith.subf %401, %464 : vector<8x256xf32>
    %466 = arith.mulf %465, %465 : vector<8x256xf32>
    %cst_225 = arith.constant dense<0.000000e+00> : vector<8xf32>
    %467 = vector.multi_reduction <add>, %466, %cst_225 [1] : vector<8x256xf32> to vector<8xf32>
    %468 = vector.shape_cast %467 : vector<8xf32> to vector<8x1xf32>
    %cst_226 = arith.constant 0.00392156886 : f32
    %469 = vector.broadcast %cst_226 : f32 to vector<8x1xf32>
    %470 = arith.mulf %468, %469 : vector<8x1xf32>
    %cst_227 = arith.constant 9.99999974E-5 : f32
    %471 = vector.broadcast %cst_227 : f32 to vector<8x1xf32>
    %472 = arith.addf %470, %471 : vector<8x1xf32>
    %cst_228 = arith.constant 4.000000e+00 : f32
    %473 = vector.broadcast %cst_228 : f32 to vector<8x1xf32>
    %474 = arith.mulf %473, %472 : vector<8x1xf32>
    %475 = tpu.reciprocal %474 : vector<8x1xf32> -> vector<8x1xf32>
    %476 = vector.broadcast %475 : vector<8x1xf32> to vector<8x256xf32>
    %477 = arith.mulf %466, %476 : vector<8x256xf32>
    %cst_229 = arith.constant 5.000000e-01 : f32
    %478 = vector.broadcast %cst_229 : f32 to vector<8x256xf32>
    %479 = arith.addf %477, %478 : vector<8x256xf32>
    %480 = arith.negf %479 : vector<8x256xf32>
    %481 = math.exp %480 : vector<8x256xf32>
    %cst_230 = arith.constant 1.000000e+00 : f32
    %482 = vector.broadcast %cst_230 : f32 to vector<8x256xf32>
    %483 = arith.addf %482, %481 : vector<8x256xf32>
    %484 = arith.divf %482, %483 : vector<8x256xf32>
    %485 = arith.mulf %401, %484 : vector<8x256xf32>
    %486 = arith.mulf %485, %399 : vector<8x256xf32>
    %487 = arith.addf %459, %486 : vector<8x256xf32>
    %c0_231 = arith.constant 0 : index
    %c128_232 = arith.constant 128 : index
    %488 = vector.load %arg9[%c0_231, %c128_232] : memref<8x512xf32, #tpu.memory_space<vmem>>, vector<8x256xf32>
    tpu.vector_store %arg9[%c0_231, %c128_232], %487 {strides = array<i32>} : memref<8x512xf32, #tpu.memory_space<vmem>>, vector<8x256xf32>,
    %c0_233 = arith.constant 0 : index
    %c0_234 = arith.constant 0 : index
    %489 = vector.load %arg9[%c0_233, %c0_234] : memref<8x512xf32, #tpu.memory_space<vmem>>, vector<8x512xf32>
    %490 = vector.extract_strided_slice %489 {offsets = [0, 111], sizes = [8, 256], strides = [1, 1]} : vector<8x512xf32> to vector<8x256xf32>
    %cst_235 = arith.constant 0.000000e+00 : f32
    %491 = vector.shape_cast %34 : vector<1x256xi1> to vector<1x256xi1>
    %492 = vector.broadcast %491 : vector<1x256xi1> to vector<8x256xi1>
    %493 = vector.broadcast %cst_235 : f32 to vector<8x256xf32>
    %494 = arith.select %492, %490, %493 : vector<8x256xi1>, vector<8x256xf32>
    %c0_236 = arith.constant 0 : index
    %c0_237 = arith.constant 0 : index
    %495 = vector.load %arg11[%c0_236, %c0_237] : memref<72x512xf32, #tpu.memory_space<vmem>>, vector<8x256xf32>
    tpu.vector_store %arg11[%c0_236, %c0_237], %494 {strides = array<i32>} : memref<72x512xf32, #tpu.memory_space<vmem>>, vector<8x256xf32>,
    %496 = vector.extract_strided_slice %489 {offsets = [0, 112], sizes = [8, 256], strides = [1, 1]} : vector<8x512xf32> to vector<8x256xf32>
    %c8_238 = arith.constant 8 : index
    %c0_239 = arith.constant 0 : index
    %497 = vector.load %arg11[%c8_238, %c0_239] : memref<72x512xf32, #tpu.memory_space<vmem>>, vector<8x256xf32>
    tpu.vector_store %arg11[%c8_238, %c0_239], %496 {strides = array<i32>} : memref<72x512xf32, #tpu.memory_space<vmem>>, vector<8x256xf32>,
    %498 = vector.extract_strided_slice %489 {offsets = [0, 113], sizes = [8, 256], strides = [1, 1]} : vector<8x512xf32> to vector<8x256xf32>
    %cst_240 = arith.constant 0.000000e+00 : f32
    %499 = vector.shape_cast %44 : vector<1x256xi1> to vector<1x256xi1>
    %500 = vector.broadcast %499 : vector<1x256xi1> to vector<8x256xi1>
    %501 = vector.broadcast %cst_240 : f32 to vector<8x256xf32>
    %502 = arith.select %500, %498, %501 : vector<8x256xi1>, vector<8x256xf32>
    %c16_241 = arith.constant 16 : index
    %c0_242 = arith.constant 0 : index
    %503 = vector.load %arg11[%c16_241, %c0_242] : memref<72x512xf32, #tpu.memory_space<vmem>>, vector<8x256xf32>
    tpu.vector_store %arg11[%c16_241, %c0_242], %502 {strides = array<i32>} : memref<72x512xf32, #tpu.memory_space<vmem>>, vector<8x256xf32>,
    %504 = vector.extract_strided_slice %489 {offsets = [0, 127], sizes = [8, 256], strides = [1, 1]} : vector<8x512xf32> to vector<8x256xf32>
    %cst_243 = arith.constant 0.000000e+00 : f32
    %505 = vector.shape_cast %34 : vector<1x256xi1> to vector<1x256xi1>
    %506 = vector.broadcast %505 : vector<1x256xi1> to vector<8x256xi1>
    %507 = vector.broadcast %cst_243 : f32 to vector<8x256xf32>
    %508 = arith.select %506, %504, %507 : vector<8x256xi1>, vector<8x256xf32>
    %c24 = arith.constant 24 : index
    %c0_244 = arith.constant 0 : index
    %509 = vector.load %arg11[%c24, %c0_244] : memref<72x512xf32, #tpu.memory_space<vmem>>, vector<8x256xf32>
    tpu.vector_store %arg11[%c24, %c0_244], %508 {strides = array<i32>} : memref<72x512xf32, #tpu.memory_space<vmem>>, vector<8x256xf32>,
    %510 = vector.extract_strided_slice %489 {offsets = [0, 128], sizes = [8, 256], strides = [1, 1]} : vector<8x512xf32> to vector<8x256xf32>
    %c32_245 = arith.constant 32 : index
    %c0_246 = arith.constant 0 : index
    %511 = vector.load %arg11[%c32_245, %c0_246] : memref<72x512xf32, #tpu.memory_space<vmem>>, vector<8x256xf32>
    tpu.vector_store %arg11[%c32_245, %c0_246], %510 {strides = array<i32>} : memref<72x512xf32, #tpu.memory_space<vmem>>, vector<8x256xf32>,
    %512 = vector.extract_strided_slice %489 {offsets = [0, 129], sizes = [8, 256], strides = [1, 1]} : vector<8x512xf32> to vector<8x256xf32>
    %cst_247 = arith.constant 0.000000e+00 : f32
    %513 = vector.shape_cast %44 : vector<1x256xi1> to vector<1x256xi1>
    %514 = vector.broadcast %513 : vector<1x256xi1> to vector<8x256xi1>
    %515 = vector.broadcast %cst_247 : f32 to vector<8x256xf32>
    %516 = arith.select %514, %512, %515 : vector<8x256xi1>, vector<8x256xf32>
    %c40 = arith.constant 40 : index
    %c0_248 = arith.constant 0 : index
    %517 = vector.load %arg11[%c40, %c0_248] : memref<72x512xf32, #tpu.memory_space<vmem>>, vector<8x256xf32>
    tpu.vector_store %arg11[%c40, %c0_248], %516 {strides = array<i32>} : memref<72x512xf32, #tpu.memory_space<vmem>>, vector<8x256xf32>,
    %518 = vector.extract_strided_slice %489 {offsets = [0, 143], sizes = [8, 256], strides = [1, 1]} : vector<8x512xf32> to vector<8x256xf32>
    %cst_249 = arith.constant 0.000000e+00 : f32
    %519 = vector.shape_cast %34 : vector<1x256xi1> to vector<1x256xi1>
    %520 = vector.broadcast %519 : vector<1x256xi1> to vector<8x256xi1>
    %521 = vector.broadcast %cst_249 : f32 to vector<8x256xf32>
    %522 = arith.select %520, %518, %521 : vector<8x256xi1>, vector<8x256xf32>
    %c48_250 = arith.constant 48 : index
    %c0_251 = arith.constant 0 : index
    %523 = vector.load %arg11[%c48_250, %c0_251] : memref<72x512xf32, #tpu.memory_space<vmem>>, vector<8x256xf32>
    tpu.vector_store %arg11[%c48_250, %c0_251], %522 {strides = array<i32>} : memref<72x512xf32, #tpu.memory_space<vmem>>, vector<8x256xf32>,
    %524 = vector.extract_strided_slice %489 {offsets = [0, 144], sizes = [8, 256], strides = [1, 1]} : vector<8x512xf32> to vector<8x256xf32>
    %c56 = arith.constant 56 : index
    %c0_252 = arith.constant 0 : index
    %525 = vector.load %arg11[%c56, %c0_252] : memref<72x512xf32, #tpu.memory_space<vmem>>, vector<8x256xf32>
    tpu.vector_store %arg11[%c56, %c0_252], %524 {strides = array<i32>} : memref<72x512xf32, #tpu.memory_space<vmem>>, vector<8x256xf32>,
    %526 = vector.extract_strided_slice %489 {offsets = [0, 145], sizes = [8, 256], strides = [1, 1]} : vector<8x512xf32> to vector<8x256xf32>
    %cst_253 = arith.constant 0.000000e+00 : f32
    %527 = vector.shape_cast %44 : vector<1x256xi1> to vector<1x256xi1>
    %528 = vector.broadcast %527 : vector<1x256xi1> to vector<8x256xi1>
    %529 = vector.broadcast %cst_253 : f32 to vector<8x256xf32>
    %530 = arith.select %528, %526, %529 : vector<8x256xi1>, vector<8x256xf32>
    %c64_254 = arith.constant 64 : index
    %c0_255 = arith.constant 0 : index
    %531 = vector.load %arg11[%c64_254, %c0_255] : memref<72x512xf32, #tpu.memory_space<vmem>>, vector<8x256xf32>
    tpu.vector_store %arg11[%c64_254, %c0_255], %530 {strides = array<i32>} : memref<72x512xf32, #tpu.memory_space<vmem>>, vector<8x256xf32>,
    %532 = vector.extract_strided_slice %398 {offsets = [0, 256], sizes = [8, 256], strides = [1, 1]} : vector<8x512xf32> to vector<8x256xf32>
    %c1_256 = arith.constant 1 : index
    %c0_257 = arith.constant 0 : index
    %c0_258 = arith.constant 0 : index
    %533 = vector.load %arg1[%c1_256, %c0_257, %c0_258] : memref<2x8x256xf32, #tpu.memory_space<vmem>>, vector<1x8x256xf32>
    %534 = vector.shape_cast %533 : vector<1x8x256xf32> to vector<8x256xf32>
    %c1_259 = arith.constant 1 : index
    %c0_260 = arith.constant 0 : index
    %c0_261 = arith.constant 0 : index
    %535 = vector.load %arg2[%c1_259, %c0_260, %c0_261] : memref<2x8x256xf32, #tpu.memory_space<vmem>>, vector<1x8x256xf32>
    %536 = vector.shape_cast %535 : vector<1x8x256xf32> to vector<8x256xf32>
    %cst_262 = arith.constant dense<0.000000e+00> : vector<8xf32>
    %537 = vector.multi_reduction <add>, %532, %cst_262 [1] : vector<8x256xf32> to vector<8xf32>
    %538 = vector.shape_cast %537 : vector<8xf32> to vector<8x1xf32>
    %cst_263 = arith.constant 2.560000e+02 : f32
    %539 = vector.broadcast %cst_263 : f32 to vector<8x1xf32>
    %540 = arith.divf %538, %539 : vector<8x1xf32>
    %541 = vector.broadcast %540 : vector<8x1xf32> to vector<8x256xf32>
    %542 = arith.subf %532, %541 : vector<8x256xf32>
    %543 = arith.mulf %542, %542 : vector<8x256xf32>
    %cst_264 = arith.constant dense<0.000000e+00> : vector<8xf32>
    %544 = vector.multi_reduction <add>, %543, %cst_264 [1] : vector<8x256xf32> to vector<8xf32>
    %545 = vector.shape_cast %544 : vector<8xf32> to vector<8x1xf32>
    %cst_265 = arith.constant 0.00392156886 : f32
    %546 = vector.broadcast %cst_265 : f32 to vector<8x1xf32>
    %547 = arith.mulf %545, %546 : vector<8x1xf32>
    %cst_266 = arith.constant 9.99999974E-5 : f32
    %548 = vector.broadcast %cst_266 : f32 to vector<8x1xf32>
    %549 = arith.addf %547, %548 : vector<8x1xf32>
    %cst_267 = arith.constant 4.000000e+00 : f32
    %550 = vector.broadcast %cst_267 : f32 to vector<8x1xf32>
    %551 = arith.mulf %550, %549 : vector<8x1xf32>
    %552 = tpu.reciprocal %551 : vector<8x1xf32> -> vector<8x1xf32>
    %553 = vector.broadcast %552 : vector<8x1xf32> to vector<8x256xf32>
    %554 = arith.mulf %543, %553 : vector<8x256xf32>
    %cst_268 = arith.constant 5.000000e-01 : f32
    %555 = vector.broadcast %cst_268 : f32 to vector<8x256xf32>
    %556 = arith.addf %554, %555 : vector<8x256xf32>
    %557 = arith.negf %556 : vector<8x256xf32>
    %558 = math.exp %557 : vector<8x256xf32>
    %cst_269 = arith.constant 1.000000e+00 : f32
    %559 = vector.broadcast %cst_269 : f32 to vector<8x256xf32>
    %560 = arith.addf %559, %558 : vector<8x256xf32>
    %561 = arith.divf %559, %560 : vector<8x256xf32>
    %562 = arith.mulf %532, %561 : vector<8x256xf32>
    %563 = arith.addf %562, %534 : vector<8x256xf32>
    %564 = arith.addf %563, %536 : vector<8x256xf32>
    %cst_270 = arith.constant dense<0.000000e+00> : vector<8xf32>
    %565 = vector.multi_reduction <add>, %536, %cst_270 [1] : vector<8x256xf32> to vector<8xf32>
    %566 = vector.shape_cast %565 : vector<8xf32> to vector<8x1xf32>
    %cst_271 = arith.constant 2.560000e+02 : f32
    %567 = vector.broadcast %cst_271 : f32 to vector<8x1xf32>
    %568 = arith.divf %566, %567 : vector<8x1xf32>
    %569 = vector.broadcast %568 : vector<8x1xf32> to vector<8x256xf32>
    %570 = arith.subf %536, %569 : vector<8x256xf32>
    %571 = arith.mulf %570, %570 : vector<8x256xf32>
    %cst_272 = arith.constant dense<0.000000e+00> : vector<8xf32>
    %572 = vector.multi_reduction <add>, %571, %cst_272 [1] : vector<8x256xf32> to vector<8xf32>
    %573 = vector.shape_cast %572 : vector<8xf32> to vector<8x1xf32>
    %cst_273 = arith.constant 0.00392156886 : f32
    %574 = vector.broadcast %cst_273 : f32 to vector<8x1xf32>
    %575 = arith.mulf %573, %574 : vector<8x1xf32>
    %cst_274 = arith.constant 9.99999974E-5 : f32
    %576 = vector.broadcast %cst_274 : f32 to vector<8x1xf32>
    %577 = arith.addf %575, %576 : vector<8x1xf32>
    %cst_275 = arith.constant 4.000000e+00 : f32
    %578 = vector.broadcast %cst_275 : f32 to vector<8x1xf32>
    %579 = arith.mulf %578, %577 : vector<8x1xf32>
    %580 = tpu.reciprocal %579 : vector<8x1xf32> -> vector<8x1xf32>
    %581 = vector.broadcast %580 : vector<8x1xf32> to vector<8x256xf32>
    %582 = arith.mulf %571, %581 : vector<8x256xf32>
    %cst_276 = arith.constant 5.000000e-01 : f32
    %583 = vector.broadcast %cst_276 : f32 to vector<8x256xf32>
    %584 = arith.addf %582, %583 : vector<8x256xf32>
    %585 = arith.negf %584 : vector<8x256xf32>
    %586 = math.exp %585 : vector<8x256xf32>
    %cst_277 = arith.constant 1.000000e+00 : f32
    %587 = vector.broadcast %cst_277 : f32 to vector<8x256xf32>
    %588 = arith.addf %587, %586 : vector<8x256xf32>
    %589 = arith.divf %587, %588 : vector<8x256xf32>
    %590 = arith.mulf %536, %589 : vector<8x256xf32>
    %591 = arith.mulf %590, %532 : vector<8x256xf32>
    %592 = arith.addf %564, %591 : vector<8x256xf32>
    %cst_278 = arith.constant dense<0.000000e+00> : vector<8xf32>
    %593 = vector.multi_reduction <add>, %534, %cst_278 [1] : vector<8x256xf32> to vector<8xf32>
    %594 = vector.shape_cast %593 : vector<8xf32> to vector<8x1xf32>
    %cst_279 = arith.constant 2.560000e+02 : f32
    %595 = vector.broadcast %cst_279 : f32 to vector<8x1xf32>
    %596 = arith.divf %594, %595 : vector<8x1xf32>
    %597 = vector.broadcast %596 : vector<8x1xf32> to vector<8x256xf32>
    %598 = arith.subf %534, %597 : vector<8x256xf32>
    %599 = arith.mulf %598, %598 : vector<8x256xf32>
    %cst_280 = arith.constant dense<0.000000e+00> : vector<8xf32>
    %600 = vector.multi_reduction <add>, %599, %cst_280 [1] : vector<8x256xf32> to vector<8xf32>
    %601 = vector.shape_cast %600 : vector<8xf32> to vector<8x1xf32>
    %cst_281 = arith.constant 0.00392156886 : f32
    %602 = vector.broadcast %cst_281 : f32 to vector<8x1xf32>
    %603 = arith.mulf %601, %602 : vector<8x1xf32>
    %cst_282 = arith.constant 9.99999974E-5 : f32
    %604 = vector.broadcast %cst_282 : f32 to vector<8x1xf32>
    %605 = arith.addf %603, %604 : vector<8x1xf32>
    %cst_283 = arith.constant 4.000000e+00 : f32
    %606 = vector.broadcast %cst_283 : f32 to vector<8x1xf32>
    %607 = arith.mulf %606, %605 : vector<8x1xf32>
    %608 = tpu.reciprocal %607 : vector<8x1xf32> -> vector<8x1xf32>
    %609 = vector.broadcast %608 : vector<8x1xf32> to vector<8x256xf32>
    %610 = arith.mulf %599, %609 : vector<8x256xf32>
    %cst_284 = arith.constant 5.000000e-01 : f32
    %611 = vector.broadcast %cst_284 : f32 to vector<8x256xf32>
    %612 = arith.addf %610, %611 : vector<8x256xf32>
    %613 = arith.negf %612 : vector<8x256xf32>
    %614 = math.exp %613 : vector<8x256xf32>
    %cst_285 = arith.constant 1.000000e+00 : f32
    %615 = vector.broadcast %cst_285 : f32 to vector<8x256xf32>
    %616 = arith.addf %615, %614 : vector<8x256xf32>
    %617 = arith.divf %615, %616 : vector<8x256xf32>
    %618 = arith.mulf %534, %617 : vector<8x256xf32>
    %619 = arith.mulf %618, %532 : vector<8x256xf32>
    %620 = arith.addf %592, %619 : vector<8x256xf32>
    %c0_286 = arith.constant 0 : index
    %c128_287 = arith.constant 128 : index
    %621 = vector.load %arg9[%c0_286, %c128_287] : memref<8x512xf32, #tpu.memory_space<vmem>>, vector<8x256xf32>
    tpu.vector_store %arg9[%c0_286, %c128_287], %620 {strides = array<i32>} : memref<8x512xf32, #tpu.memory_space<vmem>>, vector<8x256xf32>,
    %c0_288 = arith.constant 0 : index
    %c0_289 = arith.constant 0 : index
    %622 = vector.load %arg9[%c0_288, %c0_289] : memref<8x512xf32, #tpu.memory_space<vmem>>, vector<8x512xf32>
    %623 = vector.extract_strided_slice %622 {offsets = [0, 111], sizes = [8, 256], strides = [1, 1]} : vector<8x512xf32> to vector<8x256xf32>
    %cst_290 = arith.constant 0.000000e+00 : f32
    %624 = vector.shape_cast %34 : vector<1x256xi1> to vector<1x256xi1>
    %625 = vector.broadcast %624 : vector<1x256xi1> to vector<8x256xi1>
    %626 = vector.broadcast %cst_290 : f32 to vector<8x256xf32>
    %627 = arith.select %625, %623, %626 : vector<8x256xi1>, vector<8x256xf32>
    %c0_291 = arith.constant 0 : index
    %c256_292 = arith.constant 256 : index
    %628 = vector.load %arg11[%c0_291, %c256_292] : memref<72x512xf32, #tpu.memory_space<vmem>>, vector<8x256xf32>
    tpu.vector_store %arg11[%c0_291, %c256_292], %627 {strides = array<i32>} : memref<72x512xf32, #tpu.memory_space<vmem>>, vector<8x256xf32>,
    %629 = vector.extract_strided_slice %622 {offsets = [0, 112], sizes = [8, 256], strides = [1, 1]} : vector<8x512xf32> to vector<8x256xf32>
    %c8_293 = arith.constant 8 : index
    %c256_294 = arith.constant 256 : index
    %630 = vector.load %arg11[%c8_293, %c256_294] : memref<72x512xf32, #tpu.memory_space<vmem>>, vector<8x256xf32>
    tpu.vector_store %arg11[%c8_293, %c256_294], %629 {strides = array<i32>} : memref<72x512xf32, #tpu.memory_space<vmem>>, vector<8x256xf32>,
    %631 = vector.extract_strided_slice %622 {offsets = [0, 113], sizes = [8, 256], strides = [1, 1]} : vector<8x512xf32> to vector<8x256xf32>
    %cst_295 = arith.constant 0.000000e+00 : f32
    %632 = vector.shape_cast %44 : vector<1x256xi1> to vector<1x256xi1>
    %633 = vector.broadcast %632 : vector<1x256xi1> to vector<8x256xi1>
    %634 = vector.broadcast %cst_295 : f32 to vector<8x256xf32>
    %635 = arith.select %633, %631, %634 : vector<8x256xi1>, vector<8x256xf32>
    %c16_296 = arith.constant 16 : index
    %c256_297 = arith.constant 256 : index
    %636 = vector.load %arg11[%c16_296, %c256_297] : memref<72x512xf32, #tpu.memory_space<vmem>>, vector<8x256xf32>
    tpu.vector_store %arg11[%c16_296, %c256_297], %635 {strides = array<i32>} : memref<72x512xf32, #tpu.memory_space<vmem>>, vector<8x256xf32>,
    %637 = vector.extract_strided_slice %622 {offsets = [0, 127], sizes = [8, 256], strides = [1, 1]} : vector<8x512xf32> to vector<8x256xf32>
    %cst_298 = arith.constant 0.000000e+00 : f32
    %638 = vector.shape_cast %34 : vector<1x256xi1> to vector<1x256xi1>
    %639 = vector.broadcast %638 : vector<1x256xi1> to vector<8x256xi1>
    %640 = vector.broadcast %cst_298 : f32 to vector<8x256xf32>
    %641 = arith.select %639, %637, %640 : vector<8x256xi1>, vector<8x256xf32>
    %c24_299 = arith.constant 24 : index
    %c256_300 = arith.constant 256 : index
    %642 = vector.load %arg11[%c24_299, %c256_300] : memref<72x512xf32, #tpu.memory_space<vmem>>, vector<8x256xf32>
    tpu.vector_store %arg11[%c24_299, %c256_300], %641 {strides = array<i32>} : memref<72x512xf32, #tpu.memory_space<vmem>>, vector<8x256xf32>,
    %643 = vector.extract_strided_slice %622 {offsets = [0, 128], sizes = [8, 256], strides = [1, 1]} : vector<8x512xf32> to vector<8x256xf32>
    %c32_301 = arith.constant 32 : index
    %c256_302 = arith.constant 256 : index
    %644 = vector.load %arg11[%c32_301, %c256_302] : memref<72x512xf32, #tpu.memory_space<vmem>>, vector<8x256xf32>
    tpu.vector_store %arg11[%c32_301, %c256_302], %643 {strides = array<i32>} : memref<72x512xf32, #tpu.memory_space<vmem>>, vector<8x256xf32>,
    %645 = vector.extract_strided_slice %622 {offsets = [0, 129], sizes = [8, 256], strides = [1, 1]} : vector<8x512xf32> to vector<8x256xf32>
    %cst_303 = arith.constant 0.000000e+00 : f32
    %646 = vector.shape_cast %44 : vector<1x256xi1> to vector<1x256xi1>
    %647 = vector.broadcast %646 : vector<1x256xi1> to vector<8x256xi1>
    %648 = vector.broadcast %cst_303 : f32 to vector<8x256xf32>
    %649 = arith.select %647, %645, %648 : vector<8x256xi1>, vector<8x256xf32>
    %c40_304 = arith.constant 40 : index
    %c256_305 = arith.constant 256 : index
    %650 = vector.load %arg11[%c40_304, %c256_305] : memref<72x512xf32, #tpu.memory_space<vmem>>, vector<8x256xf32>
    tpu.vector_store %arg11[%c40_304, %c256_305], %649 {strides = array<i32>} : memref<72x512xf32, #tpu.memory_space<vmem>>, vector<8x256xf32>,
    %651 = vector.extract_strided_slice %622 {offsets = [0, 143], sizes = [8, 256], strides = [1, 1]} : vector<8x512xf32> to vector<8x256xf32>
    %cst_306 = arith.constant 0.000000e+00 : f32
    %652 = vector.shape_cast %34 : vector<1x256xi1> to vector<1x256xi1>
    %653 = vector.broadcast %652 : vector<1x256xi1> to vector<8x256xi1>
    %654 = vector.broadcast %cst_306 : f32 to vector<8x256xf32>
    %655 = arith.select %653, %651, %654 : vector<8x256xi1>, vector<8x256xf32>
    %c48_307 = arith.constant 48 : index
    %c256_308 = arith.constant 256 : index
    %656 = vector.load %arg11[%c48_307, %c256_308] : memref<72x512xf32, #tpu.memory_space<vmem>>, vector<8x256xf32>
    tpu.vector_store %arg11[%c48_307, %c256_308], %655 {strides = array<i32>} : memref<72x512xf32, #tpu.memory_space<vmem>>, vector<8x256xf32>,
    %657 = vector.extract_strided_slice %622 {offsets = [0, 144], sizes = [8, 256], strides = [1, 1]} : vector<8x512xf32> to vector<8x256xf32>
    %c56_309 = arith.constant 56 : index
    %c256_310 = arith.constant 256 : index
    %658 = vector.load %arg11[%c56_309, %c256_310] : memref<72x512xf32, #tpu.memory_space<vmem>>, vector<8x256xf32>
    tpu.vector_store %arg11[%c56_309, %c256_310], %657 {strides = array<i32>} : memref<72x512xf32, #tpu.memory_space<vmem>>, vector<8x256xf32>,
    %659 = vector.extract_strided_slice %622 {offsets = [0, 145], sizes = [8, 256], strides = [1, 1]} : vector<8x512xf32> to vector<8x256xf32>
    %cst_311 = arith.constant 0.000000e+00 : f32
    %660 = vector.shape_cast %44 : vector<1x256xi1> to vector<1x256xi1>
    %661 = vector.broadcast %660 : vector<1x256xi1> to vector<8x256xi1>
    %662 = vector.broadcast %cst_311 : f32 to vector<8x256xf32>
    %663 = arith.select %661, %659, %662 : vector<8x256xi1>, vector<8x256xf32>
    %c64_312 = arith.constant 64 : index
    %c256_313 = arith.constant 256 : index
    %664 = vector.load %arg11[%c64_312, %c256_313] : memref<72x512xf32, #tpu.memory_space<vmem>>, vector<8x256xf32>
    tpu.vector_store %arg11[%c64_312, %c256_313], %663 {strides = array<i32>} : memref<72x512xf32, #tpu.memory_space<vmem>>, vector<8x256xf32>,
    %c0_314 = arith.constant 0 : index
    %c0_315 = arith.constant 0 : index
    %665 = vector.load %arg5[%c0_314, %c0_315] : memref<8x72xf32, #tpu.memory_space<vmem>>, vector<8x72xf32>
    %c0_316 = arith.constant 0 : index
    %c0_317 = arith.constant 0 : index
    %666 = vector.load %arg11[%c0_316, %c0_317] : memref<72x512xf32, #tpu.memory_space<vmem>>, vector<72x512xf32>
    %cst_318 = arith.constant dense<0.000000e+00> : vector<8x512xf32>
    %667 = tpu.matmul %665, %666, %cst_318 {dimension_numbers = #tpu.dot_dimension_numbers<[1], [0], [0], [1], [0, 0, 1, 1], [], []>} : vector<8x72xf32>, vector<72x512xf32>, vector<8x512xf32> -> vector<8x512xf32>
    %c0_319 = arith.constant 0 : index
    %c0_320 = arith.constant 0 : index
    %668 = vector.load %arg6[%c0_319, %c0_320] : memref<8x1xf32, #tpu.memory_space<vmem>>, vector<8x1xf32>
    %669 = vector.broadcast %668 : vector<8x1xf32> to vector<8x512xf32>
    %670 = arith.addf %667, %669 : vector<8x512xf32>
    %cst_321 = arith.constant 0.000000e+00 : f32
    %671 = vector.broadcast %cst_321 : f32 to vector<8x512xf32>
    %672 = arith.maximumf %670, %671 : vector<8x512xf32>
    %673 = vector.extract_strided_slice %672 {offsets = [0, 0], sizes = [8, 256], strides = [1, 1]} : vector<8x512xf32> to vector<8x256xf32>
    %cst_322 = arith.constant dense<0.000000e+00> : vector<8xf32>
    %674 = vector.multi_reduction <add>, %673, %cst_322 [1] : vector<8x256xf32> to vector<8xf32>
    %675 = vector.shape_cast %674 : vector<8xf32> to vector<8x1xf32>
    %cst_323 = arith.constant 2.560000e+02 : f32
    %676 = vector.broadcast %cst_323 : f32 to vector<8x1xf32>
    %677 = arith.divf %675, %676 : vector<8x1xf32>
    %678 = vector.broadcast %677 : vector<8x1xf32> to vector<8x256xf32>
    %679 = arith.subf %673, %678 : vector<8x256xf32>
    %680 = arith.mulf %679, %679 : vector<8x256xf32>
    %cst_324 = arith.constant dense<0.000000e+00> : vector<8xf32>
    %681 = vector.multi_reduction <add>, %680, %cst_324 [1] : vector<8x256xf32> to vector<8xf32>
    %682 = vector.shape_cast %681 : vector<8xf32> to vector<8x1xf32>
    %cst_325 = arith.constant 0.00392156886 : f32
    %683 = vector.broadcast %cst_325 : f32 to vector<8x1xf32>
    %684 = arith.mulf %682, %683 : vector<8x1xf32>
    %cst_326 = arith.constant 9.99999974E-5 : f32
    %685 = vector.broadcast %cst_326 : f32 to vector<8x1xf32>
    %686 = arith.addf %684, %685 : vector<8x1xf32>
    %cst_327 = arith.constant 4.000000e+00 : f32
    %687 = vector.broadcast %cst_327 : f32 to vector<8x1xf32>
    %688 = arith.mulf %687, %686 : vector<8x1xf32>
    %689 = tpu.reciprocal %688 : vector<8x1xf32> -> vector<8x1xf32>
    %690 = vector.broadcast %689 : vector<8x1xf32> to vector<8x256xf32>
    %691 = arith.mulf %680, %690 : vector<8x256xf32>
    %cst_328 = arith.constant 5.000000e-01 : f32
    %692 = vector.broadcast %cst_328 : f32 to vector<8x256xf32>
    %693 = arith.addf %691, %692 : vector<8x256xf32>
    %694 = arith.negf %693 : vector<8x256xf32>
    %695 = math.exp %694 : vector<8x256xf32>
    %cst_329 = arith.constant 1.000000e+00 : f32
    %696 = vector.broadcast %cst_329 : f32 to vector<8x256xf32>
    %697 = arith.addf %696, %695 : vector<8x256xf32>
    %698 = arith.divf %696, %697 : vector<8x256xf32>
    %699 = arith.mulf %673, %698 : vector<8x256xf32>
    %c0_330 = arith.constant 0 : index
    %c0_331 = arith.constant 0 : index
    %c0_332 = arith.constant 0 : index
    %700 = vector.load %arg7[%c0_330, %c0_331, %c0_332] : memref<2x8x256xf32, #tpu.memory_space<vmem>>, vector<1x8x256xf32>
    %701 = vector.shape_cast %700 : vector<1x8x256xf32> to vector<8x256xf32>
    %702 = vector.shape_cast %699 : vector<8x256xf32> to vector<1x8x256xf32>
    tpu.vector_store %arg7[%c0_330, %c0_331, %c0_332], %702 {strides = array<i32>} : memref<2x8x256xf32, #tpu.memory_space<vmem>>, vector<1x8x256xf32>,
    %703 = vector.extract_strided_slice %672 {offsets = [0, 256], sizes = [8, 256], strides = [1, 1]} : vector<8x512xf32> to vector<8x256xf32>
    %cst_333 = arith.constant dense<0.000000e+00> : vector<8xf32>
    %704 = vector.multi_reduction <add>, %703, %cst_333 [1] : vector<8x256xf32> to vector<8xf32>
    %705 = vector.shape_cast %704 : vector<8xf32> to vector<8x1xf32>
    %cst_334 = arith.constant 2.560000e+02 : f32
    %706 = vector.broadcast %cst_334 : f32 to vector<8x1xf32>
    %707 = arith.divf %705, %706 : vector<8x1xf32>
    %708 = vector.broadcast %707 : vector<8x1xf32> to vector<8x256xf32>
    %709 = arith.subf %703, %708 : vector<8x256xf32>
    %710 = arith.mulf %709, %709 : vector<8x256xf32>
    %cst_335 = arith.constant dense<0.000000e+00> : vector<8xf32>
    %711 = vector.multi_reduction <add>, %710, %cst_335 [1] : vector<8x256xf32> to vector<8xf32>
    %712 = vector.shape_cast %711 : vector<8xf32> to vector<8x1xf32>
    %cst_336 = arith.constant 0.00392156886 : f32
    %713 = vector.broadcast %cst_336 : f32 to vector<8x1xf32>
    %714 = arith.mulf %712, %713 : vector<8x1xf32>
    %cst_337 = arith.constant 9.99999974E-5 : f32
    %715 = vector.broadcast %cst_337 : f32 to vector<8x1xf32>
    %716 = arith.addf %714, %715 : vector<8x1xf32>
    %cst_338 = arith.constant 4.000000e+00 : f32
    %717 = vector.broadcast %cst_338 : f32 to vector<8x1xf32>
    %718 = arith.mulf %717, %716 : vector<8x1xf32>
    %719 = tpu.reciprocal %718 : vector<8x1xf32> -> vector<8x1xf32>
    %720 = vector.broadcast %719 : vector<8x1xf32> to vector<8x256xf32>
    %721 = arith.mulf %710, %720 : vector<8x256xf32>
    %cst_339 = arith.constant 5.000000e-01 : f32
    %722 = vector.broadcast %cst_339 : f32 to vector<8x256xf32>
    %723 = arith.addf %721, %722 : vector<8x256xf32>
    %724 = arith.negf %723 : vector<8x256xf32>
    %725 = math.exp %724 : vector<8x256xf32>
    %cst_340 = arith.constant 1.000000e+00 : f32
    %726 = vector.broadcast %cst_340 : f32 to vector<8x256xf32>
    %727 = arith.addf %726, %725 : vector<8x256xf32>
    %728 = arith.divf %726, %727 : vector<8x256xf32>
    %729 = arith.mulf %703, %728 : vector<8x256xf32>
    %c1_341 = arith.constant 1 : index
    %c0_342 = arith.constant 0 : index
    %c0_343 = arith.constant 0 : index
    %730 = vector.load %arg7[%c1_341, %c0_342, %c0_343] : memref<2x8x256xf32, #tpu.memory_space<vmem>>, vector<1x8x256xf32>
    %731 = vector.shape_cast %730 : vector<1x8x256xf32> to vector<8x256xf32>
    %732 = vector.shape_cast %729 : vector<8x256xf32> to vector<1x8x256xf32>
    tpu.vector_store %arg7[%c1_341, %c0_342, %c0_343], %732 {strides = array<i32>} : memref<2x8x256xf32, #tpu.memory_space<vmem>>, vector<1x8x256xf32>,
    return
  }
  func.func @transform_0(%arg0: i32) -> (i32, i32, i32) {
    %c0_i32 = arith.constant 0 : i32
    %c0_i32_0 = arith.constant 0 : i32
    %c0_i32_1 = arith.constant 0 : i32
    return %arg0, %c0_i32, %c0_i32_0 : i32, i32, i32
  }
  func.func @transform_1(%arg0: i32) -> (i32, i32, i32) {
    %c0_i32 = arith.constant 0 : i32
    %c0_i32_0 = arith.constant 0 : i32
    %c0_i32_1 = arith.constant 0 : i32
    return %arg0, %c0_i32, %c0_i32_0 : i32, i32, i32
  }
  func.func @transform_2(%arg0: i32) -> (i32, i32) {
    %c0_i32 = arith.constant 0 : i32
    %c0_i32_0 = arith.constant 0 : i32
    %c0_i32_1 = arith.constant 0 : i32
    return %c0_i32, %c0_i32_0 : i32, i32
  }
  func.func @transform_3(%arg0: i32) -> (i32, i32) {
    %c0_i32 = arith.constant 0 : i32
    %c0_i32_0 = arith.constant 0 : i32
    %c0_i32_1 = arith.constant 0 : i32
    return %c0_i32, %c0_i32_0 : i32, i32
  }
  func.func @transform_4(%arg0: i32) -> (i32, i32) {
    %c0_i32 = arith.constant 0 : i32
    %c0_i32_0 = arith.constant 0 : i32
    %c0_i32_1 = arith.constant 0 : i32
    return %c0_i32, %c0_i32_0 : i32, i32
  }
  func.func @transform_5(%arg0: i32) -> (i32, i32) {
    %c0_i32 = arith.constant 0 : i32
    %c0_i32_0 = arith.constant 0 : i32
    %c0_i32_1 = arith.constant 0 : i32
    return %c0_i32, %c0_i32_0 : i32, i32
  }
  func.func @transform_6(%arg0: i32) -> (i32, i32, i32) {
    %c0_i32 = arith.constant 0 : i32
    %c0_i32_0 = arith.constant 0 : i32
    %c0_i32_1 = arith.constant 0 : i32
    return %arg0, %c0_i32, %c0_i32_0 : i32, i32, i32
  }
}

</mosaic_0001>

<llo_original>
// kernel: bfam_forward.1
$region0: #{bfam_forward.1}
  #allocation0 [shape = 'u32[]', space=smem, size = 0x4, offset = 0x4, fixed_abs, tag = 'smem constant byte address 0x4 - core index']
  #allocation1 [shape = 'u32[144,128]{1,0:T(1,128)}', space=vmem, size = 0x12000, scoped, tag = 'internal scratch']
  #allocation2 [shape = 'f32[16,512]{1,0:T(8,128)}', space=vmem, size = 0x8000, scoped, tag = 'scratch operand']
  #allocation3 [shape = 'f32[8,512]{1,0:T(8,128)}', space=vmem, size = 0x4000, scoped, tag = 'scratch operand']
  #allocation4 [shape = 'f32[576,512]{1,0:T(8,128)}', space=vmem, size = 0x120000, scoped, tag = 'scratch operand']
  #allocation5 [shape = 'f32[72,512]{1,0:T(8,128)}', space=vmem, size = 0x24000, scoped, tag = 'scratch operand']
  %s0 = inlined_call_operand.vmem [shape: f32[2,8,256], index: 0, kind: input, shape index: {}]
  %s1 = inlined_call_operand.vmem [shape: f32[2,8,256], index: 1, kind: input, shape index: {}]
  %s2 = inlined_call_operand.vmem [shape: f32[8,576], index: 2, kind: input, shape index: {}]
  %s3 = inlined_call_operand.vmem [shape: f32[8,1], index: 3, kind: input, shape index: {}]
  %s4 = inlined_call_operand.vmem [shape: f32[8,72], index: 4, kind: input, shape index: {}]
  %s5 = inlined_call_operand.vmem [shape: f32[8,1], index: 5, kind: input, shape index: {}]
  %s6 = inlined_call_operand.vmem [shape: f32[2,8,256], index: 6, kind: output, shape index: {}]
  %s7 = sld [smem:[#allocation0]]
  $region34: #{bfam_forward.1} parent=0
    _
  %s9 = ssub.s32 1, %s7
  %s10 = scalar_select 0, %s9, %s7
  // Predicated region
  $region2: #{bfam_forward.1} parent=0 // pred_check
    _
  $region3: #{bfam_forward.1} parent=0 // pred_check_branch
    %12 = sbr.rel (0) target = $region5
  $region4: #{bfam_forward.1} parent=0 // pred_region
    _
  $region5: #{bfam_forward.1} parent=0 // pred_fallthru
    _
  // Predicated region
  $region6: #{bfam_forward.1} parent=0 // pred_check
    _
  $region7: #{bfam_forward.1} parent=0 // pred_check_branch
    %14 = sbr.rel (0) target = $region9
  $region8: #{bfam_forward.1} parent=0 // pred_region
    _
  $region9: #{bfam_forward.1} parent=0 // pred_fallthru
    _
  // Predicated region
  $region10: #{bfam_forward.1} parent=0 // pred_check
    _
  $region11: #{bfam_forward.1} parent=0 // pred_check_branch
    %16 = sbr.rel (0) target = $region13
  $region12: #{bfam_forward.1} parent=0 // pred_region
    _
  $region13: #{bfam_forward.1} parent=0 // pred_fallthru
    _
  // Predicated region
  $region14: #{bfam_forward.1} parent=0 // pred_check
    _
  $region15: #{bfam_forward.1} parent=0 // pred_check_branch
    %18 = sbr.rel (0) target = $region17
  $region16: #{bfam_forward.1} parent=0 // pred_region
    _
  $region17: #{bfam_forward.1} parent=0 // pred_fallthru
    _
  // Predicated region
  $region18: #{bfam_forward.1} parent=0 // pred_check
    _
  $region19: #{bfam_forward.1} parent=0 // pred_check_branch
    %20 = sbr.rel (0) target = $region21
  $region20: #{bfam_forward.1} parent=0 // pred_region
    _
  $region21: #{bfam_forward.1} parent=0 // pred_fallthru
    _
  // Predicated region
  $region22: #{bfam_forward.1} parent=0 // pred_check
    _
  $region23: #{bfam_forward.1} parent=0 // pred_check_branch
    %22 = sbr.rel (0) target = $region25
  $region24: #{bfam_forward.1} parent=0 // pred_region
    _
  $region25: #{bfam_forward.1} parent=0 // pred_fallthru
    _
  %23 = vst [vmem:[#allocation2] sm:$0xff] 0.0
  %24 = vst [vmem:[#allocation2 + $0x20] sm:$0xff] 0.0
  %25 = vst [vmem:[#allocation2 + $0x18] sm:$0xff] 0.0
  %26 = vst [vmem:[#allocation2 + $0x38] sm:$0xff] 0.0
  %27 = vst [vmem:[#allocation3] sm:$0xff] 0.0
  %28 = vst [vmem:[#allocation3 + $0x18] sm:$0xff] 0.0
  %v29 = vlaneseq
  %v30 = vand.u32 %v29, 127
  %v31 = vadd.s32 %v30, 128
  %vm32 = vcmp.lt.s32.totalorder %v30, 0
  %v33 = vsub.s32 0, %v30
  %v34 = vsel %vm32, %v33, %v30
  %v35 = vshrl.u32 %v34, 4
  %v36 = vand.u32 %v34, 15
  %v37 = vsub.s32 0, %v36
  %v38 = vsel %vm32, %v37, %v36
  %vm39 = vcmp.lt.s32.totalorder %v31, 0
  %v40 = vsub.s32 0, %v31
  %v41 = vsel %vm39, %v40, %v31
  %v42 = vshrl.u32 %v41, 4
  %v43 = vand.u32 %v41, 15
  %v44 = vsub.s32 0, %v43
  %v45 = vsel %vm39, %v44, %v43
  %vm46 = vcmp.ne.s32.totalorder %v38, 0
  %vm47 = vcmp.ne.s32.totalorder %v45, 0
  %vm48 = vcmp.lt.s32.totalorder %v38, 0
  %vm49 = vcmp.lt.s32.totalorder %v45, 0
  %vm50 = vmand %vm48, %vm46
  %vm51 = vmand %vm49, %vm47
  %v52 = vadd.s32 %v38, 16
  %v53 = vadd.s32 %v45, 16
  %v54 = vsel %vm50, %v52, %v38
  %v55 = vsel %vm51, %v53, %v45
  %v56 = vld [vmem:[%s0] sm:$0xff]
  %v57 = vld [vmem:[%s0 + $0x8] sm:$0xff]
  %58 = vst [vmem:[#allocation2 + $0x8] sm:$0xff] %v56
  %59 = vst [vmem:[#allocation2 + $0x10] sm:$0xff] %v57
  %v60 = vld [vmem:[%s1] sm:$0xff]
  %v61 = vld [vmem:[%s1 + $0x8] sm:$0xff]
  %62 = vst [vmem:[#allocation2 + $0x28] sm:$0xff] %v60
  %63 = vst [vmem:[#allocation2 + $0x30] sm:$0xff] %v61
  %v64 = vld [vmem:[#allocation2] sm:$0xff]
  %v65 = vld [vmem:[#allocation2 + $0x8] sm:$0xff]
  %v66 = vld [vmem:[#allocation2 + $0x10] sm:$0xff]
  %v67 = vld [vmem:[#allocation2 + $0x18] sm:$0xff]
  %v68 = vld [vmem:[#allocation2 + $0x20] sm:$0xff]
  %v69 = vld [vmem:[#allocation2 + $0x28] sm:$0xff]
  %v70 = vld [vmem:[#allocation2 + $0x30] sm:$0xff]
  %v71 = vld [vmem:[#allocation2 + $0x38] sm:$0xff]
  %vm72 = vcmp.ge.s32.totalorder %v54, 1
  %vm73 = vcmp.ge.s32.totalorder %v55, 1
  %v74 = vsel %vm72, 1, 0
  %v75 = vsel %vm73, 1, 0
  %vm76 = vcmp.eq.s32.totalorder %v74, 1
  %vm77 = vcmp.eq.s32.totalorder %v75, 1
  %84 = vrot.lane.b32.xlu0 %v64, 17
  %v85 = vpop.permute.xlu0 %84
  %86 = vrot.lane.b32.xlu0 %v65, 17
  %v87 = vpop.permute.xlu0 %86
  %88 = vrot.lane.b32.xlu0 %v66, 17
  %v89 = vpop.permute.xlu0 %88
  %90 = vrot.lane.b32.xlu0 %v68, 17
  %v91 = vpop.permute.xlu0 %90
  %92 = vrot.lane.b32.xlu0 %v69, 17
  %v93 = vpop.permute.xlu0 %92
  %94 = vrot.lane.b32.xlu0 %v70, 17
  %v95 = vpop.permute.xlu0 %94
  %vm96 = vcmask 138240
  %v97 = vsel %vm96, %v85, %v87
  %v98 = vsel %vm96, %v87, %v89
  %v99 = vsel %vm96, %v91, %v93
  %v100 = vsel %vm96, %v93, %v95
  %v105 = vsel %vm76, %v97, 0.0
  %v106 = vsel %vm77, %v98, 0.0
  %v107 = vsel %vm76, %v99, 0.0
  %v108 = vsel %vm77, %v100, 0.0
  %109 = vst [vmem:[#allocation4] sm:$0xff] %v105
  %110 = vst [vmem:[#allocation4 + $0x8] sm:$0xff] %v106
  %111 = vst [vmem:[#allocation4 + $0x20] sm:$0xff] %v107
  %112 = vst [vmem:[#allocation4 + $0x28] sm:$0xff] %v108
  %113 = vrot.lane.b32.xlu0 %v64, 16
  %v114 = vpop.permute.xlu0 %113
  %115 = vrot.lane.b32.xlu0 %v65, 16
  %v116 = vpop.permute.xlu0 %115
  %117 = vrot.lane.b32.xlu0 %v66, 16
  %v118 = vpop.permute.xlu0 %117
  %119 = vrot.lane.b32.xlu0 %v68, 16
  %v120 = vpop.permute.xlu0 %119
  %121 = vrot.lane.b32.xlu0 %v69, 16
  %v122 = vpop.permute.xlu0 %121
  %123 = vrot.lane.b32.xlu0 %v70, 16
  %v124 = vpop.permute.xlu0 %123
  %vm125 = vcmask 130048
  %v126 = vsel %vm125, %v114, %v116
  %v127 = vsel %vm125, %v116, %v118
  %v128 = vsel %vm125, %v120, %v122
  %v129 = vsel %vm125, %v122, %v124
  %134 = vst [vmem:[#allocation4 + $0x40] sm:$0xff] %v126
  %135 = vst [vmem:[#allocation4 + $0x48] sm:$0xff] %v127
  %136 = vst [vmem:[#allocation4 + $0x60] sm:$0xff] %v128
  %137 = vst [vmem:[#allocation4 + $0x68] sm:$0xff] %v129
  %vm138 = vcmp.lt.s32.totalorder %v54, 15
  %vm139 = vcmp.lt.s32.totalorder %v55, 15
  %v140 = vsel %vm138, 1, 0
  %v141 = vsel %vm139, 1, 0
  %vm142 = vcmp.eq.s32.totalorder %v140, 1
  %vm143 = vcmp.eq.s32.totalorder %v141, 1
  %144 = vrot.lane.b32.xlu0 %v64, 15
  %v145 = vpop.permute.xlu0 %144
  %146 = vrot.lane.b32.xlu0 %v65, 15
  %v147 = vpop.permute.xlu0 %146
  %148 = vrot.lane.b32.xlu0 %v66, 15
  %v149 = vpop.permute.xlu0 %148
  %150 = vrot.lane.b32.xlu0 %v68, 15
  %v151 = vpop.permute.xlu0 %150
  %152 = vrot.lane.b32.xlu0 %v69, 15
  %v153 = vpop.permute.xlu0 %152
  %154 = vrot.lane.b32.xlu0 %v70, 15
  %v155 = vpop.permute.xlu0 %154
  %vm156 = vcmask 121856
  %v157 = vsel %vm156, %v145, %v147
  %v158 = vsel %vm156, %v147, %v149
  %v159 = vsel %vm156, %v151, %v153
  %v160 = vsel %vm156, %v153, %v155
  %v165 = vsel %vm142, %v157, 0.0
  %v166 = vsel %vm143, %v158, 0.0
  %v167 = vsel %vm142, %v159, 0.0
  %v168 = vsel %vm143, %v160, 0.0
  %169 = vst [vmem:[#allocation4 + $0x80] sm:$0xff] %v165
  %170 = vst [vmem:[#allocation4 + $0x88] sm:$0xff] %v166
  %171 = vst [vmem:[#allocation4 + $0xa0] sm:$0xff] %v167
  %172 = vst [vmem:[#allocation4 + $0xa8] sm:$0xff] %v168
  %173 = vrot.lane.b32.xlu0 %v64, 1
  %v174 = vpop.permute.xlu0 %173
  %175 = vrot.lane.b32.xlu0 %v65, 1
  %v176 = vpop.permute.xlu0 %175
  %177 = vrot.lane.b32.xlu0 %v66, 1
  %v178 = vpop.permute.xlu0 %177
  %179 = vrot.lane.b32.xlu0 %v68, 1
  %v180 = vpop.permute.xlu0 %179
  %181 = vrot.lane.b32.xlu0 %v69, 1
  %v182 = vpop.permute.xlu0 %181
  %183 = vrot.lane.b32.xlu0 %v70, 1
  %v184 = vpop.permute.xlu0 %183
  %vm185 = vcmask 7168
  %v186 = vsel %vm185, %v174, %v176
  %v187 = vsel %vm185, %v176, %v178
  %v188 = vsel %vm185, %v180, %v182
  %v189 = vsel %vm185, %v182, %v184
  %v194 = vsel %vm76, %v186, 0.0
  %v195 = vsel %vm77, %v187, 0.0
  %v196 = vsel %vm76, %v188, 0.0
  %v197 = vsel %vm77, %v189, 0.0
  %198 = vst [vmem:[#allocation4 + $0xc0] sm:$0xff] %v194
  %199 = vst [vmem:[#allocation4 + $0xc8] sm:$0xff] %v195
  %200 = vst [vmem:[#allocation4 + $0xe0] sm:$0xff] %v196
  %201 = vst [vmem:[#allocation4 + $0xe8] sm:$0xff] %v197
  %202 = vst [vmem:[#allocation4 + $0x100] sm:$0xff] %v65
  %203 = vst [vmem:[#allocation4 + $0x108] sm:$0xff] %v66
  %204 = vst [vmem:[#allocation4 + $0x120] sm:$0xff] %v69
  %205 = vst [vmem:[#allocation4 + $0x128] sm:$0xff] %v70
  %208 = vrot.lane.b32.xlu0 %v65, 127
  %v209 = vpop.permute.xlu0 %208
  %210 = vrot.lane.b32.xlu0 %v66, 127
  %v211 = vpop.permute.xlu0 %210
  %212 = vrot.lane.b32.xlu0 %v67, 127
  %v213 = vpop.permute.xlu0 %212
  %214 = vrot.lane.b32.xlu0 %v69, 127
  %v215 = vpop.permute.xlu0 %214
  %216 = vrot.lane.b32.xlu0 %v70, 127
  %v217 = vpop.permute.xlu0 %216
  %218 = vrot.lane.b32.xlu0 %v71, 127
  %v219 = vpop.permute.xlu0 %218
  %vm220 = vcmask 1039360
  %v221 = vsel %vm220, %v209, %v211
  %v222 = vsel %vm220, %v211, %v213
  %v223 = vsel %vm220, %v215, %v217
  %v224 = vsel %vm220, %v217, %v219
  %v229 = vsel %vm142, %v221, 0.0
  %v230 = vsel %vm143, %v222, 0.0
  %v231 = vsel %vm142, %v223, 0.0
  %v232 = vsel %vm143, %v224, 0.0
  %233 = vst [vmem:[#allocation4 + $0x140] sm:$0xff] %v229
  %234 = vst [vmem:[#allocation4 + $0x148] sm:$0xff] %v230
  %235 = vst [vmem:[#allocation4 + $0x160] sm:$0xff] %v231
  %236 = vst [vmem:[#allocation4 + $0x168] sm:$0xff] %v232
  %237 = vrot.lane.b32.xlu0 %v65, 113
  %v238 = vpop.permute.xlu0 %237
  %239 = vrot.lane.b32.xlu0 %v66, 113
  %v240 = vpop.permute.xlu0 %239
  %241 = vrot.lane.b32.xlu0 %v67, 113
  %v242 = vpop.permute.xlu0 %241
  %243 = vrot.lane.b32.xlu0 %v69, 113
  %v244 = vpop.permute.xlu0 %243
  %245 = vrot.lane.b32.xlu0 %v70, 113
  %v246 = vpop.permute.xlu0 %245
  %247 = vrot.lane.b32.xlu0 %v71, 113
  %v248 = vpop.permute.xlu0 %247
  %vm249 = vcmask 924672
  %v250 = vsel %vm249, %v238, %v240
  %v251 = vsel %vm249, %v240, %v242
  %v252 = vsel %vm249, %v244, %v246
  %v253 = vsel %vm249, %v246, %v248
  %v258 = vsel %vm76, %v250, 0.0
  %v259 = vsel %vm77, %v251, 0.0
  %v260 = vsel %vm76, %v252, 0.0
  %v261 = vsel %vm77, %v253, 0.0
  %262 = vst [vmem:[#allocation4 + $0x180] sm:$0xff] %v258
  %263 = vst [vmem:[#allocation4 + $0x188] sm:$0xff] %v259
  %264 = vst [vmem:[#allocation4 + $0x1a0] sm:$0xff] %v260
  %265 = vst [vmem:[#allocation4 + $0x1a8] sm:$0xff] %v261
  %266 = vrot.lane.b32.xlu0 %v65, 112
  %v267 = vpop.permute.xlu0 %266
  %268 = vrot.lane.b32.xlu0 %v66, 112
  %v269 = vpop.permute.xlu0 %268
  %270 = vrot.lane.b32.xlu0 %v67, 112
  %v271 = vpop.permute.xlu0 %270
  %272 = vrot.lane.b32.xlu0 %v69, 112
  %v273 = vpop.permute.xlu0 %272
  %274 = vrot.lane.b32.xlu0 %v70, 112
  %v275 = vpop.permute.xlu0 %274
  %276 = vrot.lane.b32.xlu0 %v71, 112
  %v277 = vpop.permute.xlu0 %276
  %vm278 = vcmask 916480
  %v279 = vsel %vm278, %v267, %v269
  %v280 = vsel %vm278, %v269, %v271
  %v281 = vsel %vm278, %v273, %v275
  %v282 = vsel %vm278, %v275, %v277
  %287 = vst [vmem:[#allocation4 + $0x1c0] sm:$0xff] %v279
  %288 = vst [vmem:[#allocation4 + $0x1c8] sm:$0xff] %v280
  %289 = vst [vmem:[#allocation4 + $0x1e0] sm:$0xff] %v281
  %290 = vst [vmem:[#allocation4 + $0x1e8] sm:$0xff] %v282
  %291 = vrot.lane.b32.xlu0 %v65, 111
  %v292 = vpop.permute.xlu0 %291
  %293 = vrot.lane.b32.xlu0 %v66, 111
  %v294 = vpop.permute.xlu0 %293
  %295 = vrot.lane.b32.xlu0 %v67, 111
  %v296 = vpop.permute.xlu0 %295
  %297 = vrot.lane.b32.xlu0 %v69, 111
  %v298 = vpop.permute.xlu0 %297
  %299 = vrot.lane.b32.xlu0 %v70, 111
  %v300 = vpop.permute.xlu0 %299
  %301 = vrot.lane.b32.xlu0 %v71, 111
  %v302 = vpop.permute.xlu0 %301
  %vm303 = vcmask 908288
  %v304 = vsel %vm303, %v292, %v294
  %v305 = vsel %vm303, %v294, %v296
  %v306 = vsel %vm303, %v298, %v300
  %v307 = vsel %vm303, %v300, %v302
  %v312 = vsel %vm142, %v304, 0.0
  %v313 = vsel %vm143, %v305, 0.0
  %v314 = vsel %vm142, %v306, 0.0
  %v315 = vsel %vm143, %v307, 0.0
  %316 = vst [vmem:[#allocation4 + $0x200] sm:$0xff] %v312
  %317 = vst [vmem:[#allocation4 + $0x208] sm:$0xff] %v313
  %318 = vst [vmem:[#allocation4 + $0x220] sm:$0xff] %v314
  %319 = vst [vmem:[#allocation4 + $0x228] sm:$0xff] %v315
  %vm320 = vcmp.ge.s32.totalorder %v54, 2
  %vm321 = vcmp.ge.s32.totalorder %v55, 2
  %v322 = vsel %vm320, 1, 0
  %v323 = vsel %vm321, 1, 0
  %vm324 = vcmp.eq.s32.totalorder %v322, 1
  %vm325 = vcmp.eq.s32.totalorder %v323, 1
  %326 = vrot.lane.b32.xlu0 %v64, 34
  %v327 = vpop.permute.xlu0 %326
  %328 = vrot.lane.b32.xlu0 %v65, 34
  %v329 = vpop.permute.xlu0 %328
  %330 = vrot.lane.b32.xlu0 %v66, 34
  %v331 = vpop.permute.xlu0 %330
  %332 = vrot.lane.b32.xlu0 %v68, 34
  %v333 = vpop.permute.xlu0 %332
  %334 = vrot.lane.b32.xlu0 %v69, 34
  %v335 = vpop.permute.xlu0 %334
  %336 = vrot.lane.b32.xlu0 %v70, 34
  %v337 = vpop.permute.xlu0 %336
  %vm338 = vcmask 277504
  %v339 = vsel %vm338, %v327, %v329
  %v340 = vsel %vm338, %v329, %v331
  %v341 = vsel %vm338, %v333, %v335
  %v342 = vsel %vm338, %v335, %v337
  %v347 = vsel %vm324, %v339, 0.0
  %v348 = vsel %vm325, %v340, 0.0
  %v349 = vsel %vm324, %v341, 0.0
  %v350 = vsel %vm325, %v342, 0.0
  %351 = vst [vmem:[#allocation4 + $0x240] sm:$0xff] %v347
  %352 = vst [vmem:[#allocation4 + $0x248] sm:$0xff] %v348
  %353 = vst [vmem:[#allocation4 + $0x260] sm:$0xff] %v349
  %354 = vst [vmem:[#allocation4 + $0x268] sm:$0xff] %v350
  %355 = vrot.lane.b32.xlu0 %v64, 32
  %v356 = vpop.permute.xlu0 %355
  %357 = vrot.lane.b32.xlu0 %v65, 32
  %v358 = vpop.permute.xlu0 %357
  %359 = vrot.lane.b32.xlu0 %v66, 32
  %v360 = vpop.permute.xlu0 %359
  %361 = vrot.lane.b32.xlu0 %v68, 32
  %v362 = vpop.permute.xlu0 %361
  %363 = vrot.lane.b32.xlu0 %v69, 32
  %v364 = vpop.permute.xlu0 %363
  %365 = vrot.lane.b32.xlu0 %v70, 32
  %v366 = vpop.permute.xlu0 %365
  %vm367 = vcmask 261120
  %v368 = vsel %vm367, %v356, %v358
  %v369 = vsel %vm367, %v358, %v360
  %v370 = vsel %vm367, %v362, %v364
  %v371 = vsel %vm367, %v364, %v366
  %376 = vst [vmem:[#allocation4 + $0x280] sm:$0xff] %v368
  %377 = vst [vmem:[#allocation4 + $0x288] sm:$0xff] %v369
  %378 = vst [vmem:[#allocation4 + $0x2a0] sm:$0xff] %v370
  %379 = vst [vmem:[#allocation4 + $0x2a8] sm:$0xff] %v371
  %vm380 = vcmp.lt.s32.totalorder %v54, 14
  %vm381 = vcmp.lt.s32.totalorder %v55, 14
  %v382 = vsel %vm380, 1, 0
  %v383 = vsel %vm381, 1, 0
  %vm384 = vcmp.eq.s32.totalorder %v382, 1
  %vm385 = vcmp.eq.s32.totalorder %v383, 1
  %386 = vrot.lane.b32.xlu0 %v64, 30
  %v387 = vpop.permute.xlu0 %386
  %388 = vrot.lane.b32.xlu0 %v65, 30
  %v389 = vpop.permute.xlu0 %388
  %390 = vrot.lane.b32.xlu0 %v66, 30
  %v391 = vpop.permute.xlu0 %390
  %392 = vrot.lane.b32.xlu0 %v68, 30
  %v393 = vpop.permute.xlu0 %392
  %394 = vrot.lane.b32.xlu0 %v69, 30
  %v395 = vpop.permute.xlu0 %394
  %396 = vrot.lane.b32.xlu0 %v70, 30
  %v397 = vpop.permute.xlu0 %396
  %vm398 = vcmask 244736
  %v399 = vsel %vm398, %v387, %v389
  %v400 = vsel %vm398, %v389, %v391
  %v401 = vsel %vm398, %v393, %v395
  %v402 = vsel %vm398, %v395, %v397
  %v407 = vsel %vm384, %v399, 0.0
  %v408 = vsel %vm385, %v400, 0.0
  %v409 = vsel %vm384, %v401, 0.0
  %v410 = vsel %vm385, %v402, 0.0
  %411 = vst [vmem:[#allocation4 + $0x2c0] sm:$0xff] %v407
  %412 = vst [vmem:[#allocation4 + $0x2c8] sm:$0xff] %v408
  %413 = vst [vmem:[#allocation4 + $0x2e0] sm:$0xff] %v409
  %414 = vst [vmem:[#allocation4 + $0x2e8] sm:$0xff] %v410
  %415 = vrot.lane.b32.xlu0 %v64, 2
  %v416 = vpop.permute.xlu0 %415
  %417 = vrot.lane.b32.xlu0 %v65, 2
  %v418 = vpop.permute.xlu0 %417
  %419 = vrot.lane.b32.xlu0 %v66, 2
  %v420 = vpop.permute.xlu0 %419
  %421 = vrot.lane.b32.xlu0 %v68, 2
  %v422 = vpop.permute.xlu0 %421
  %423 = vrot.lane.b32.xlu0 %v69, 2
  %v424 = vpop.permute.xlu0 %423
  %425 = vrot.lane.b32.xlu0 %v70, 2
  %v426 = vpop.permute.xlu0 %425
  %vm427 = vcmask 15360
  %v428 = vsel %vm427, %v416, %v418
  %v429 = vsel %vm427, %v418, %v420
  %v430 = vsel %vm427, %v422, %v424
  %v431 = vsel %vm427, %v424, %v426
  %v436 = vsel %vm324, %v428, 0.0
  %v437 = vsel %vm325, %v429, 0.0
  %v438 = vsel %vm324, %v430, 0.0
  %v439 = vsel %vm325, %v431, 0.0
  %440 = vst [vmem:[#allocation4 + $0x300] sm:$0xff] %v436
  %441 = vst [vmem:[#allocation4 + $0x308] sm:$0xff] %v437
  %442 = vst [vmem:[#allocation4 + $0x320] sm:$0xff] %v438
  %443 = vst [vmem:[#allocation4 + $0x328] sm:$0xff] %v439
  %444 = vst [vmem:[#allocation4 + $0x340] sm:$0xff] %v65
  %445 = vst [vmem:[#allocation4 + $0x348] sm:$0xff] %v66
  %446 = vst [vmem:[#allocation4 + $0x360] sm:$0xff] %v69
  %447 = vst [vmem:[#allocation4 + $0x368] sm:$0xff] %v70
  %448 = vrot.lane.b32.xlu0 %v65, 126
  %v449 = vpop.permute.xlu0 %448
  %450 = vrot.lane.b32.xlu0 %v66, 126
  %v451 = vpop.permute.xlu0 %450
  %452 = vrot.lane.b32.xlu0 %v67, 126
  %v453 = vpop.permute.xlu0 %452
  %454 = vrot.lane.b32.xlu0 %v69, 126
  %v455 = vpop.permute.xlu0 %454
  %456 = vrot.lane.b32.xlu0 %v70, 126
  %v457 = vpop.permute.xlu0 %456
  %458 = vrot.lane.b32.xlu0 %v71, 126
  %v459 = vpop.permute.xlu0 %458
  %vm460 = vcmask 1031168
  %v461 = vsel %vm460, %v449, %v451
  %v462 = vsel %vm460, %v451, %v453
  %v463 = vsel %vm460, %v455, %v457
  %v464 = vsel %vm460, %v457, %v459
  %v469 = vsel %vm384, %v461, 0.0
  %v470 = vsel %vm385, %v462, 0.0
  %v471 = vsel %vm384, %v463, 0.0
  %v472 = vsel %vm385, %v464, 0.0
  %473 = vst [vmem:[#allocation4 + $0x380] sm:$0xff] %v469
  %474 = vst [vmem:[#allocation4 + $0x388] sm:$0xff] %v470
  %475 = vst [vmem:[#allocation4 + $0x3a0] sm:$0xff] %v471
  %476 = vst [vmem:[#allocation4 + $0x3a8] sm:$0xff] %v472
  %477 = vrot.lane.b32.xlu0 %v65, 98
  %v478 = vpop.permute.xlu0 %477
  %479 = vrot.lane.b32.xlu0 %v66, 98
  %v480 = vpop.permute.xlu0 %479
  %481 = vrot.lane.b32.xlu0 %v67, 98
  %v482 = vpop.permute.xlu0 %481
  %483 = vrot.lane.b32.xlu0 %v69, 98
  %v484 = vpop.permute.xlu0 %483
  %485 = vrot.lane.b32.xlu0 %v70, 98
  %v486 = vpop.permute.xlu0 %485
  %487 = vrot.lane.b32.xlu0 %v71, 98
  %v488 = vpop.permute.xlu0 %487
  %vm489 = vcmask 801792
  %v490 = vsel %vm489, %v478, %v480
  %v491 = vsel %vm489, %v480, %v482
  %v492 = vsel %vm489, %v484, %v486
  %v493 = vsel %vm489, %v486, %v488
  %v498 = vsel %vm324, %v490, 0.0
  %v499 = vsel %vm325, %v491, 0.0
  %v500 = vsel %vm324, %v492, 0.0
  %v501 = vsel %vm325, %v493, 0.0
  %502 = vst [vmem:[#allocation4 + $0x3c0] sm:$0xff] %v498
  %503 = vst [vmem:[#allocation4 + $0x3c8] sm:$0xff] %v499
  %504 = vst [vmem:[#allocation4 + $0x3e0] sm:$0xff] %v500
  %505 = vst [vmem:[#allocation4 + $0x3e8] sm:$0xff] %v501
  %506 = vrot.lane.b32.xlu0 %v65, 96
  %v507 = vpop.permute.xlu0 %506
  %508 = vrot.lane.b32.xlu0 %v66, 96
  %v509 = vpop.permute.xlu0 %508
  %510 = vrot.lane.b32.xlu0 %v67, 96
  %v511 = vpop.permute.xlu0 %510
  %512 = vrot.lane.b32.xlu0 %v69, 96
  %v513 = vpop.permute.xlu0 %512
  %514 = vrot.lane.b32.xlu0 %v70, 96
  %v515 = vpop.permute.xlu0 %514
  %516 = vrot.lane.b32.xlu0 %v71, 96
  %v517 = vpop.permute.xlu0 %516
  %vm518 = vcmask 785408
  %v519 = vsel %vm518, %v507, %v509
  %v520 = vsel %vm518, %v509, %v511
  %v521 = vsel %vm518, %v513, %v515
  %v522 = vsel %vm518, %v515, %v517
  %527 = vst [vmem:[#allocation4 + $0x400] sm:$0xff] %v519
  %528 = vst [vmem:[#allocation4 + $0x408] sm:$0xff] %v520
  %529 = vst [vmem:[#allocation4 + $0x420] sm:$0xff] %v521
  %530 = vst [vmem:[#allocation4 + $0x428] sm:$0xff] %v522
  %531 = vrot.lane.b32.xlu0 %v65, 94
  %v532 = vpop.permute.xlu0 %531
  %533 = vrot.lane.b32.xlu0 %v66, 94
  %v534 = vpop.permute.xlu0 %533
  %535 = vrot.lane.b32.xlu0 %v67, 94
  %v536 = vpop.permute.xlu0 %535
  %537 = vrot.lane.b32.xlu0 %v69, 94
  %v538 = vpop.permute.xlu0 %537
  %539 = vrot.lane.b32.xlu0 %v70, 94
  %v540 = vpop.permute.xlu0 %539
  %541 = vrot.lane.b32.xlu0 %v71, 94
  %v542 = vpop.permute.xlu0 %541
  %vm543 = vcmask 769024
  %v544 = vsel %vm543, %v532, %v534
  %v545 = vsel %vm543, %v534, %v536
  %v546 = vsel %vm543, %v538, %v540
  %v547 = vsel %vm543, %v540, %v542
  %v552 = vsel %vm384, %v544, 0.0
  %v553 = vsel %vm385, %v545, 0.0
  %v554 = vsel %vm384, %v546, 0.0
  %v555 = vsel %vm385, %v547, 0.0
  %556 = vst [vmem:[#allocation4 + $0x440] sm:$0xff] %v552
  %557 = vst [vmem:[#allocation4 + $0x448] sm:$0xff] %v553
  %558 = vst [vmem:[#allocation4 + $0x460] sm:$0xff] %v554
  %559 = vst [vmem:[#allocation4 + $0x468] sm:$0xff] %v555
  %vm560 = vcmp.ge.s32.totalorder %v54, 3
  %vm561 = vcmp.ge.s32.totalorder %v55, 3
  %v562 = vsel %vm560, 1, 0
  %v563 = vsel %vm561, 1, 0
  %vm564 = vcmp.eq.s32.totalorder %v562, 1
  %vm565 = vcmp.eq.s32.totalorder %v563, 1
  %566 = vrot.lane.b32.xlu0 %v64, 51
  %v567 = vpop.permute.xlu0 %566
  %568 = vrot.lane.b32.xlu0 %v65, 51
  %v569 = vpop.permute.xlu0 %568
  %570 = vrot.lane.b32.xlu0 %v66, 51
  %v571 = vpop.permute.xlu0 %570
  %572 = vrot.lane.b32.xlu0 %v68, 51
  %v573 = vpop.permute.xlu0 %572
  %574 = vrot.lane.b32.xlu0 %v69, 51
  %v575 = vpop.permute.xlu0 %574
  %576 = vrot.lane.b32.xlu0 %v70, 51
  %v577 = vpop.permute.xlu0 %576
  %vm578 = vcmask 416768
  %v579 = vsel %vm578, %v567, %v569
  %v580 = vsel %vm578, %v569, %v571
  %v581 = vsel %vm578, %v573, %v575
  %v582 = vsel %vm578, %v575, %v577
  %v587 = vsel %vm564, %v579, 0.0
  %v588 = vsel %vm565, %v580, 0.0
  %v589 = vsel %vm564, %v581, 0.0
  %v590 = vsel %vm565, %v582, 0.0
  %591 = vst [vmem:[#allocation4 + $0x480] sm:$0xff] %v587
  %592 = vst [vmem:[#allocation4 + $0x488] sm:$0xff] %v588
  %593 = vst [vmem:[#allocation4 + $0x4a0] sm:$0xff] %v589
  %594 = vst [vmem:[#allocation4 + $0x4a8] sm:$0xff] %v590
  %595 = vrot.lane.b32.xlu0 %v64, 48
  %v596 = vpop.permute.xlu0 %595
  %597 = vrot.lane.b32.xlu0 %v65, 48
  %v598 = vpop.permute.xlu0 %597
  %599 = vrot.lane.b32.xlu0 %v66, 48
  %v600 = vpop.permute.xlu0 %599
  %601 = vrot.lane.b32.xlu0 %v68, 48
  %v602 = vpop.permute.xlu0 %601
  %603 = vrot.lane.b32.xlu0 %v69, 48
  %v604 = vpop.permute.xlu0 %603
  %605 = vrot.lane.b32.xlu0 %v70, 48
  %v606 = vpop.permute.xlu0 %605
  %vm607 = vcmask 392192
  %v608 = vsel %vm607, %v596, %v598
  %v609 = vsel %vm607, %v598, %v600
  %v610 = vsel %vm607, %v602, %v604
  %v611 = vsel %vm607, %v604, %v606
  %616 = vst [vmem:[#allocation4 + $0x4c0] sm:$0xff] %v608
  %617 = vst [vmem:[#allocation4 + $0x4c8] sm:$0xff] %v609
  %618 = vst [vmem:[#allocation4 + $0x4e0] sm:$0xff] %v610
  %619 = vst [vmem:[#allocation4 + $0x4e8] sm:$0xff] %v611
  %vm620 = vcmp.lt.s32.totalorder %v54, 13
  %vm621 = vcmp.lt.s32.totalorder %v55, 13
  %v622 = vsel %vm620, 1, 0
  %v623 = vsel %vm621, 1, 0
  %vm624 = vcmp.eq.s32.totalorder %v622, 1
  %vm625 = vcmp.eq.s32.totalorder %v623, 1
  %626 = vrot.lane.b32.xlu0 %v64, 45
  %v627 = vpop.permute.xlu0 %626
  %628 = vrot.lane.b32.xlu0 %v65, 45
  %v629 = vpop.permute.xlu0 %628
  %630 = vrot.lane.b32.xlu0 %v66, 45
  %v631 = vpop.permute.xlu0 %630
  %632 = vrot.lane.b32.xlu0 %v68, 45
  %v633 = vpop.permute.xlu0 %632
  %634 = vrot.lane.b32.xlu0 %v69, 45
  %v635 = vpop.permute.xlu0 %634
  %636 = vrot.lane.b32.xlu0 %v70, 45
  %v637 = vpop.permute.xlu0 %636
  %vm638 = vcmask 367616
  %v639 = vsel %vm638, %v627, %v629
  %v640 = vsel %vm638, %v629, %v631
  %v641 = vsel %vm638, %v633, %v635
  %v642 = vsel %vm638, %v635, %v637
  %v647 = vsel %vm624, %v639, 0.0
  %v648 = vsel %vm625, %v640, 0.0
  %v649 = vsel %vm624, %v641, 0.0
  %v650 = vsel %vm625, %v642, 0.0
  %651 = vst [vmem:[#allocation4 + $0x500] sm:$0xff] %v647
  %652 = vst [vmem:[#allocation4 + $0x508] sm:$0xff] %v648
  %653 = vst [vmem:[#allocation4 + $0x520] sm:$0xff] %v649
  %654 = vst [vmem:[#allocation4 + $0x528] sm:$0xff] %v650
  %655 = vrot.lane.b32.xlu0 %v64, 3
  %v656 = vpop.permute.xlu0 %655
  %657 = vrot.lane.b32.xlu0 %v65, 3
  %v658 = vpop.permute.xlu0 %657
  %659 = vrot.lane.b32.xlu0 %v66, 3
  %v660 = vpop.permute.xlu0 %659
  %661 = vrot.lane.b32.xlu0 %v68, 3
  %v662 = vpop.permute.xlu0 %661
  %663 = vrot.lane.b32.xlu0 %v69, 3
  %v664 = vpop.permute.xlu0 %663
  %665 = vrot.lane.b32.xlu0 %v70, 3
  %v666 = vpop.permute.xlu0 %665
  %vm667 = vcmask 23552
  %v668 = vsel %vm667, %v656, %v658
  %v669 = vsel %vm667, %v658, %v660
  %v670 = vsel %vm667, %v662, %v664
  %v671 = vsel %vm667, %v664, %v666
  %v676 = vsel %vm564, %v668, 0.0
  %v677 = vsel %vm565, %v669, 0.0
  %v678 = vsel %vm564, %v670, 0.0
  %v679 = vsel %vm565, %v671, 0.0
  %680 = vst [vmem:[#allocation4 + $0x540] sm:$0xff] %v676
  %681 = vst [vmem:[#allocation4 + $0x548] sm:$0xff] %v677
  %682 = vst [vmem:[#allocation4 + $0x560] sm:$0xff] %v678
  %683 = vst [vmem:[#allocation4 + $0x568] sm:$0xff] %v679
  %684 = vst [vmem:[#allocation4 + $0x580] sm:$0xff] %v65
  %685 = vst [vmem:[#allocation4 + $0x588] sm:$0xff] %v66
  %686 = vst [vmem:[#allocation4 + $0x5a0] sm:$0xff] %v69
  %687 = vst [vmem:[#allocation4 + $0x5a8] sm:$0xff] %v70
  %688 = vrot.lane.b32.xlu0 %v65, 125
  %v689 = vpop.permute.xlu0 %688
  %690 = vrot.lane.b32.xlu0 %v66, 125
  %v691 = vpop.permute.xlu0 %690
  %692 = vrot.lane.b32.xlu0 %v67, 125
  %v693 = vpop.permute.xlu0 %692
  %694 = vrot.lane.b32.xlu0 %v69, 125
  %v695 = vpop.permute.xlu0 %694
  %696 = vrot.lane.b32.xlu0 %v70, 125
  %v697 = vpop.permute.xlu0 %696
  %698 = vrot.lane.b32.xlu0 %v71, 125
  %v699 = vpop.permute.xlu0 %698
  %vm700 = vcmask 1022976
  %v701 = vsel %vm700, %v689, %v691
  %v702 = vsel %vm700, %v691, %v693
  %v703 = vsel %vm700, %v695, %v697
  %v704 = vsel %vm700, %v697, %v699
  %v709 = vsel %vm624, %v701, 0.0
  %v710 = vsel %vm625, %v702, 0.0
  %v711 = vsel %vm624, %v703, 0.0
  %v712 = vsel %vm625, %v704, 0.0
  %713 = vst [vmem:[#allocation4 + $0x5c0] sm:$0xff] %v709
  %714 = vst [vmem:[#allocation4 + $0x5c8] sm:$0xff] %v710
  %715 = vst [vmem:[#allocation4 + $0x5e0] sm:$0xff] %v711
  %716 = vst [vmem:[#allocation4 + $0x5e8] sm:$0xff] %v712
  %717 = vrot.lane.b32.xlu0 %v65, 83
  %v718 = vpop.permute.xlu0 %717
  %719 = vrot.lane.b32.xlu0 %v66, 83
  %v720 = vpop.permute.xlu0 %719
  %721 = vrot.lane.b32.xlu0 %v67, 83
  %v722 = vpop.permute.xlu0 %721
  %723 = vrot.lane.b32.xlu0 %v69, 83
  %v724 = vpop.permute.xlu0 %723
  %725 = vrot.lane.b32.xlu0 %v70, 83
  %v726 = vpop.permute.xlu0 %725
  %727 = vrot.lane.b32.xlu0 %v71, 83
  %v728 = vpop.permute.xlu0 %727
  %vm729 = vcmask 678912
  %v730 = vsel %vm729, %v718, %v720
  %v731 = vsel %vm729, %v720, %v722
  %v732 = vsel %vm729, %v724, %v726
  %v733 = vsel %vm729, %v726, %v728
  %v738 = vsel %vm564, %v730, 0.0
  %v739 = vsel %vm565, %v731, 0.0
  %v740 = vsel %vm564, %v732, 0.0
  %v741 = vsel %vm565, %v733, 0.0
  %742 = vst [vmem:[#allocation4 + $0x600] sm:$0xff] %v738
  %743 = vst [vmem:[#allocation4 + $0x608] sm:$0xff] %v739
  %744 = vst [vmem:[#allocation4 + $0x620] sm:$0xff] %v740
  %745 = vst [vmem:[#allocation4 + $0x628] sm:$0xff] %v741
  %746 = vrot.lane.b32.xlu0 %v65, 80
  %v747 = vpop.permute.xlu0 %746
  %748 = vrot.lane.b32.xlu0 %v66, 80
  %v749 = vpop.permute.xlu0 %748
  %750 = vrot.lane.b32.xlu0 %v67, 80
  %v751 = vpop.permute.xlu0 %750
  %752 = vrot.lane.b32.xlu0 %v69, 80
  %v753 = vpop.permute.xlu0 %752
  %754 = vrot.lane.b32.xlu0 %v70, 80
  %v755 = vpop.permute.xlu0 %754
  %756 = vrot.lane.b32.xlu0 %v71, 80
  %v757 = vpop.permute.xlu0 %756
  %vm758 = vcmask 654336
  %v759 = vsel %vm758, %v747, %v749
  %v760 = vsel %vm758, %v749, %v751
  %v761 = vsel %vm758, %v753, %v755
  %v762 = vsel %vm758, %v755, %v757
  %767 = vst [vmem:[#allocation4 + $0x640] sm:$0xff] %v759
  %768 = vst [vmem:[#allocation4 + $0x648] sm:$0xff] %v760
  %769 = vst [vmem:[#allocation4 + $0x660] sm:$0xff] %v761
  %770 = vst [vmem:[#allocation4 + $0x668] sm:$0xff] %v762
  %771 = vrot.lane.b32.xlu0 %v65, 77
  %v772 = vpop.permute.xlu0 %771
  %773 = vrot.lane.b32.xlu0 %v66, 77
  %v774 = vpop.permute.xlu0 %773
  %775 = vrot.lane.b32.xlu0 %v67, 77
  %v776 = vpop.permute.xlu0 %775
  %777 = vrot.lane.b32.xlu0 %v69, 77
  %v778 = vpop.permute.xlu0 %777
  %779 = vrot.lane.b32.xlu0 %v70, 77
  %v780 = vpop.permute.xlu0 %779
  %781 = vrot.lane.b32.xlu0 %v71, 77
  %v782 = vpop.permute.xlu0 %781
  %vm783 = vcmask 629760
  %v784 = vsel %vm783, %v772, %v774
  %v785 = vsel %vm783, %v774, %v776
  %v786 = vsel %vm783, %v778, %v780
  %v787 = vsel %vm783, %v780, %v782
  %v792 = vsel %vm624, %v784, 0.0
  %v793 = vsel %vm625, %v785, 0.0
  %v794 = vsel %vm624, %v786, 0.0
  %v795 = vsel %vm625, %v787, 0.0
  %796 = vst [vmem:[#allocation4 + $0x680] sm:$0xff] %v792
  %797 = vst [vmem:[#allocation4 + $0x688] sm:$0xff] %v793
  %798 = vst [vmem:[#allocation4 + $0x6a0] sm:$0xff] %v794
  %799 = vst [vmem:[#allocation4 + $0x6a8] sm:$0xff] %v795
  %vm800 = vcmp.ge.s32.totalorder %v54, 4
  %vm801 = vcmp.ge.s32.totalorder %v55, 4
  %v802 = vsel %vm800, 1, 0
  %v803 = vsel %vm801, 1, 0
  %vm804 = vcmp.eq.s32.totalorder %v802, 1
  %vm805 = vcmp.eq.s32.totalorder %v803, 1
  %806 = vrot.lane.b32.xlu0 %v64, 68
  %v807 = vpop.permute.xlu0 %806
  %808 = vrot.lane.b32.xlu0 %v65, 68
  %v809 = vpop.permute.xlu0 %808
  %810 = vrot.lane.b32.xlu0 %v66, 68
  %v811 = vpop.permute.xlu0 %810
  %812 = vrot.lane.b32.xlu0 %v68, 68
  %v813 = vpop.permute.xlu0 %812
  %814 = vrot.lane.b32.xlu0 %v69, 68
  %v815 = vpop.permute.xlu0 %814
  %816 = vrot.lane.b32.xlu0 %v70, 68
  %v817 = vpop.permute.xlu0 %816
  %vm818 = vcmask 556032
  %v819 = vsel %vm818, %v807, %v809
  %v820 = vsel %vm818, %v809, %v811
  %v821 = vsel %vm818, %v813, %v815
  %v822 = vsel %vm818, %v815, %v817
  %v827 = vsel %vm804, %v819, 0.0
  %v828 = vsel %vm805, %v820, 0.0
  %v829 = vsel %vm804, %v821, 0.0
  %v830 = vsel %vm805, %v822, 0.0
  %831 = vst [vmem:[#allocation4 + $0x6c0] sm:$0xff] %v827
  %832 = vst [vmem:[#allocation4 + $0x6c8] sm:$0xff] %v828
  %833 = vst [vmem:[#allocation4 + $0x6e0] sm:$0xff] %v829
  %834 = vst [vmem:[#allocation4 + $0x6e8] sm:$0xff] %v830
  %835 = vrot.lane.b32.xlu0 %v64, 64
  %v836 = vpop.permute.xlu0 %835
  %837 = vrot.lane.b32.xlu0 %v65, 64
  %v838 = vpop.permute.xlu0 %837
  %839 = vrot.lane.b32.xlu0 %v66, 64
  %v840 = vpop.permute.xlu0 %839
  %841 = vrot.lane.b32.xlu0 %v68, 64
  %v842 = vpop.permute.xlu0 %841
  %843 = vrot.lane.b32.xlu0 %v69, 64
  %v844 = vpop.permute.xlu0 %843
  %845 = vrot.lane.b32.xlu0 %v70, 64
  %v846 = vpop.permute.xlu0 %845
  %vm847 = vcmask 523264
  %v848 = vsel %vm847, %v836, %v838
  %v849 = vsel %vm847, %v838, %v840
  %v850 = vsel %vm847, %v842, %v844
  %v851 = vsel %vm847, %v844, %v846
  %856 = vst [vmem:[#allocation4 + $0x700] sm:$0xff] %v848
  %857 = vst [vmem:[#allocation4 + $0x708] sm:$0xff] %v849
  %858 = vst [vmem:[#allocation4 + $0x720] sm:$0xff] %v850
  %859 = vst [vmem:[#allocation4 + $0x728] sm:$0xff] %v851
  %vm860 = vcmp.lt.s32.totalorder %v54, 12
  %vm861 = vcmp.lt.s32.totalorder %v55, 12
  %v862 = vsel %vm860, 1, 0
  %v863 = vsel %vm861, 1, 0
  %vm864 = vcmp.eq.s32.totalorder %v862, 1
  %vm865 = vcmp.eq.s32.totalorder %v863, 1
  %866 = vrot.lane.b32.xlu0 %v64, 60
  %v867 = vpop.permute.xlu0 %866
  %868 = vrot.lane.b32.xlu0 %v65, 60
  %v869 = vpop.permute.xlu0 %868
  %870 = vrot.lane.b32.xlu0 %v66, 60
  %v871 = vpop.permute.xlu0 %870
  %872 = vrot.lane.b32.xlu0 %v68, 60
  %v873 = vpop.permute.xlu0 %872
  %874 = vrot.lane.b32.xlu0 %v69, 60
  %v875 = vpop.permute.xlu0 %874
  %876 = vrot.lane.b32.xlu0 %v70, 60
  %v877 = vpop.permute.xlu0 %876
  %vm878 = vcmask 490496
  %v879 = vsel %vm878, %v867, %v869
  %v880 = vsel %vm878, %v869, %v871
  %v881 = vsel %vm878, %v873, %v875
  %v882 = vsel %vm878, %v875, %v877
  %v887 = vsel %vm864, %v879, 0.0
  %v888 = vsel %vm865, %v880, 0.0
  %v889 = vsel %vm864, %v881, 0.0
  %v890 = vsel %vm865, %v882, 0.0
  %891 = vst [vmem:[#allocation4 + $0x740] sm:$0xff] %v887
  %892 = vst [vmem:[#allocation4 + $0x748] sm:$0xff] %v888
  %893 = vst [vmem:[#allocation4 + $0x760] sm:$0xff] %v889
  %894 = vst [vmem:[#allocation4 + $0x768] sm:$0xff] %v890
  %895 = vrot.lane.b32.xlu0 %v64, 4
  %v896 = vpop.permute.xlu0 %895
  %897 = vrot.lane.b32.xlu0 %v65, 4
  %v898 = vpop.permute.xlu0 %897
  %899 = vrot.lane.b32.xlu0 %v66, 4
  %v900 = vpop.permute.xlu0 %899
  %901 = vrot.lane.b32.xlu0 %v68, 4
  %v902 = vpop.permute.xlu0 %901
  %903 = vrot.lane.b32.xlu0 %v69, 4
  %v904 = vpop.permute.xlu0 %903
  %905 = vrot.lane.b32.xlu0 %v70, 4
  %v906 = vpop.permute.xlu0 %905
  %vm907 = vcmask 31744
  %v908 = vsel %vm907, %v896, %v898
  %v909 = vsel %vm907, %v898, %v900
  %v910 = vsel %vm907, %v902, %v904
  %v911 = vsel %vm907, %v904, %v906
  %v916 = vsel %vm804, %v908, 0.0
  %v917 = vsel %vm805, %v909, 0.0
  %v918 = vsel %vm804, %v910, 0.0
  %v919 = vsel %vm805, %v911, 0.0
  %920 = vst [vmem:[#allocation4 + $0x780] sm:$0xff] %v916
  %921 = vst [vmem:[#allocation4 + $0x788] sm:$0xff] %v917
  %922 = vst [vmem:[#allocation4 + $0x7a0] sm:$0xff] %v918
  %923 = vst [vmem:[#allocation4 + $0x7a8] sm:$0xff] %v919
  %924 = vst [vmem:[#allocation4 + $0x7c0] sm:$0xff] %v65
  %925 = vst [vmem:[#allocation4 + $0x7c8] sm:$0xff] %v66
  %926 = vst [vmem:[#allocation4 + $0x7e0] sm:$0xff] %v69
  %927 = vst [vmem:[#allocation4 + $0x7e8] sm:$0xff] %v70
  %928 = vrot.lane.b32.xlu0 %v65, 124
  %v929 = vpop.permute.xlu0 %928
  %930 = vrot.lane.b32.xlu0 %v66, 124
  %v931 = vpop.permute.xlu0 %930
  %932 = vrot.lane.b32.xlu0 %v67, 124
  %v933 = vpop.permute.xlu0 %932
  %934 = vrot.lane.b32.xlu0 %v69, 124
  %v935 = vpop.permute.xlu0 %934
  %936 = vrot.lane.b32.xlu0 %v70, 124
  %v937 = vpop.permute.xlu0 %936
  %938 = vrot.lane.b32.xlu0 %v71, 124
  %v939 = vpop.permute.xlu0 %938
  %vm940 = vcmask 1014784
  %v941 = vsel %vm940, %v929, %v931
  %v942 = vsel %vm940, %v931, %v933
  %v943 = vsel %vm940, %v935, %v937
  %v944 = vsel %vm940, %v937, %v939
  %v949 = vsel %vm864, %v941, 0.0
  %v950 = vsel %vm865, %v942, 0.0
  %v951 = vsel %vm864, %v943, 0.0
  %v952 = vsel %vm865, %v944, 0.0
  %953 = vst [vmem:[#allocation4 + $0x800] sm:$0xff] %v949
  %954 = vst [vmem:[#allocation4 + $0x808] sm:$0xff] %v950
  %955 = vst [vmem:[#allocation4 + $0x820] sm:$0xff] %v951
  %956 = vst [vmem:[#allocation4 + $0x828] sm:$0xff] %v952
  %957 = vrot.lane.b32.xlu0 %v67, 68
  %v958 = vpop.permute.xlu0 %957
  %959 = vrot.lane.b32.xlu0 %v71, 68
  %v960 = vpop.permute.xlu0 %959
  %v961 = vsel %vm818, %v811, %v958
  %v962 = vsel %vm818, %v817, %v960
  %v965 = vsel %vm804, %v820, 0.0
  %v966 = vsel %vm805, %v961, 0.0
  %v967 = vsel %vm804, %v822, 0.0
  %v968 = vsel %vm805, %v962, 0.0
  %969 = vst [vmem:[#allocation4 + $0x840] sm:$0xff] %v965
  %970 = vst [vmem:[#allocation4 + $0x848] sm:$0xff] %v966
  %971 = vst [vmem:[#allocation4 + $0x860] sm:$0xff] %v967
  %972 = vst [vmem:[#allocation4 + $0x868] sm:$0xff] %v968
  %973 = vrot.lane.b32.xlu0 %v67, 64
  %v974 = vpop.permute.xlu0 %973
  %975 = vrot.lane.b32.xlu0 %v71, 64
  %v976 = vpop.permute.xlu0 %975
  %v977 = vsel %vm847, %v840, %v974
  %v978 = vsel %vm847, %v846, %v976
  %981 = vst [vmem:[#allocation4 + $0x880] sm:$0xff] %v849
  %982 = vst [vmem:[#allocation4 + $0x888] sm:$0xff] %v977
  %983 = vst [vmem:[#allocation4 + $0x8a0] sm:$0xff] %v851
  %984 = vst [vmem:[#allocation4 + $0x8a8] sm:$0xff] %v978
  %985 = vrot.lane.b32.xlu0 %v67, 60
  %v986 = vpop.permute.xlu0 %985
  %987 = vrot.lane.b32.xlu0 %v71, 60
  %v988 = vpop.permute.xlu0 %987
  %v989 = vsel %vm878, %v871, %v986
  %v990 = vsel %vm878, %v877, %v988
  %v993 = vsel %vm864, %v880, 0.0
  %v994 = vsel %vm865, %v989, 0.0
  %v995 = vsel %vm864, %v882, 0.0
  %v996 = vsel %vm865, %v990, 0.0
  %997 = vst [vmem:[#allocation4 + $0x8c0] sm:$0xff] %v993
  %998 = vst [vmem:[#allocation4 + $0x8c8] sm:$0xff] %v994
  %999 = vst [vmem:[#allocation4 + $0x8e0] sm:$0xff] %v995
  %1000 = vst [vmem:[#allocation4 + $0x8e8] sm:$0xff] %v996
  %s1001 = scalar_lea.vmem %s0, 16
  %v1002 = vld [vmem:[%s1001] sm:$0xff]
  %v1003 = vld [vmem:[%s1001 + $0x8] sm:$0xff]
  %1004 = vst [vmem:[#allocation2 + $0x8] sm:$0xff] %v1002
  %1005 = vst [vmem:[#allocation2 + $0x10] sm:$0xff] %v1003
  %s1006 = scalar_lea.vmem %s1, 16
  %v1007 = vld [vmem:[%s1006] sm:$0xff]
  %v1008 = vld [vmem:[%s1006 + $0x8] sm:$0xff]
  %1009 = vst [vmem:[#allocation2 + $0x28] sm:$0xff] %v1007
  %1010 = vst [vmem:[#allocation2 + $0x30] sm:$0xff] %v1008
  %v1011 = vld [vmem:[#allocation2] sm:$0xff]
  %v1012 = vld [vmem:[#allocation2 + $0x8] sm:$0xff]
  %v1013 = vld [vmem:[#allocation2 + $0x10] sm:$0xff]
  %v1014 = vld [vmem:[#allocation2 + $0x18] sm:$0xff]
  %v1015 = vld [vmem:[#allocation2 + $0x20] sm:$0xff]
  %v1016 = vld [vmem:[#allocation2 + $0x28] sm:$0xff]
  %v1017 = vld [vmem:[#allocation2 + $0x30] sm:$0xff]
  %v1018 = vld [vmem:[#allocation2 + $0x38] sm:$0xff]
  %1025 = vrot.lane.b32.xlu0 %v1011, 17
  %v1026 = vpop.permute.xlu0 %1025
  %1027 = vrot.lane.b32.xlu0 %v1012, 17
  %v1028 = vpop.permute.xlu0 %1027
  %1029 = vrot.lane.b32.xlu0 %v1013, 17
  %v1030 = vpop.permute.xlu0 %1029
  %1031 = vrot.lane.b32.xlu0 %v1015, 17
  %v1032 = vpop.permute.xlu0 %1031
  %1033 = vrot.lane.b32.xlu0 %v1016, 17
  %v1034 = vpop.permute.xlu0 %1033
  %1035 = vrot.lane.b32.xlu0 %v1017, 17
  %v1036 = vpop.permute.xlu0 %1035
  %v1037 = vsel %vm96, %v1026, %v1028
  %v1038 = vsel %vm96, %v1028, %v1030
  %v1039 = vsel %vm96, %v1032, %v1034
  %v1040 = vsel %vm96, %v1034, %v1036
  %v1045 = vsel %vm76, %v1037, 0.0
  %v1046 = vsel %vm77, %v1038, 0.0
  %v1047 = vsel %vm76, %v1039, 0.0
  %v1048 = vsel %vm77, %v1040, 0.0
  %1049 = vst [vmem:[#allocation4 + $0x10] sm:$0xff] %v1045
  %1050 = vst [vmem:[#allocation4 + $0x18] sm:$0xff] %v1046
  %1051 = vst [vmem:[#allocation4 + $0x30] sm:$0xff] %v1047
  %1052 = vst [vmem:[#allocation4 + $0x38] sm:$0xff] %v1048
  %1053 = vrot.lane.b32.xlu0 %v1011, 16
  %v1054 = vpop.permute.xlu0 %1053
  %1055 = vrot.lane.b32.xlu0 %v1012, 16
  %v1056 = vpop.permute.xlu0 %1055
  %1057 = vrot.lane.b32.xlu0 %v1013, 16
  %v1058 = vpop.permute.xlu0 %1057
  %1059 = vrot.lane.b32.xlu0 %v1015, 16
  %v1060 = vpop.permute.xlu0 %1059
  %1061 = vrot.lane.b32.xlu0 %v1016, 16
  %v1062 = vpop.permute.xlu0 %1061
  %1063 = vrot.lane.b32.xlu0 %v1017, 16
  %v1064 = vpop.permute.xlu0 %1063
  %v1065 = vsel %vm125, %v1054, %v1056
  %v1066 = vsel %vm125, %v1056, %v1058
  %v1067 = vsel %vm125, %v1060, %v1062
  %v1068 = vsel %vm125, %v1062, %v1064
  %1073 = vst [vmem:[#allocation4 + $0x50] sm:$0xff] %v1065
  %1074 = vst [vmem:[#allocation4 + $0x58] sm:$0xff] %v1066
  %1075 = vst [vmem:[#allocation4 + $0x70] sm:$0xff] %v1067
  %1076 = vst [vmem:[#allocation4 + $0x78] sm:$0xff] %v1068
  %1077 = vrot.lane.b32.xlu0 %v1011, 15
  %v1078 = vpop.permute.xlu0 %1077
  %1079 = vrot.lane.b32.xlu0 %v1012, 15
  %v1080 = vpop.permute.xlu0 %1079
  %1081 = vrot.lane.b32.xlu0 %v1013, 15
  %v1082 = vpop.permute.xlu0 %1081
  %1083 = vrot.lane.b32.xlu0 %v1015, 15
  %v1084 = vpop.permute.xlu0 %1083
  %1085 = vrot.lane.b32.xlu0 %v1016, 15
  %v1086 = vpop.permute.xlu0 %1085
  %1087 = vrot.lane.b32.xlu0 %v1017, 15
  %v1088 = vpop.permute.xlu0 %1087
  %v1089 = vsel %vm156, %v1078, %v1080
  %v1090 = vsel %vm156, %v1080, %v1082
  %v1091 = vsel %vm156, %v1084, %v1086
  %v1092 = vsel %vm156, %v1086, %v1088
  %v1097 = vsel %vm142, %v1089, 0.0
  %v1098 = vsel %vm143, %v1090, 0.0
  %v1099 = vsel %vm142, %v1091, 0.0
  %v1100 = vsel %vm143, %v1092, 0.0
  %1101 = vst [vmem:[#allocation4 + $0x90] sm:$0xff] %v1097
  %1102 = vst [vmem:[#allocation4 + $0x98] sm:$0xff] %v1098
  %1103 = vst [vmem:[#allocation4 + $0xb0] sm:$0xff] %v1099
  %1104 = vst [vmem:[#allocation4 + $0xb8] sm:$0xff] %v1100
  %1105 = vrot.lane.b32.xlu0 %v1011, 1
  %v1106 = vpop.permute.xlu0 %1105
  %1107 = vrot.lane.b32.xlu0 %v1012, 1
  %v1108 = vpop.permute.xlu0 %1107
  %1109 = vrot.lane.b32.xlu0 %v1013, 1
  %v1110 = vpop.permute.xlu0 %1109
  %1111 = vrot.lane.b32.xlu0 %v1015, 1
  %v1112 = vpop.permute.xlu0 %1111
  %1113 = vrot.lane.b32.xlu0 %v1016, 1
  %v1114 = vpop.permute.xlu0 %1113
  %1115 = vrot.lane.b32.xlu0 %v1017, 1
  %v1116 = vpop.permute.xlu0 %1115
  %v1117 = vsel %vm185, %v1106, %v1108
  %v1118 = vsel %vm185, %v1108, %v1110
  %v1119 = vsel %vm185, %v1112, %v1114
  %v1120 = vsel %vm185, %v1114, %v1116
  %v1125 = vsel %vm76, %v1117, 0.0
  %v1126 = vsel %vm77, %v1118, 0.0
  %v1127 = vsel %vm76, %v1119, 0.0
  %v1128 = vsel %vm77, %v1120, 0.0
  %1129 = vst [vmem:[#allocation4 + $0xd0] sm:$0xff] %v1125
  %1130 = vst [vmem:[#allocation4 + $0xd8] sm:$0xff] %v1126
  %1131 = vst [vmem:[#allocation4 + $0xf0] sm:$0xff] %v1127
  %1132 = vst [vmem:[#allocation4 + $0xf8] sm:$0xff] %v1128
  %1133 = vst [vmem:[#allocation4 + $0x110] sm:$0xff] %v1012
  %1134 = vst [vmem:[#allocation4 + $0x118] sm:$0xff] %v1013
  %1135 = vst [vmem:[#allocation4 + $0x130] sm:$0xff] %v1016
  %1136 = vst [vmem:[#allocation4 + $0x138] sm:$0xff] %v1017
  %1139 = vrot.lane.b32.xlu0 %v1012, 127
  %v1140 = vpop.permute.xlu0 %1139
  %1141 = vrot.lane.b32.xlu0 %v1013, 127
  %v1142 = vpop.permute.xlu0 %1141
  %1143 = vrot.lane.b32.xlu0 %v1014, 127
  %v1144 = vpop.permute.xlu0 %1143
  %1145 = vrot.lane.b32.xlu0 %v1016, 127
  %v1146 = vpop.permute.xlu0 %1145
  %1147 = vrot.lane.b32.xlu0 %v1017, 127
  %v1148 = vpop.permute.xlu0 %1147
  %1149 = vrot.lane.b32.xlu0 %v1018, 127
  %v1150 = vpop.permute.xlu0 %1149
  %v1151 = vsel %vm220, %v1140, %v1142
  %v1152 = vsel %vm220, %v1142, %v1144
  %v1153 = vsel %vm220, %v1146, %v1148
  %v1154 = vsel %vm220, %v1148, %v1150
  %v1159 = vsel %vm142, %v1151, 0.0
  %v1160 = vsel %vm143, %v1152, 0.0
  %v1161 = vsel %vm142, %v1153, 0.0
  %v1162 = vsel %vm143, %v1154, 0.0
  %1163 = vst [vmem:[#allocation4 + $0x150] sm:$0xff] %v1159
  %1164 = vst [vmem:[#allocation4 + $0x158] sm:$0xff] %v1160
  %1165 = vst [vmem:[#allocation4 + $0x170] sm:$0xff] %v1161
  %1166 = vst [vmem:[#allocation4 + $0x178] sm:$0xff] %v1162
  %1167 = vrot.lane.b32.xlu0 %v1012, 113
  %v1168 = vpop.permute.xlu0 %1167
  %1169 = vrot.lane.b32.xlu0 %v1013, 113
  %v1170 = vpop.permute.xlu0 %1169
  %1171 = vrot.lane.b32.xlu0 %v1014, 113
  %v1172 = vpop.permute.xlu0 %1171
  %1173 = vrot.lane.b32.xlu0 %v1016, 113
  %v1174 = vpop.permute.xlu0 %1173
  %1175 = vrot.lane.b32.xlu0 %v1017, 113
  %v1176 = vpop.permute.xlu0 %1175
  %1177 = vrot.lane.b32.xlu0 %v1018, 113
  %v1178 = vpop.permute.xlu0 %1177
  %v1179 = vsel %vm249, %v1168, %v1170
  %v1180 = vsel %vm249, %v1170, %v1172
  %v1181 = vsel %vm249, %v1174, %v1176
  %v1182 = vsel %vm249, %v1176, %v1178
  %v1187 = vsel %vm76, %v1179, 0.0
  %v1188 = vsel %vm77, %v1180, 0.0
  %v1189 = vsel %vm76, %v1181, 0.0
  %v1190 = vsel %vm77, %v1182, 0.0
  %1191 = vst [vmem:[#allocation4 + $0x190] sm:$0xff] %v1187
  %1192 = vst [vmem:[#allocation4 + $0x198] sm:$0xff] %v1188
  %1193 = vst [vmem:[#allocation4 + $0x1b0] sm:$0xff] %v1189
  %1194 = vst [vmem:[#allocation4 + $0x1b8] sm:$0xff] %v1190
  %1195 = vrot.lane.b32.xlu0 %v1012, 112
  %v1196 = vpop.permute.xlu0 %1195
  %1197 = vrot.lane.b32.xlu0 %v1013, 112
  %v1198 = vpop.permute.xlu0 %1197
  %1199 = vrot.lane.b32.xlu0 %v1014, 112
  %v1200 = vpop.permute.xlu0 %1199
  %1201 = vrot.lane.b32.xlu0 %v1016, 112
  %v1202 = vpop.permute.xlu0 %1201
  %1203 = vrot.lane.b32.xlu0 %v1017, 112
  %v1204 = vpop.permute.xlu0 %1203
  %1205 = vrot.lane.b32.xlu0 %v1018, 112
  %v1206 = vpop.permute.xlu0 %1205
  %v1207 = vsel %vm278, %v1196, %v1198
  %v1208 = vsel %vm278, %v1198, %v1200
  %v1209 = vsel %vm278, %v1202, %v1204
  %v1210 = vsel %vm278, %v1204, %v1206
  %1215 = vst [vmem:[#allocation4 + $0x1d0] sm:$0xff] %v1207
  %1216 = vst [vmem:[#allocation4 + $0x1d8] sm:$0xff] %v1208
  %1217 = vst [vmem:[#allocation4 + $0x1f0] sm:$0xff] %v1209
  %1218 = vst [vmem:[#allocation4 + $0x1f8] sm:$0xff] %v1210
  %1219 = vrot.lane.b32.xlu0 %v1012, 111
  %v1220 = vpop.permute.xlu0 %1219
  %1221 = vrot.lane.b32.xlu0 %v1013, 111
  %v1222 = vpop.permute.xlu0 %1221
  %1223 = vrot.lane.b32.xlu0 %v1014, 111
  %v1224 = vpop.permute.xlu0 %1223
  %1225 = vrot.lane.b32.xlu0 %v1016, 111
  %v1226 = vpop.permute.xlu0 %1225
  %1227 = vrot.lane.b32.xlu0 %v1017, 111
  %v1228 = vpop.permute.xlu0 %1227
  %1229 = vrot.lane.b32.xlu0 %v1018, 111
  %v1230 = vpop.permute.xlu0 %1229
  %v1231 = vsel %vm303, %v1220, %v1222
  %v1232 = vsel %vm303, %v1222, %v1224
  %v1233 = vsel %vm303, %v1226, %v1228
  %v1234 = vsel %vm303, %v1228, %v1230
  %v1239 = vsel %vm142, %v1231, 0.0
  %v1240 = vsel %vm143, %v1232, 0.0
  %v1241 = vsel %vm142, %v1233, 0.0
  %v1242 = vsel %vm143, %v1234, 0.0
  %1243 = vst [vmem:[#allocation4 + $0x210] sm:$0xff] %v1239
  %1244 = vst [vmem:[#allocation4 + $0x218] sm:$0xff] %v1240
  %1245 = vst [vmem:[#allocation4 + $0x230] sm:$0xff] %v1241
  %1246 = vst [vmem:[#allocation4 + $0x238] sm:$0xff] %v1242
  %1247 = vrot.lane.b32.xlu0 %v1011, 34
  %v1248 = vpop.permute.xlu0 %1247
  %1249 = vrot.lane.b32.xlu0 %v1012, 34
  %v1250 = vpop.permute.xlu0 %1249
  %1251 = vrot.lane.b32.xlu0 %v1013, 34
  %v1252 = vpop.permute.xlu0 %1251
  %1253 = vrot.lane.b32.xlu0 %v1015, 34
  %v1254 = vpop.permute.xlu0 %1253
  %1255 = vrot.lane.b32.xlu0 %v1016, 34
  %v1256 = vpop.permute.xlu0 %1255
  %1257 = vrot.lane.b32.xlu0 %v1017, 34
  %v1258 = vpop.permute.xlu0 %1257
  %v1259 = vsel %vm338, %v1248, %v1250
  %v1260 = vsel %vm338, %v1250, %v1252
  %v1261 = vsel %vm338, %v1254, %v1256
  %v1262 = vsel %vm338, %v1256, %v1258
  %v1267 = vsel %vm324, %v1259, 0.0
  %v1268 = vsel %vm325, %v1260, 0.0
  %v1269 = vsel %vm324, %v1261, 0.0
  %v1270 = vsel %vm325, %v1262, 0.0
  %1271 = vst [vmem:[#allocation4 + $0x250] sm:$0xff] %v1267
  %1272 = vst [vmem:[#allocation4 + $0x258] sm:$0xff] %v1268
  %1273 = vst [vmem:[#allocation4 + $0x270] sm:$0xff] %v1269
  %1274 = vst [vmem:[#allocation4 + $0x278] sm:$0xff] %v1270
  %1275 = vrot.lane.b32.xlu0 %v1011, 32
  %v1276 = vpop.permute.xlu0 %1275
  %1277 = vrot.lane.b32.xlu0 %v1012, 32
  %v1278 = vpop.permute.xlu0 %1277
  %1279 = vrot.lane.b32.xlu0 %v1013, 32
  %v1280 = vpop.permute.xlu0 %1279
  %1281 = vrot.lane.b32.xlu0 %v1015, 32
  %v1282 = vpop.permute.xlu0 %1281
  %1283 = vrot.lane.b32.xlu0 %v1016, 32
  %v1284 = vpop.permute.xlu0 %1283
  %1285 = vrot.lane.b32.xlu0 %v1017, 32
  %v1286 = vpop.permute.xlu0 %1285
  %v1287 = vsel %vm367, %v1276, %v1278
  %v1288 = vsel %vm367, %v1278, %v1280
  %v1289 = vsel %vm367, %v1282, %v1284
  %v1290 = vsel %vm367, %v1284, %v1286
  %1295 = vst [vmem:[#allocation4 + $0x290] sm:$0xff] %v1287
  %1296 = vst [vmem:[#allocation4 + $0x298] sm:$0xff] %v1288
  %1297 = vst [vmem:[#allocation4 + $0x2b0] sm:$0xff] %v1289
  %1298 = vst [vmem:[#allocation4 + $0x2b8] sm:$0xff] %v1290
  %1299 = vrot.lane.b32.xlu0 %v1011, 30
  %v1300 = vpop.permute.xlu0 %1299
  %1301 = vrot.lane.b32.xlu0 %v1012, 30
  %v1302 = vpop.permute.xlu0 %1301
  %1303 = vrot.lane.b32.xlu0 %v1013, 30
  %v1304 = vpop.permute.xlu0 %1303
  %1305 = vrot.lane.b32.xlu0 %v1015, 30
  %v1306 = vpop.permute.xlu0 %1305
  %1307 = vrot.lane.b32.xlu0 %v1016, 30
  %v1308 = vpop.permute.xlu0 %1307
  %1309 = vrot.lane.b32.xlu0 %v1017, 30
  %v1310 = vpop.permute.xlu0 %1309
  %v1311 = vsel %vm398, %v1300, %v1302
  %v1312 = vsel %vm398, %v1302, %v1304
  %v1313 = vsel %vm398, %v1306, %v1308
  %v1314 = vsel %vm398, %v1308, %v1310
  %v1319 = vsel %vm384, %v1311, 0.0
  %v1320 = vsel %vm385, %v1312, 0.0
  %v1321 = vsel %vm384, %v1313, 0.0
  %v1322 = vsel %vm385, %v1314, 0.0
  %1323 = vst [vmem:[#allocation4 + $0x2d0] sm:$0xff] %v1319
  %1324 = vst [vmem:[#allocation4 + $0x2d8] sm:$0xff] %v1320
  %1325 = vst [vmem:[#allocation4 + $0x2f0] sm:$0xff] %v1321
  %1326 = vst [vmem:[#allocation4 + $0x2f8] sm:$0xff] %v1322
  %1327 = vrot.lane.b32.xlu0 %v1011, 2
  %v1328 = vpop.permute.xlu0 %1327
  %1329 = vrot.lane.b32.xlu0 %v1012, 2
  %v1330 = vpop.permute.xlu0 %1329
  %1331 = vrot.lane.b32.xlu0 %v1013, 2
  %v1332 = vpop.permute.xlu0 %1331
  %1333 = vrot.lane.b32.xlu0 %v1015, 2
  %v1334 = vpop.permute.xlu0 %1333
  %1335 = vrot.lane.b32.xlu0 %v1016, 2
  %v1336 = vpop.permute.xlu0 %1335
  %1337 = vrot.lane.b32.xlu0 %v1017, 2
  %v1338 = vpop.permute.xlu0 %1337
  %v1339 = vsel %vm427, %v1328, %v1330
  %v1340 = vsel %vm427, %v1330, %v1332
  %v1341 = vsel %vm427, %v1334, %v1336
  %v1342 = vsel %vm427, %v1336, %v1338
  %v1347 = vsel %vm324, %v1339, 0.0
  %v1348 = vsel %vm325, %v1340, 0.0
  %v1349 = vsel %vm324, %v1341, 0.0
  %v1350 = vsel %vm325, %v1342, 0.0
  %1351 = vst [vmem:[#allocation4 + $0x310] sm:$0xff] %v1347
  %1352 = vst [vmem:[#allocation4 + $0x318] sm:$0xff] %v1348
  %1353 = vst [vmem:[#allocation4 + $0x330] sm:$0xff] %v1349
  %1354 = vst [vmem:[#allocation4 + $0x338] sm:$0xff] %v1350
  %1355 = vst [vmem:[#allocation4 + $0x350] sm:$0xff] %v1012
  %1356 = vst [vmem:[#allocation4 + $0x358] sm:$0xff] %v1013
  %1357 = vst [vmem:[#allocation4 + $0x370] sm:$0xff] %v1016
  %1358 = vst [vmem:[#allocation4 + $0x378] sm:$0xff] %v1017
  %1359 = vrot.lane.b32.xlu0 %v1012, 126
  %v1360 = vpop.permute.xlu0 %1359
  %1361 = vrot.lane.b32.xlu0 %v1013, 126
  %v1362 = vpop.permute.xlu0 %1361
  %1363 = vrot.lane.b32.xlu0 %v1014, 126
  %v1364 = vpop.permute.xlu0 %1363
  %1365 = vrot.lane.b32.xlu0 %v1016, 126
  %v1366 = vpop.permute.xlu0 %1365
  %1367 = vrot.lane.b32.xlu0 %v1017, 126
  %v1368 = vpop.permute.xlu0 %1367
  %1369 = vrot.lane.b32.xlu0 %v1018, 126
  %v1370 = vpop.permute.xlu0 %1369
  %v1371 = vsel %vm460, %v1360, %v1362
  %v1372 = vsel %vm460, %v1362, %v1364
  %v1373 = vsel %vm460, %v1366, %v1368
  %v1374 = vsel %vm460, %v1368, %v1370
  %v1379 = vsel %vm384, %v1371, 0.0
  %v1380 = vsel %vm385, %v1372, 0.0
  %v1381 = vsel %vm384, %v1373, 0.0
  %v1382 = vsel %vm385, %v1374, 0.0
  %1383 = vst [vmem:[#allocation4 + $0x390] sm:$0xff] %v1379
  %1384 = vst [vmem:[#allocation4 + $0x398] sm:$0xff] %v1380
  %1385 = vst [vmem:[#allocation4 + $0x3b0] sm:$0xff] %v1381
  %1386 = vst [vmem:[#allocation4 + $0x3b8] sm:$0xff] %v1382
  %1387 = vrot.lane.b32.xlu0 %v1012, 98
  %v1388 = vpop.permute.xlu0 %1387
  %1389 = vrot.lane.b32.xlu0 %v1013, 98
  %v1390 = vpop.permute.xlu0 %1389
  %1391 = vrot.lane.b32.xlu0 %v1014, 98
  %v1392 = vpop.permute.xlu0 %1391
  %1393 = vrot.lane.b32.xlu0 %v1016, 98
  %v1394 = vpop.permute.xlu0 %1393
  %1395 = vrot.lane.b32.xlu0 %v1017, 98
  %v1396 = vpop.permute.xlu0 %1395
  %1397 = vrot.lane.b32.xlu0 %v1018, 98
  %v1398 = vpop.permute.xlu0 %1397
  %v1399 = vsel %vm489, %v1388, %v1390
  %v1400 = vsel %vm489, %v1390, %v1392
  %v1401 = vsel %vm489, %v1394, %v1396
  %v1402 = vsel %vm489, %v1396, %v1398
  %v1407 = vsel %vm324, %v1399, 0.0
  %v1408 = vsel %vm325, %v1400, 0.0
  %v1409 = vsel %vm324, %v1401, 0.0
  %v1410 = vsel %vm325, %v1402, 0.0
  %1411 = vst [vmem:[#allocation4 + $0x3d0] sm:$0xff] %v1407
  %1412 = vst [vmem:[#allocation4 + $0x3d8] sm:$0xff] %v1408
  %1413 = vst [vmem:[#allocation4 + $0x3f0] sm:$0xff] %v1409
  %1414 = vst [vmem:[#allocation4 + $0x3f8] sm:$0xff] %v1410
  %1415 = vrot.lane.b32.xlu0 %v1012, 96
  %v1416 = vpop.permute.xlu0 %1415
  %1417 = vrot.lane.b32.xlu0 %v1013, 96
  %v1418 = vpop.permute.xlu0 %1417
  %1419 = vrot.lane.b32.xlu0 %v1014, 96
  %v1420 = vpop.permute.xlu0 %1419
  %1421 = vrot.lane.b32.xlu0 %v1016, 96
  %v1422 = vpop.permute.xlu0 %1421
  %1423 = vrot.lane.b32.xlu0 %v1017, 96
  %v1424 = vpop.permute.xlu0 %1423
  %1425 = vrot.lane.b32.xlu0 %v1018, 96
  %v1426 = vpop.permute.xlu0 %1425
  %v1427 = vsel %vm518, %v1416, %v1418
  %v1428 = vsel %vm518, %v1418, %v1420
  %v1429 = vsel %vm518, %v1422, %v1424
  %v1430 = vsel %vm518, %v1424, %v1426
  %1435 = vst [vmem:[#allocation4 + $0x410] sm:$0xff] %v1427
  %1436 = vst [vmem:[#allocation4 + $0x418] sm:$0xff] %v1428
  %1437 = vst [vmem:[#allocation4 + $0x430] sm:$0xff] %v1429
  %1438 = vst [vmem:[#allocation4 + $0x438] sm:$0xff] %v1430
  %1439 = vrot.lane.b32.xlu0 %v1012, 94
  %v1440 = vpop.permute.xlu0 %1439
  %1441 = vrot.lane.b32.xlu0 %v1013, 94
  %v1442 = vpop.permute.xlu0 %1441
  %1443 = vrot.lane.b32.xlu0 %v1014, 94
  %v1444 = vpop.permute.xlu0 %1443
  %1445 = vrot.lane.b32.xlu0 %v1016, 94
  %v1446 = vpop.permute.xlu0 %1445
  %1447 = vrot.lane.b32.xlu0 %v1017, 94
  %v1448 = vpop.permute.xlu0 %1447
  %1449 = vrot.lane.b32.xlu0 %v1018, 94
  %v1450 = vpop.permute.xlu0 %1449
  %v1451 = vsel %vm543, %v1440, %v1442
  %v1452 = vsel %vm543, %v1442, %v1444
  %v1453 = vsel %vm543, %v1446, %v1448
  %v1454 = vsel %vm543, %v1448, %v1450
  %v1459 = vsel %vm384, %v1451, 0.0
  %v1460 = vsel %vm385, %v1452, 0.0
  %v1461 = vsel %vm384, %v1453, 0.0
  %v1462 = vsel %vm385, %v1454, 0.0
  %1463 = vst [vmem:[#allocation4 + $0x450] sm:$0xff] %v1459
  %1464 = vst [vmem:[#allocation4 + $0x458] sm:$0xff] %v1460
  %1465 = vst [vmem:[#allocation4 + $0x470] sm:$0xff] %v1461
  %1466 = vst [vmem:[#allocation4 + $0x478] sm:$0xff] %v1462
  %1467 = vrot.lane.b32.xlu0 %v1011, 51
  %v1468 = vpop.permute.xlu0 %1467
  %1469 = vrot.lane.b32.xlu0 %v1012, 51
  %v1470 = vpop.permute.xlu0 %1469
  %1471 = vrot.lane.b32.xlu0 %v1013, 51
  %v1472 = vpop.permute.xlu0 %1471
  %1473 = vrot.lane.b32.xlu0 %v1015, 51
  %v1474 = vpop.permute.xlu0 %1473
  %1475 = vrot.lane.b32.xlu0 %v1016, 51
  %v1476 = vpop.permute.xlu0 %1475
  %1477 = vrot.lane.b32.xlu0 %v1017, 51
  %v1478 = vpop.permute.xlu0 %1477
  %v1479 = vsel %vm578, %v1468, %v1470
  %v1480 = vsel %vm578, %v1470, %v1472
  %v1481 = vsel %vm578, %v1474, %v1476
  %v1482 = vsel %vm578, %v1476, %v1478
  %v1487 = vsel %vm564, %v1479, 0.0
  %v1488 = vsel %vm565, %v1480, 0.0
  %v1489 = vsel %vm564, %v1481, 0.0
  %v1490 = vsel %vm565, %v1482, 0.0
  %1491 = vst [vmem:[#allocation4 + $0x490] sm:$0xff] %v1487
  %1492 = vst [vmem:[#allocation4 + $0x498] sm:$0xff] %v1488
  %1493 = vst [vmem:[#allocation4 + $0x4b0] sm:$0xff] %v1489
  %1494 = vst [vmem:[#allocation4 + $0x4b8] sm:$0xff] %v1490
  %1495 = vrot.lane.b32.xlu0 %v1011, 48
  %v1496 = vpop.permute.xlu0 %1495
  %1497 = vrot.lane.b32.xlu0 %v1012, 48
  %v1498 = vpop.permute.xlu0 %1497
  %1499 = vrot.lane.b32.xlu0 %v1013, 48
  %v1500 = vpop.permute.xlu0 %1499
  %1501 = vrot.lane.b32.xlu0 %v1015, 48
  %v1502 = vpop.permute.xlu0 %1501
  %1503 = vrot.lane.b32.xlu0 %v1016, 48
  %v1504 = vpop.permute.xlu0 %1503
  %1505 = vrot.lane.b32.xlu0 %v1017, 48
  %v1506 = vpop.permute.xlu0 %1505
  %v1507 = vsel %vm607, %v1496, %v1498
  %v1508 = vsel %vm607, %v1498, %v1500
  %v1509 = vsel %vm607, %v1502, %v1504
  %v1510 = vsel %vm607, %v1504, %v1506
  %1515 = vst [vmem:[#allocation4 + $0x4d0] sm:$0xff] %v1507
  %1516 = vst [vmem:[#allocation4 + $0x4d8] sm:$0xff] %v1508
  %1517 = vst [vmem:[#allocation4 + $0x4f0] sm:$0xff] %v1509
  %1518 = vst [vmem:[#allocation4 + $0x4f8] sm:$0xff] %v1510
  %1519 = vrot.lane.b32.xlu0 %v1011, 45
  %v1520 = vpop.permute.xlu0 %1519
  %1521 = vrot.lane.b32.xlu0 %v1012, 45
  %v1522 = vpop.permute.xlu0 %1521
  %1523 = vrot.lane.b32.xlu0 %v1013, 45
  %v1524 = vpop.permute.xlu0 %1523
  %1525 = vrot.lane.b32.xlu0 %v1015, 45
  %v1526 = vpop.permute.xlu0 %1525
  %1527 = vrot.lane.b32.xlu0 %v1016, 45
  %v1528 = vpop.permute.xlu0 %1527
  %1529 = vrot.lane.b32.xlu0 %v1017, 45
  %v1530 = vpop.permute.xlu0 %1529
  %v1531 = vsel %vm638, %v1520, %v1522
  %v1532 = vsel %vm638, %v1522, %v1524
  %v1533 = vsel %vm638, %v1526, %v1528
  %v1534 = vsel %vm638, %v1528, %v1530
  %v1539 = vsel %vm624, %v1531, 0.0
  %v1540 = vsel %vm625, %v1532, 0.0
  %v1541 = vsel %vm624, %v1533, 0.0
  %v1542 = vsel %vm625, %v1534, 0.0
  %1543 = vst [vmem:[#allocation4 + $0x510] sm:$0xff] %v1539
  %1544 = vst [vmem:[#allocation4 + $0x518] sm:$0xff] %v1540
  %1545 = vst [vmem:[#allocation4 + $0x530] sm:$0xff] %v1541
  %1546 = vst [vmem:[#allocation4 + $0x538] sm:$0xff] %v1542
  %1547 = vrot.lane.b32.xlu0 %v1011, 3
  %v1548 = vpop.permute.xlu0 %1547
  %1549 = vrot.lane.b32.xlu0 %v1012, 3
  %v1550 = vpop.permute.xlu0 %1549
  %1551 = vrot.lane.b32.xlu0 %v1013, 3
  %v1552 = vpop.permute.xlu0 %1551
  %1553 = vrot.lane.b32.xlu0 %v1015, 3
  %v1554 = vpop.permute.xlu0 %1553
  %1555 = vrot.lane.b32.xlu0 %v1016, 3
  %v1556 = vpop.permute.xlu0 %1555
  %1557 = vrot.lane.b32.xlu0 %v1017, 3
  %v1558 = vpop.permute.xlu0 %1557
  %v1559 = vsel %vm667, %v1548, %v1550
  %v1560 = vsel %vm667, %v1550, %v1552
  %v1561 = vsel %vm667, %v1554, %v1556
  %v1562 = vsel %vm667, %v1556, %v1558
  %v1567 = vsel %vm564, %v1559, 0.0
  %v1568 = vsel %vm565, %v1560, 0.0
  %v1569 = vsel %vm564, %v1561, 0.0
  %v1570 = vsel %vm565, %v1562, 0.0
  %1571 = vst [vmem:[#allocation4 + $0x550] sm:$0xff] %v1567
  %1572 = vst [vmem:[#allocation4 + $0x558] sm:$0xff] %v1568
  %1573 = vst [vmem:[#allocation4 + $0x570] sm:$0xff] %v1569
  %1574 = vst [vmem:[#allocation4 + $0x578] sm:$0xff] %v1570
  %1575 = vst [vmem:[#allocation4 + $0x590] sm:$0xff] %v1012
  %1576 = vst [vmem:[#allocation4 + $0x598] sm:$0xff] %v1013
  %1577 = vst [vmem:[#allocation4 + $0x5b0] sm:$0xff] %v1016
  %1578 = vst [vmem:[#allocation4 + $0x5b8] sm:$0xff] %v1017
  %1579 = vrot.lane.b32.xlu0 %v1012, 125
  %v1580 = vpop.permute.xlu0 %1579
  %1581 = vrot.lane.b32.xlu0 %v1013, 125
  %v1582 = vpop.permute.xlu0 %1581
  %1583 = vrot.lane.b32.xlu0 %v1014, 125
  %v1584 = vpop.permute.xlu0 %1583
  %1585 = vrot.lane.b32.xlu0 %v1016, 125
  %v1586 = vpop.permute.xlu0 %1585
  %1587 = vrot.lane.b32.xlu0 %v1017, 125
  %v1588 = vpop.permute.xlu0 %1587
  %1589 = vrot.lane.b32.xlu0 %v1018, 125
  %v1590 = vpop.permute.xlu0 %1589
  %v1591 = vsel %vm700, %v1580, %v1582
  %v1592 = vsel %vm700, %v1582, %v1584
  %v1593 = vsel %vm700, %v1586, %v1588
  %v1594 = vsel %vm700, %v1588, %v1590
  %v1599 = vsel %vm624, %v1591, 0.0
  %v1600 = vsel %vm625, %v1592, 0.0
  %v1601 = vsel %vm624, %v1593, 0.0
  %v1602 = vsel %vm625, %v1594, 0.0
  %1603 = vst [vmem:[#allocation4 + $0x5d0] sm:$0xff] %v1599
  %1604 = vst [vmem:[#allocation4 + $0x5d8] sm:$0xff] %v1600
  %1605 = vst [vmem:[#allocation4 + $0x5f0] sm:$0xff] %v1601
  %1606 = vst [vmem:[#allocation4 + $0x5f8] sm:$0xff] %v1602
  %1607 = vrot.lane.b32.xlu0 %v1012, 83
  %v1608 = vpop.permute.xlu0 %1607
  %1609 = vrot.lane.b32.xlu0 %v1013, 83
  %v1610 = vpop.permute.xlu0 %1609
  %1611 = vrot.lane.b32.xlu0 %v1014, 83
  %v1612 = vpop.permute.xlu0 %1611
  %1613 = vrot.lane.b32.xlu0 %v1016, 83
  %v1614 = vpop.permute.xlu0 %1613
  %1615 = vrot.lane.b32.xlu0 %v1017, 83
  %v1616 = vpop.permute.xlu0 %1615
  %1617 = vrot.lane.b32.xlu0 %v1018, 83
  %v1618 = vpop.permute.xlu0 %1617
  %v1619 = vsel %vm729, %v1608, %v1610
  %v1620 = vsel %vm729, %v1610, %v1612
  %v1621 = vsel %vm729, %v1614, %v1616
  %v1622 = vsel %vm729, %v1616, %v1618
  %v1627 = vsel %vm564, %v1619, 0.0
  %v1628 = vsel %vm565, %v1620, 0.0
  %v1629 = vsel %vm564, %v1621, 0.0
  %v1630 = vsel %vm565, %v1622, 0.0
  %1631 = vst [vmem:[#allocation4 + $0x610] sm:$0xff] %v1627
  %1632 = vst [vmem:[#allocation4 + $0x618] sm:$0xff] %v1628
  %1633 = vst [vmem:[#allocation4 + $0x630] sm:$0xff] %v1629
  %1634 = vst [vmem:[#allocation4 + $0x638] sm:$0xff] %v1630
  %1635 = vrot.lane.b32.xlu0 %v1012, 80
  %v1636 = vpop.permute.xlu0 %1635
  %1637 = vrot.lane.b32.xlu0 %v1013, 80
  %v1638 = vpop.permute.xlu0 %1637
  %1639 = vrot.lane.b32.xlu0 %v1014, 80
  %v1640 = vpop.permute.xlu0 %1639
  %1641 = vrot.lane.b32.xlu0 %v1016, 80
  %v1642 = vpop.permute.xlu0 %1641
  %1643 = vrot.lane.b32.xlu0 %v1017, 80
  %v1644 = vpop.permute.xlu0 %1643
  %1645 = vrot.lane.b32.xlu0 %v1018, 80
  %v1646 = vpop.permute.xlu0 %1645
  %v1647 = vsel %vm758, %v1636, %v1638
  %v1648 = vsel %vm758, %v1638, %v1640
  %v1649 = vsel %vm758, %v1642, %v1644
  %v1650 = vsel %vm758, %v1644, %v1646
  %1655 = vst [vmem:[#allocation4 + $0x650] sm:$0xff] %v1647
  %1656 = vst [vmem:[#allocation4 + $0x658] sm:$0xff] %v1648
  %1657 = vst [vmem:[#allocation4 + $0x670] sm:$0xff] %v1649
  %1658 = vst [vmem:[#allocation4 + $0x678] sm:$0xff] %v1650
  %1659 = vrot.lane.b32.xlu0 %v1012, 77
  %v1660 = vpop.permute.xlu0 %1659
  %1661 = vrot.lane.b32.xlu0 %v1013, 77
  %v1662 = vpop.permute.xlu0 %1661
  %1663 = vrot.lane.b32.xlu0 %v1014, 77
  %v1664 = vpop.permute.xlu0 %1663
  %1665 = vrot.lane.b32.xlu0 %v1016, 77
  %v1666 = vpop.permute.xlu0 %1665
  %1667 = vrot.lane.b32.xlu0 %v1017, 77
  %v1668 = vpop.permute.xlu0 %1667
  %1669 = vrot.lane.b32.xlu0 %v1018, 77
  %v1670 = vpop.permute.xlu0 %1669
  %v1671 = vsel %vm783, %v1660, %v1662
  %v1672 = vsel %vm783, %v1662, %v1664
  %v1673 = vsel %vm783, %v1666, %v1668
  %v1674 = vsel %vm783, %v1668, %v1670
  %v1679 = vsel %vm624, %v1671, 0.0
  %v1680 = vsel %vm625, %v1672, 0.0
  %v1681 = vsel %vm624, %v1673, 0.0
  %v1682 = vsel %vm625, %v1674, 0.0
  %1683 = vst [vmem:[#allocation4 + $0x690] sm:$0xff] %v1679
  %1684 = vst [vmem:[#allocation4 + $0x698] sm:$0xff] %v1680
  %1685 = vst [vmem:[#allocation4 + $0x6b0] sm:$0xff] %v1681
  %1686 = vst [vmem:[#allocation4 + $0x6b8] sm:$0xff] %v1682
  %1687 = vrot.lane.b32.xlu0 %v1011, 68
  %v1688 = vpop.permute.xlu0 %1687
  %1689 = vrot.lane.b32.xlu0 %v1012, 68
  %v1690 = vpop.permute.xlu0 %1689
  %1691 = vrot.lane.b32.xlu0 %v1013, 68
  %v1692 = vpop.permute.xlu0 %1691
  %1693 = vrot.lane.b32.xlu0 %v1015, 68
  %v1694 = vpop.permute.xlu0 %1693
  %1695 = vrot.lane.b32.xlu0 %v1016, 68
  %v1696 = vpop.permute.xlu0 %1695
  %1697 = vrot.lane.b32.xlu0 %v1017, 68
  %v1698 = vpop.permute.xlu0 %1697
  %v1699 = vsel %vm818, %v1688, %v1690
  %v1700 = vsel %vm818, %v1690, %v1692
  %v1701 = vsel %vm818, %v1694, %v1696
  %v1702 = vsel %vm818, %v1696, %v1698
  %v1707 = vsel %vm804, %v1699, 0.0
  %v1708 = vsel %vm805, %v1700, 0.0
  %v1709 = vsel %vm804, %v1701, 0.0
  %v1710 = vsel %vm805, %v1702, 0.0
  %1711 = vst [vmem:[#allocation4 + $0x6d0] sm:$0xff] %v1707
  %1712 = vst [vmem:[#allocation4 + $0x6d8] sm:$0xff] %v1708
  %1713 = vst [vmem:[#allocation4 + $0x6f0] sm:$0xff] %v1709
  %1714 = vst [vmem:[#allocation4 + $0x6f8] sm:$0xff] %v1710
  %1715 = vrot.lane.b32.xlu0 %v1011, 64
  %v1716 = vpop.permute.xlu0 %1715
  %1717 = vrot.lane.b32.xlu0 %v1012, 64
  %v1718 = vpop.permute.xlu0 %1717
  %1719 = vrot.lane.b32.xlu0 %v1013, 64
  %v1720 = vpop.permute.xlu0 %1719
  %1721 = vrot.lane.b32.xlu0 %v1015, 64
  %v1722 = vpop.permute.xlu0 %1721
  %1723 = vrot.lane.b32.xlu0 %v1016, 64
  %v1724 = vpop.permute.xlu0 %1723
  %1725 = vrot.lane.b32.xlu0 %v1017, 64
  %v1726 = vpop.permute.xlu0 %1725
  %v1727 = vsel %vm847, %v1716, %v1718
  %v1728 = vsel %vm847, %v1718, %v1720
  %v1729 = vsel %vm847, %v1722, %v1724
  %v1730 = vsel %vm847, %v1724, %v1726
  %1735 = vst [vmem:[#allocation4 + $0x710] sm:$0xff] %v1727
  %1736 = vst [vmem:[#allocation4 + $0x718] sm:$0xff] %v1728
  %1737 = vst [vmem:[#allocation4 + $0x730] sm:$0xff] %v1729
  %1738 = vst [vmem:[#allocation4 + $0x738] sm:$0xff] %v1730
  %1739 = vrot.lane.b32.xlu0 %v1011, 60
  %v1740 = vpop.permute.xlu0 %1739
  %1741 = vrot.lane.b32.xlu0 %v1012, 60
  %v1742 = vpop.permute.xlu0 %1741
  %1743 = vrot.lane.b32.xlu0 %v1013, 60
  %v1744 = vpop.permute.xlu0 %1743
  %1745 = vrot.lane.b32.xlu0 %v1015, 60
  %v1746 = vpop.permute.xlu0 %1745
  %1747 = vrot.lane.b32.xlu0 %v1016, 60
  %v1748 = vpop.permute.xlu0 %1747
  %1749 = vrot.lane.b32.xlu0 %v1017, 60
  %v1750 = vpop.permute.xlu0 %1749
  %v1751 = vsel %vm878, %v1740, %v1742
  %v1752 = vsel %vm878, %v1742, %v1744
  %v1753 = vsel %vm878, %v1746, %v1748
  %v1754 = vsel %vm878, %v1748, %v1750
  %v1759 = vsel %vm864, %v1751, 0.0
  %v1760 = vsel %vm865, %v1752, 0.0
  %v1761 = vsel %vm864, %v1753, 0.0
  %v1762 = vsel %vm865, %v1754, 0.0
  %1763 = vst [vmem:[#allocation4 + $0x750] sm:$0xff] %v1759
  %1764 = vst [vmem:[#allocation4 + $0x758] sm:$0xff] %v1760
  %1765 = vst [vmem:[#allocation4 + $0x770] sm:$0xff] %v1761
  %1766 = vst [vmem:[#allocation4 + $0x778] sm:$0xff] %v1762
  %1767 = vrot.lane.b32.xlu0 %v1011, 4
  %v1768 = vpop.permute.xlu0 %1767
  %1769 = vrot.lane.b32.xlu0 %v1012, 4
  %v1770 = vpop.permute.xlu0 %1769
  %1771 = vrot.lane.b32.xlu0 %v1013, 4
  %v1772 = vpop.permute.xlu0 %1771
  %1773 = vrot.lane.b32.xlu0 %v1015, 4
  %v1774 = vpop.permute.xlu0 %1773
  %1775 = vrot.lane.b32.xlu0 %v1016, 4
  %v1776 = vpop.permute.xlu0 %1775
  %1777 = vrot.lane.b32.xlu0 %v1017, 4
  %v1778 = vpop.permute.xlu0 %1777
  %v1779 = vsel %vm907, %v1768, %v1770
  %v1780 = vsel %vm907, %v1770, %v1772
  %v1781 = vsel %vm907, %v1774, %v1776
  %v1782 = vsel %vm907, %v1776, %v1778
  %v1787 = vsel %vm804, %v1779, 0.0
  %v1788 = vsel %vm805, %v1780, 0.0
  %v1789 = vsel %vm804, %v1781, 0.0
  %v1790 = vsel %vm805, %v1782, 0.0
  %1791 = vst [vmem:[#allocation4 + $0x790] sm:$0xff] %v1787
  %1792 = vst [vmem:[#allocation4 + $0x798] sm:$0xff] %v1788
  %1793 = vst [vmem:[#allocation4 + $0x7b0] sm:$0xff] %v1789
  %1794 = vst [vmem:[#allocation4 + $0x7b8] sm:$0xff] %v1790
  %1795 = vst [vmem:[#allocation4 + $0x7d0] sm:$0xff] %v1012
  %1796 = vst [vmem:[#allocation4 + $0x7d8] sm:$0xff] %v1013
  %1797 = vst [vmem:[#allocation4 + $0x7f0] sm:$0xff] %v1016
  %1798 = vst [vmem:[#allocation4 + $0x7f8] sm:$0xff] %v1017
  %1799 = vrot.lane.b32.xlu0 %v1012, 124
  %v1800 = vpop.permute.xlu0 %1799
  %1801 = vrot.lane.b32.xlu0 %v1013, 124
  %v1802 = vpop.permute.xlu0 %1801
  %1803 = vrot.lane.b32.xlu0 %v1014, 124
  %v1804 = vpop.permute.xlu0 %1803
  %1805 = vrot.lane.b32.xlu0 %v1016, 124
  %v1806 = vpop.permute.xlu0 %1805
  %1807 = vrot.lane.b32.xlu0 %v1017, 124
  %v1808 = vpop.permute.xlu0 %1807
  %1809 = vrot.lane.b32.xlu0 %v1018, 124
  %v1810 = vpop.permute.xlu0 %1809
  %v1811 = vsel %vm940, %v1800, %v1802
  %v1812 = vsel %vm940, %v1802, %v1804
  %v1813 = vsel %vm940, %v1806, %v1808
  %v1814 = vsel %vm940, %v1808, %v1810
  %v1819 = vsel %vm864, %v1811, 0.0
  %v1820 = vsel %vm865, %v1812, 0.0
  %v1821 = vsel %vm864, %v1813, 0.0
  %v1822 = vsel %vm865, %v1814, 0.0
  %1823 = vst [vmem:[#allocation4 + $0x810] sm:$0xff] %v1819
  %1824 = vst [vmem:[#allocation4 + $0x818] sm:$0xff] %v1820
  %1825 = vst [vmem:[#allocation4 + $0x830] sm:$0xff] %v1821
  %1826 = vst [vmem:[#allocation4 + $0x838] sm:$0xff] %v1822
  %1827 = vrot.lane.b32.xlu0 %v1014, 68
  %v1828 = vpop.permute.xlu0 %1827
  %1829 = vrot.lane.b32.xlu0 %v1018, 68
  %v1830 = vpop.permute.xlu0 %1829
  %v1831 = vsel %vm818, %v1692, %v1828
  %v1832 = vsel %vm818, %v1698, %v1830
  %v1835 = vsel %vm804, %v1700, 0.0
  %v1836 = vsel %vm805, %v1831, 0.0
  %v1837 = vsel %vm804, %v1702, 0.0
  %v1838 = vsel %vm805, %v1832, 0.0
  %1839 = vst [vmem:[#allocation4 + $0x850] sm:$0xff] %v1835
  %1840 = vst [vmem:[#allocation4 + $0x858] sm:$0xff] %v1836
  %1841 = vst [vmem:[#allocation4 + $0x870] sm:$0xff] %v1837
  %1842 = vst [vmem:[#allocation4 + $0x878] sm:$0xff] %v1838
  %1843 = vrot.lane.b32.xlu0 %v1014, 64
  %v1844 = vpop.permute.xlu0 %1843
  %1845 = vrot.lane.b32.xlu0 %v1018, 64
  %v1846 = vpop.permute.xlu0 %1845
  %v1847 = vsel %vm847, %v1720, %v1844
  %v1848 = vsel %vm847, %v1726, %v1846
  %1851 = vst [vmem:[#allocation4 + $0x890] sm:$0xff] %v1728
  %1852 = vst [vmem:[#allocation4 + $0x898] sm:$0xff] %v1847
  %1853 = vst [vmem:[#allocation4 + $0x8b0] sm:$0xff] %v1730
  %1854 = vst [vmem:[#allocation4 + $0x8b8] sm:$0xff] %v1848
  %1855 = vrot.lane.b32.xlu0 %v1014, 60
  %v1856 = vpop.permute.xlu0 %1855
  %1857 = vrot.lane.b32.xlu0 %v1018, 60
  %v1858 = vpop.permute.xlu0 %1857
  %v1859 = vsel %vm878, %v1744, %v1856
  %v1860 = vsel %vm878, %v1750, %v1858
  %v1863 = vsel %vm864, %v1752, 0.0
  %v1864 = vsel %vm865, %v1859, 0.0
  %v1865 = vsel %vm864, %v1754, 0.0
  %v1866 = vsel %vm865, %v1860, 0.0
  %1867 = vst [vmem:[#allocation4 + $0x8d0] sm:$0xff] %v1863
  %1868 = vst [vmem:[#allocation4 + $0x8d8] sm:$0xff] %v1864
  %1869 = vst [vmem:[#allocation4 + $0x8f0] sm:$0xff] %v1865
  %1870 = vst [vmem:[#allocation4 + $0x8f8] sm:$0xff] %v1866
  %v1871 = vld [vmem:[%s2] sm:$0xff]
  %v1872 = vld [vmem:[%s2 + $0x8] sm:$0xff]
  %v1873 = vld [vmem:[%s2 + $0x10] sm:$0xff]
  %v1874 = vld [vmem:[%s2 + $0x18] sm:$0xff]
  %v1875 = vld [vmem:[%s2 + $0x20] sm:$0xff]
  %v1876 = vld [vmem:[#allocation4] sm:$0xff]
  %v1877 = vld [vmem:[#allocation4 + $0x8] sm:$0xff]
  %v1878 = vld [vmem:[#allocation4 + $0x10] sm:$0xff]
  %v1879 = vld [vmem:[#allocation4 + $0x18] sm:$0xff]
  %v1880 = vld [vmem:[#allocation4 + $0x20] sm:$0xff]
  %v1881 = vld [vmem:[#allocation4 + $0x28] sm:$0xff]
  %v1882 = vld [vmem:[#allocation4 + $0x30] sm:$0xff]
  %v1883 = vld [vmem:[#allocation4 + $0x38] sm:$0xff]
  %v1884 = vld [vmem:[#allocation4 + $0x40] sm:$0xff]
  %v1885 = vld [vmem:[#allocation4 + $0x48] sm:$0xff]
  %v1886 = vld [vmem:[#allocation4 + $0x50] sm:$0xff]
  %v1887 = vld [vmem:[#allocation4 + $0x58] sm:$0xff]
  %v1888 = vld [vmem:[#allocation4 + $0x60] sm:$0xff]
  %v1889 = vld [vmem:[#allocation4 + $0x68] sm:$0xff]
  %v1890 = vld [vmem:[#allocation4 + $0x70] sm:$0xff]
  %v1891 = vld [vmem:[#allocation4 + $0x78] sm:$0xff]
  %v1892 = vld [vmem:[#allocation4 + $0x80] sm:$0xff]
  %v1893 = vld [vmem:[#allocation4 + $0x88] sm:$0xff]
  %v1894 = vld [vmem:[#allocation4 + $0x90] sm:$0xff]
  %v1895 = vld [vmem:[#allocation4 + $0x98] sm:$0xff]
  %v1896 = vld [vmem:[#allocation4 + $0xa0] sm:$0xff]
  %v1897 = vld [vmem:[#allocation4 + $0xa8] sm:$0xff]
  %v1898 = vld [vmem:[#allocation4 + $0xb0] sm:$0xff]
  %v1899 = vld [vmem:[#allocation4 + $0xb8] sm:$0xff]
  %v1900 = vld [vmem:[#allocation4 + $0xc0] sm:$0xff]
  %v1901 = vld [vmem:[#allocation4 + $0xc8] sm:$0xff]
  %v1902 = vld [vmem:[#allocation4 + $0xd0] sm:$0xff]
  %v1903 = vld [vmem:[#allocation4 + $0xd8] sm:$0xff]
  %v1904 = vld [vmem:[#allocation4 + $0xe0] sm:$0xff]
  %v1905 = vld [vmem:[#allocation4 + $0xe8] sm:$0xff]
  %v1906 = vld [vmem:[#allocation4 + $0xf0] sm:$0xff]
  %v1907 = vld [vmem:[#allocation4 + $0xf8] sm:$0xff]
  %v1908 = vld [vmem:[#allocation4 + $0x100] sm:$0xff]
  %v1909 = vld [vmem:[#allocation4 + $0x108] sm:$0xff]
  %v1910 = vld [vmem:[#allocation4 + $0x110] sm:$0xff]
  %v1911 = vld [vmem:[#allocation4 + $0x118] sm:$0xff]
  %v1912 = vld [vmem:[#allocation4 + $0x120] sm:$0xff]
  %v1913 = vld [vmem:[#allocation4 + $0x128] sm:$0xff]
  %v1914 = vld [vmem:[#allocation4 + $0x130] sm:$0xff]
  %v1915 = vld [vmem:[#allocation4 + $0x138] sm:$0xff]
  %v1916 = vld [vmem:[#allocation4 + $0x140] sm:$0xff]
  %v1917 = vld [vmem:[#allocation4 + $0x148] sm:$0xff]
  %v1918 = vld [vmem:[#allocation4 + $0x150] sm:$0xff]
  %v1919 = vld [vmem:[#allocation4 + $0x158] sm:$0xff]
  %v1920 = vld [vmem:[#allocation4 + $0x160] sm:$0xff]
  %v1921 = vld [vmem:[#allocation4 + $0x168] sm:$0xff]
  %v1922 = vld [vmem:[#allocation4 + $0x170] sm:$0xff]
  %v1923 = vld [vmem:[#allocation4 + $0x178] sm:$0xff]
  %v1924 = vld [vmem:[#allocation4 + $0x180] sm:$0xff]
  %v1925 = vld [vmem:[#allocation4 + $0x188] sm:$0xff]
  %v1926 = vld [vmem:[#allocation4 + $0x190] sm:$0xff]
  %v1927 = vld [vmem:[#allocation4 + $0x198] sm:$0xff]
  %v1928 = vld [vmem:[#allocation4 + $0x1a0] sm:$0xff]
  %v1929 = vld [vmem:[#allocation4 + $0x1a8] sm:$0xff]
  %v1930 = vld [vmem:[#allocation4 + $0x1b0] sm:$0xff]
  %v1931 = vld [vmem:[#allocation4 + $0x1b8] sm:$0xff]
  %v1932 = vld [vmem:[#allocation4 + $0x1c0] sm:$0xff]
  %v1933 = vld [vmem:[#allocation4 + $0x1c8] sm:$0xff]
  %v1934 = vld [vmem:[#allocation4 + $0x1d0] sm:$0xff]
  %v1935 = vld [vmem:[#allocation4 + $0x1d8] sm:$0xff]
  %v1936 = vld [vmem:[#allocation4 + $0x1e0] sm:$0xff]
  %v1937 = vld [vmem:[#allocation4 + $0x1e8] sm:$0xff]
  %v1938 = vld [vmem:[#allocation4 + $0x1f0] sm:$0xff]
  %v1939 = vld [vmem:[#allocation4 + $0x1f8] sm:$0xff]
  %v1940 = vld [vmem:[#allocation4 + $0x200] sm:$0xff]
  %v1941 = vld [vmem:[#allocation4 + $0x208] sm:$0xff]
  %v1942 = vld [vmem:[#allocation4 + $0x210] sm:$0xff]
  %v1943 = vld [vmem:[#allocation4 + $0x218] sm:$0xff]
  %v1944 = vld [vmem:[#allocation4 + $0x220] sm:$0xff]
  %v1945 = vld [vmem:[#allocation4 + $0x228] sm:$0xff]
  %v1946 = vld [vmem:[#allocation4 + $0x230] sm:$0xff]
  %v1947 = vld [vmem:[#allocation4 + $0x238] sm:$0xff]
  %v1948 = vld [vmem:[#allocation4 + $0x240] sm:$0xff]
  %v1949 = vld [vmem:[#allocation4 + $0x248] sm:$0xff]
  %v1950 = vld [vmem:[#allocation4 + $0x250] sm:$0xff]
  %v1951 = vld [vmem:[#allocation4 + $0x258] sm:$0xff]
  %v1952 = vld [vmem:[#allocation4 + $0x260] sm:$0xff]
  %v1953 = vld [vmem:[#allocation4 + $0x268] sm:$0xff]
  %v1954 = vld [vmem:[#allocation4 + $0x270] sm:$0xff]
  %v1955 = vld [vmem:[#allocation4 + $0x278] sm:$0xff]
  %v1956 = vld [vmem:[#allocation4 + $0x280] sm:$0xff]
  %v1957 = vld [vmem:[#allocation4 + $0x288] sm:$0xff]
  %v1958 = vld [vmem:[#allocation4 + $0x290] sm:$0xff]
  %v1959 = vld [vmem:[#allocation4 + $0x298] sm:$0xff]
  %v1960 = vld [vmem:[#allocation4 + $0x2a0] sm:$0xff]
  %v1961 = vld [vmem:[#allocation4 + $0x2a8] sm:$0xff]
  %v1962 = vld [vmem:[#allocation4 + $0x2b0] sm:$0xff]
  %v1963 = vld [vmem:[#allocation4 + $0x2b8] sm:$0xff]
  %v1964 = vld [vmem:[#allocation4 + $0x2c0] sm:$0xff]
  %v1965 = vld [vmem:[#allocation4 + $0x2c8] sm:$0xff]
  %v1966 = vld [vmem:[#allocation4 + $0x2d0] sm:$0xff]
  %v1967 = vld [vmem:[#allocation4 + $0x2d8] sm:$0xff]
  %v1968 = vld [vmem:[#allocation4 + $0x2e0] sm:$0xff]
  %v1969 = vld [vmem:[#allocation4 + $0x2e8] sm:$0xff]
  %v1970 = vld [vmem:[#allocation4 + $0x2f0] sm:$0xff]
  %v1971 = vld [vmem:[#allocation4 + $0x2f8] sm:$0xff]
  %v1972 = vld [vmem:[#allocation4 + $0x300] sm:$0xff]
  %v1973 = vld [vmem:[#allocation4 + $0x308] sm:$0xff]
  %v1974 = vld [vmem:[#allocation4 + $0x310] sm:$0xff]
  %v1975 = vld [vmem:[#allocation4 + $0x318] sm:$0xff]
  %v1976 = vld [vmem:[#allocation4 + $0x320] sm:$0xff]
  %v1977 = vld [vmem:[#allocation4 + $0x328] sm:$0xff]
  %v1978 = vld [vmem:[#allocation4 + $0x330] sm:$0xff]
  %v1979 = vld [vmem:[#allocation4 + $0x338] sm:$0xff]
  %v1980 = vld [vmem:[#allocation4 + $0x340] sm:$0xff]
  %v1981 = vld [vmem:[#allocation4 + $0x348] sm:$0xff]
  %v1982 = vld [vmem:[#allocation4 + $0x350] sm:$0xff]
  %v1983 = vld [vmem:[#allocation4 + $0x358] sm:$0xff]
  %v1984 = vld [vmem:[#allocation4 + $0x360] sm:$0xff]
  %v1985 = vld [vmem:[#allocation4 + $0x368] sm:$0xff]
  %v1986 = vld [vmem:[#allocation4 + $0x370] sm:$0xff]
  %v1987 = vld [vmem:[#allocation4 + $0x378] sm:$0xff]
  %v1988 = vld [vmem:[#allocation4 + $0x380] sm:$0xff]
  %v1989 = vld [vmem:[#allocation4 + $0x388] sm:$0xff]
  %v1990 = vld [vmem:[#allocation4 + $0x390] sm:$0xff]
  %v1991 = vld [vmem:[#allocation4 + $0x398] sm:$0xff]
  %v1992 = vld [vmem:[#allocation4 + $0x3a0] sm:$0xff]
  %v1993 = vld [vmem:[#allocation4 + $0x3a8] sm:$0xff]
  %v1994 = vld [vmem:[#allocation4 + $0x3b0] sm:$0xff]
  %v1995 = vld [vmem:[#allocation4 + $0x3b8] sm:$0xff]
  %v1996 = vld [vmem:[#allocation4 + $0x3c0] sm:$0xff]
  %v1997 = vld [vmem:[#allocation4 + $0x3c8] sm:$0xff]
  %v1998 = vld [vmem:[#allocation4 + $0x3d0] sm:$0xff]
  %v1999 = vld [vmem:[#allocation4 + $0x3d8] sm:$0xff]
  %v2000 = vld [vmem:[#allocation4 + $0x3e0] sm:$0xff]
  %v2001 = vld [vmem:[#allocation4 + $0x3e8] sm:$0xff]
  %v2002 = vld [vmem:[#allocation4 + $0x3f0] sm:$0xff]
  %v2003 = vld [vmem:[#allocation4 + $0x3f8] sm:$0xff]
  %v2004 = vld [vmem:[#allocation4 + $0x400] sm:$0xff]
  %v2005 = vld [vmem:[#allocation4 + $0x408] sm:$0xff]
  %v2006 = vld [vmem:[#allocation4 + $0x410] sm:$0xff]
  %v2007 = vld [vmem:[#allocation4 + $0x418] sm:$0xff]
  %v2008 = vld [vmem:[#allocation4 + $0x420] sm:$0xff]
  %v2009 = vld [vmem:[#allocation4 + $0x428] sm:$0xff]
  %v2010 = vld [vmem:[#allocation4 + $0x430] sm:$0xff]
  %v2011 = vld [vmem:[#allocation4 + $0x438] sm:$0xff]
  %v2012 = vld [vmem:[#allocation4 + $0x440] sm:$0xff]
  %v2013 = vld [vmem:[#allocation4 + $0x448] sm:$0xff]
  %v2014 = vld [vmem:[#allocation4 + $0x450] sm:$0xff]
  %v2015 = vld [vmem:[#allocation4 + $0x458] sm:$0xff]
  %v2016 = vld [vmem:[#allocation4 + $0x460] sm:$0xff]
  %v2017 = vld [vmem:[#allocation4 + $0x468] sm:$0xff]
  %v2018 = vld [vmem:[#allocation4 + $0x470] sm:$0xff]
  %v2019 = vld [vmem:[#allocation4 + $0x478] sm:$0xff]
  %v2020 = vld [vmem:[#allocation4 + $0x480] sm:$0xff]
  %v2021 = vld [vmem:[#allocation4 + $0x488] sm:$0xff]
  %v2022 = vld [vmem:[#allocation4 + $0x490] sm:$0xff]
  %v2023 = vld [vmem:[#allocation4 + $0x498] sm:$0xff]
  %v2024 = vld [vmem:[#allocation4 + $0x4a0] sm:$0xff]
  %v2025 = vld [vmem:[#allocation4 + $0x4a8] sm:$0xff]
  %v2026 = vld [vmem:[#allocation4 + $0x4b0] sm:$0xff]
  %v2027 = vld [vmem:[#allocation4 + $0x4b8] sm:$0xff]
  %v2028 = vld [vmem:[#allocation4 + $0x4c0] sm:$0xff]
  %v2029 = vld [vmem:[#allocation4 + $0x4c8] sm:$0xff]
  %v2030 = vld [vmem:[#allocation4 + $0x4d0] sm:$0xff]
  %v2031 = vld [vmem:[#allocation4 + $0x4d8] sm:$0xff]
  %v2032 = vld [vmem:[#allocation4 + $0x4e0] sm:$0xff]
  %v2033 = vld [vmem:[#allocation4 + $0x4e8] sm:$0xff]
  %v2034 = vld [vmem:[#allocation4 + $0x4f0] sm:$0xff]
  %v2035 = vld [vmem:[#allocation4 + $0x4f8] sm:$0xff]
  %v2036 = vld [vmem:[#allocation4 + $0x500] sm:$0xff]
  %v2037 = vld [vmem:[#allocation4 + $0x508] sm:$0xff]
  %v2038 = vld [vmem:[#allocation4 + $0x510] sm:$0xff]
  %v2039 = vld [vmem:[#allocation4 + $0x518] sm:$0xff]
  %v2040 = vld [vmem:[#allocation4 + $0x520] sm:$0xff]
  %v2041 = vld [vmem:[#allocation4 + $0x528] sm:$0xff]
  %v2042 = vld [vmem:[#allocation4 + $0x530] sm:$0xff]
  %v2043 = vld [vmem:[#allocation4 + $0x538] sm:$0xff]
  %v2044 = vld [vmem:[#allocation4 + $0x540] sm:$0xff]
  %v2045 = vld [vmem:[#allocation4 + $0x548] sm:$0xff]
  %v2046 = vld [vmem:[#allocation4 + $0x550] sm:$0xff]
  %v2047 = vld [vmem:[#allocation4 + $0x558] sm:$0xff]
  %v2048 = vld [vmem:[#allocation4 + $0x560] sm:$0xff]
  %v2049 = vld [vmem:[#allocation4 + $0x568] sm:$0xff]
  %v2050 = vld [vmem:[#allocation4 + $0x570] sm:$0xff]
  %v2051 = vld [vmem:[#allocation4 + $0x578] sm:$0xff]
  %v2052 = vld [vmem:[#allocation4 + $0x580] sm:$0xff]
  %v2053 = vld [vmem:[#allocation4 + $0x588] sm:$0xff]
  %v2054 = vld [vmem:[#allocation4 + $0x590] sm:$0xff]
  %v2055 = vld [vmem:[#allocation4 + $0x598] sm:$0xff]
  %v2056 = vld [vmem:[#allocation4 + $0x5a0] sm:$0xff]
  %v2057 = vld [vmem:[#allocation4 + $0x5a8] sm:$0xff]
  %v2058 = vld [vmem:[#allocation4 + $0x5b0] sm:$0xff]
  %v2059 = vld [vmem:[#allocation4 + $0x5b8] sm:$0xff]
  %v2060 = vld [vmem:[#allocation4 + $0x5c0] sm:$0xff]
  %v2061 = vld [vmem:[#allocation4 + $0x5c8] sm:$0xff]
  %v2062 = vld [vmem:[#allocation4 + $0x5d0] sm:$0xff]
  %v2063 = vld [vmem:[#allocation4 + $0x5d8] sm:$0xff]
  %v2064 = vld [vmem:[#allocation4 + $0x5e0] sm:$0xff]
  %v2065 = vld [vmem:[#allocation4 + $0x5e8] sm:$0xff]
  %v2066 = vld [vmem:[#allocation4 + $0x5f0] sm:$0xff]
  %v2067 = vld [vmem:[#allocation4 + $0x5f8] sm:$0xff]
  %v2068 = vld [vmem:[#allocation4 + $0x600] sm:$0xff]
  %v2069 = vld [vmem:[#allocation4 + $0x608] sm:$0xff]
  %v2070 = vld [vmem:[#allocation4 + $0x610] sm:$0xff]
  %v2071 = vld [vmem:[#allocation4 + $0x618] sm:$0xff]
  %v2072 = vld [vmem:[#allocation4 + $0x620] sm:$0xff]
  %v2073 = vld [vmem:[#allocation4 + $0x628] sm:$0xff]
  %v2074 = vld [vmem:[#allocation4 + $0x630] sm:$0xff]
  %v2075 = vld [vmem:[#allocation4 + $0x638] sm:$0xff]
  %v2076 = vld [vmem:[#allocation4 + $0x640] sm:$0xff]
  %v2077 = vld [vmem:[#allocation4 + $0x648] sm:$0xff]
  %v2078 = vld [vmem:[#allocation4 + $0x650] sm:$0xff]
  %v2079 = vld [vmem:[#allocation4 + $0x658] sm:$0xff]
  %v2080 = vld [vmem:[#allocation4 + $0x660] sm:$0xff]
  %v2081 = vld [vmem:[#allocation4 + $0x668] sm:$0xff]
  %v2082 = vld [vmem:[#allocation4 + $0x670] sm:$0xff]
  %v2083 = vld [vmem:[#allocation4 + $0x678] sm:$0xff]
  %v2084 = vld [vmem:[#allocation4 + $0x680] sm:$0xff]
  %v2085 = vld [vmem:[#allocation4 + $0x688] sm:$0xff]
  %v2086 = vld [vmem:[#allocation4 + $0x690] sm:$0xff]
  %v2087 = vld [vmem:[#allocation4 + $0x698] sm:$0xff]
  %v2088 = vld [vmem:[#allocation4 + $0x6a0] sm:$0xff]
  %v2089 = vld [vmem:[#allocation4 + $0x6a8] sm:$0xff]
  %v2090 = vld [vmem:[#allocation4 + $0x6b0] sm:$0xff]
  %v2091 = vld [vmem:[#allocation4 + $0x6b8] sm:$0xff]
  %v2092 = vld [vmem:[#allocation4 + $0x6c0] sm:$0xff]
  %v2093 = vld [vmem:[#allocation4 + $0x6c8] sm:$0xff]
  %v2094 = vld [vmem:[#allocation4 + $0x6d0] sm:$0xff]
  %v2095 = vld [vmem:[#allocation4 + $0x6d8] sm:$0xff]
  %v2096 = vld [vmem:[#allocation4 + $0x6e0] sm:$0xff]
  %v2097 = vld [vmem:[#allocation4 + $0x6e8] sm:$0xff]
  %v2098 = vld [vmem:[#allocation4 + $0x6f0] sm:$0xff]
  %v2099 = vld [vmem:[#allocation4 + $0x6f8] sm:$0xff]
  %v2100 = vld [vmem:[#allocation4 + $0x700] sm:$0xff]
  %v2101 = vld [vmem:[#allocation4 + $0x708] sm:$0xff]
  %v2102 = vld [vmem:[#allocation4 + $0x710] sm:$0xff]
  %v2103 = vld [vmem:[#allocation4 + $0x718] sm:$0xff]
  %v2104 = vld [vmem:[#allocation4 + $0x720] sm:$0xff]
  %v2105 = vld [vmem:[#allocation4 + $0x728] sm:$0xff]
  %v2106 = vld [vmem:[#allocation4 + $0x730] sm:$0xff]
  %v2107 = vld [vmem:[#allocation4 + $0x738] sm:$0xff]
  %v2108 = vld [vmem:[#allocation4 + $0x740] sm:$0xff]
  %v2109 = vld [vmem:[#allocation4 + $0x748] sm:$0xff]
  %v2110 = vld [vmem:[#allocation4 + $0x750] sm:$0xff]
  %v2111 = vld [vmem:[#allocation4 + $0x758] sm:$0xff]
  %v2112 = vld [vmem:[#allocation4 + $0x760] sm:$0xff]
  %v2113 = vld [vmem:[#allocation4 + $0x768] sm:$0xff]
  %v2114 = vld [vmem:[#allocation4 + $0x770] sm:$0xff]
  %v2115 = vld [vmem:[#allocation4 + $0x778] sm:$0xff]
  %v2116 = vld [vmem:[#allocation4 + $0x780] sm:$0xff]
  %v2117 = vld [vmem:[#allocation4 + $0x788] sm:$0xff]
  %v2118 = vld [vmem:[#allocation4 + $0x790] sm:$0xff]
  %v2119 = vld [vmem:[#allocation4 + $0x798] sm:$0xff]
  %v2120 = vld [vmem:[#allocation4 + $0x7a0] sm:$0xff]
  %v2121 = vld [vmem:[#allocation4 + $0x7a8] sm:$0xff]
  %v2122 = vld [vmem:[#allocation4 + $0x7b0] sm:$0xff]
  %v2123 = vld [vmem:[#allocation4 + $0x7b8] sm:$0xff]
  %v2124 = vld [vmem:[#allocation4 + $0x7c0] sm:$0xff]
  %v2125 = vld [vmem:[#allocation4 + $0x7c8] sm:$0xff]
  %v2126 = vld [vmem:[#allocation4 + $0x7d0] sm:$0xff]
  %v2127 = vld [vmem:[#allocation4 + $0x7d8] sm:$0xff]
  %v2128 = vld [vmem:[#allocation4 + $0x7e0] sm:$0xff]
  %v2129 = vld [vmem:[#allocation4 + $0x7e8] sm:$0xff]
  %v2130 = vld [vmem:[#allocation4 + $0x7f0] sm:$0xff]
  %v2131 = vld [vmem:[#allocation4 + $0x7f8] sm:$0xff]
  %v2132 = vld [vmem:[#allocation4 + $0x800] sm:$0xff]
  %v2133 = vld [vmem:[#allocation4 + $0x808] sm:$0xff]
  %v2134 = vld [vmem:[#allocation4 + $0x810] sm:$0xff]
  %v2135 = vld [vmem:[#allocation4 + $0x818] sm:$0xff]
  %v2136 = vld [vmem:[#allocation4 + $0x820] sm:$0xff]
  %v2137 = vld [vmem:[#allocation4 + $0x828] sm:$0xff]
  %v2138 = vld [vmem:[#allocation4 + $0x830] sm:$0xff]
  %v2139 = vld [vmem:[#allocation4 + $0x838] sm:$0xff]
  %v2140 = vld [vmem:[#allocation4 + $0x840] sm:$0xff]
  %v2141 = vld [vmem:[#allocation4 + $0x848] sm:$0xff]
  %v2142 = vld [vmem:[#allocation4 + $0x850] sm:$0xff]
  %v2143 = vld [vmem:[#allocation4 + $0x858] sm:$0xff]
  %v2144 = vld [vmem:[#allocation4 + $0x860] sm:$0xff]
  %v2145 = vld [vmem:[#allocation4 + $0x868] sm:$0xff]
  %v2146 = vld [vmem:[#allocation4 + $0x870] sm:$0xff]
  %v2147 = vld [vmem:[#allocation4 + $0x878] sm:$0xff]
  %v2148 = vld [vmem:[#allocation4 + $0x880] sm:$0xff]
  %v2149 = vld [vmem:[#allocation4 + $0x888] sm:$0xff]
  %v2150 = vld [vmem:[#allocation4 + $0x890] sm:$0xff]
  %v2151 = vld [vmem:[#allocation4 + $0x898] sm:$0xff]
  %v2152 = vld [vmem:[#allocation4 + $0x8a0] sm:$0xff]
  %v2153 = vld [vmem:[#allocation4 + $0x8a8] sm:$0xff]
  %v2154 = vld [vmem:[#allocation4 + $0x8b0] sm:$0xff]
  %v2155 = vld [vmem:[#allocation4 + $0x8b8] sm:$0xff]
  %v2156 = vld [vmem:[#allocation4 + $0x8c0] sm:$0xff]
  %v2157 = vld [vmem:[#allocation4 + $0x8c8] sm:$0xff]
  %v2158 = vld [vmem:[#allocation4 + $0x8d0] sm:$0xff]
  %v2159 = vld [vmem:[#allocation4 + $0x8d8] sm:$0xff]
  %v2160 = vld [vmem:[#allocation4 + $0x8e0] sm:$0xff]
  %v2161 = vld [vmem:[#allocation4 + $0x8e8] sm:$0xff]
  %v2162 = vld [vmem:[#allocation4 + $0x8f0] sm:$0xff]
  %v2163 = vld [vmem:[#allocation4 + $0x8f8] sm:$0xff]
  %v2164 = vld [vmem:[%s3] sm:$0xff]
  %2166 = vset.pattern.permute.xlu0 0
  %2167 = vperm.xlu0 %2166, %v2164
  %v2168 = vpop.permute.xlu0 %2167
  %v2171 = vsel %vm847, %v1875, 0
  %2173 = vmatprep.subr.mxu0 %v1937
  %2174 = vmatpush1.msra.mxu0 %v1936
  %2175 = vmatprep.subr.mxu0 %v1933
  %2176 = vmatpush1.msra.mxu0 %v1932
  %2177 = vmatprep.subr.mxu0 %v1929
  %2178 = vmatpush1.msra.mxu0 %v1928
  %2179 = vmatprep.subr.mxu0 %v1925
  %2180 = vmatpush1.msra.mxu0 %v1924
  %2181 = vmatprep.subr.mxu0 %v1921
  %2182 = vmatpush1.msra.mxu0 %v1920
  %2183 = vmatprep.subr.mxu0 %v1917
  %2184 = vmatpush1.msra.mxu0 %v1916
  %2185 = vmatprep.subr.mxu0 %v1913
  %2186 = vmatpush1.msra.mxu0 %v1912
  %2187 = vmatprep.subr.mxu0 %v1909
  %2188 = vmatpush1.msra.mxu0 %v1908
  %2189 = vmatprep.subr.mxu0 %v1905
  %2190 = vmatpush1.msra.mxu0 %v1904
  %2191 = vmatprep.subr.mxu0 %v1901
  %2192 = vmatpush1.msra.mxu0 %v1900
  %2193 = vmatprep.subr.mxu0 %v1897
  %2194 = vmatpush1.msra.mxu0 %v1896
  %2195 = vmatprep.subr.mxu0 %v1893
  %2196 = vmatpush1.msra.mxu0 %v1892
  %2197 = vmatprep.subr.mxu0 %v1889
  %2198 = vmatpush1.msra.mxu0 %v1888
  %2199 = vmatprep.subr.mxu0 %v1885
  %2200 = vmatpush1.msra.mxu0 %v1884
  %2201 = vmatprep.subr.mxu0 %v1881
  %2202 = vmatpush1.msra.mxu0 %v1880
  %2203 = vmatprep.subr.mxu0 %v1877
  %2204 = vmatpush1.msra.mxu0 %v1876
  %2205 = vmatprep.subr.mxu0 %v2001
  %2206 = vmatpush2.msra.mxu0 %v2000
  %2207 = vmatprep.subr.mxu0 %v1997
  %2208 = vmatpush2.msra.mxu0 %v1996
  %2209 = vmatprep.subr.mxu0 %v1993
  %2210 = vmatpush2.msra.mxu0 %v1992
  %2211 = vmatprep.subr.mxu0 %v1989
  %2212 = vmatpush2.msra.mxu0 %v1988
  %2213 = vmatprep.subr.mxu0 %v1985
  %2214 = vmatpush2.msra.mxu0 %v1984
  %2215 = vmatprep.subr.mxu0 %v1981
  %2216 = vmatpush2.msra.mxu0 %v1980
  %2217 = vmatprep.subr.mxu0 %v1977
  %2218 = vmatpush2.msra.mxu0 %v1976
  %2219 = vmatprep.subr.mxu0 %v1973
  %2220 = vmatpush2.msra.mxu0 %v1972
  %2221 = vmatprep.subr.mxu0 %v1969
  %2222 = vmatpush2.msra.mxu0 %v1968
  %2223 = vmatprep.subr.mxu0 %v1965
  %2224 = vmatpush2.msra.mxu0 %v1964
  %2225 = vmatprep.subr.mxu0 %v1961
  %2226 = vmatpush2.msra.mxu0 %v1960
  %2227 = vmatprep.subr.mxu0 %v1957
  %2228 = vmatpush2.msra.mxu0 %v1956
  %2229 = vmatprep.subr.mxu0 %v1953
  %2230 = vmatpush2.msra.mxu0 %v1952
  %2231 = vmatprep.subr.mxu0 %v1949
  %2232 = vmatpush2.msra.mxu0 %v1948
  %2233 = vmatprep.subr.mxu0 %v1945
  %2234 = vmatpush2.msra.mxu0 %v1944
  %2235 = vmatprep.subr.mxu0 %v1941
  %2236 = vmatpush2.msra.mxu0 %v1940
  %2237 = vmatprep.mubr.f32.mxu0 %v1872
  %2238 = vmatmul.mubr.f32.gmra.mxu0 %v1871
  %v2239 = vpop.f32.mrf.mxu0
  %v2240 = vadd.f32 %v2168, %v2239
  %v2241 = vpop.f32.mrf.mxu0
  %v2242 = vadd.f32 %v2168, %v2241
  %2243 = vdwg.mxu0
  %2244 = vmatprep.subr.mxu0 %v2065
  %2245 = vmatpush1.msra.mxu0 %v2064
  %2246 = vmatprep.subr.mxu0 %v2061
  %2247 = vmatpush1.msra.mxu0 %v2060
  %2248 = vmatprep.subr.mxu0 %v2057
  %2249 = vmatpush1.msra.mxu0 %v2056
  %2250 = vmatprep.subr.mxu0 %v2053
  %2251 = vmatpush1.msra.mxu0 %v2052
  %2252 = vmatprep.subr.mxu0 %v2049
  %2253 = vmatpush1.msra.mxu0 %v2048
  %2254 = vmatprep.subr.mxu0 %v2045
  %2255 = vmatpush1.msra.mxu0 %v2044
  %2256 = vmatprep.subr.mxu0 %v2041
  %2257 = vmatpush1.msra.mxu0 %v2040
  %2258 = vmatprep.subr.mxu0 %v2037
  %2259 = vmatpush1.msra.mxu0 %v2036
  %2260 = vmatprep.subr.mxu0 %v2033
  %2261 = vmatpush1.msra.mxu0 %v2032
  %2262 = vmatprep.subr.mxu0 %v2029
  %2263 = vmatpush1.msra.mxu0 %v2028
  %2264 = vmatprep.subr.mxu0 %v2025
  %2265 = vmatpush1.msra.mxu0 %v2024
  %2266 = vmatprep.subr.mxu0 %v2021
  %2267 = vmatpush1.msra.mxu0 %v2020
  %2268 = vmatprep.subr.mxu0 %v2017
  %2269 = vmatpush1.msra.mxu0 %v2016
  %2270 = vmatprep.subr.mxu0 %v2013
  %2271 = vmatpush1.msra.mxu0 %v2012
  %2272 = vmatprep.subr.mxu0 %v2009
  %2273 = vmatpush1.msra.mxu0 %v2008
  %2274 = vmatprep.subr.mxu0 %v2005
  %2275 = vmatpush1.msra.mxu0 %v2004
  %2276 = vmatprep.subr.mxu0 %v2129
  %2277 = vmatpush2.msra.mxu0 %v2128
  %2278 = vmatprep.subr.mxu0 %v2125
  %2279 = vmatpush2.msra.mxu0 %v2124
  %2280 = vmatprep.subr.mxu0 %v2121
  %2281 = vmatpush2.msra.mxu0 %v2120
  %2282 = vmatprep.subr.mxu0 %v2117
  %2283 = vmatpush2.msra.mxu0 %v2116
  %2284 = vmatprep.subr.mxu0 %v2113
  %2285 = vmatpush2.msra.mxu0 %v2112
  %2286 = vmatprep.subr.mxu0 %v2109
  %2287 = vmatpush2.msra.mxu0 %v2108
  %2288 = vmatprep.subr.mxu0 %v2105
  %2289 = vmatpush2.msra.mxu0 %v2104
  %2290 = vmatprep.subr.mxu0 %v2101
  %2291 = vmatpush2.msra.mxu0 %v2100
  %2292 = vmatprep.subr.mxu0 %v2097
  %2293 = vmatpush2.msra.mxu0 %v2096
  %2294 = vmatprep.subr.mxu0 %v2093
  %2295 = vmatpush2.msra.mxu0 %v2092
  %2296 = vmatprep.subr.mxu0 %v2089
  %2297 = vmatpush2.msra.mxu0 %v2088
  %2298 = vmatprep.subr.mxu0 %v2085
  %2299 = vmatpush2.msra.mxu0 %v2084
  %2300 = vmatprep.subr.mxu0 %v2081
  %2301 = vmatpush2.msra.mxu0 %v2080
  %2302 = vmatprep.subr.mxu0 %v2077
  %2303 = vmatpush2.msra.mxu0 %v2076
  %2304 = vmatprep.subr.mxu0 %v2073
  %2305 = vmatpush2.msra.mxu0 %v2072
  %2306 = vmatprep.subr.mxu0 %v2069
  %2307 = vmatpush2.msra.mxu0 %v2068
  %2308 = vmatprep.mubr.f32.mxu0 %v1874
  %2309 = vmatmul.mubr.f32.gmra.mxu0 %v1873
  %v2310 = vpop.f32.mrf.mxu0
  %v2311 = vadd.f32 %v2240, %v2310
  %v2312 = vpop.f32.mrf.mxu0
  %v2313 = vadd.f32 %v2242, %v2312
  %2314 = vdwg.mxu0
  %2315 = vmatprep.subr.mxu0 0.0
  %2316 = vmatpush1.msra.mxu0 0.0
  %2317 = vmatprep.subr.mxu0 0.0
  %2318 = vmatpush1.msra.mxu0 0.0
  %2319 = vmatprep.subr.mxu0 0.0
  %2320 = vmatpush1.msra.mxu0 0.0
  %2321 = vmatprep.subr.mxu0 0.0
  %2322 = vmatpush1.msra.mxu0 0.0
  %2323 = vmatprep.subr.mxu0 0.0
  %2324 = vmatpush1.msra.mxu0 0.0
  %2325 = vmatprep.subr.mxu0 0.0
  %2326 = vmatpush1.msra.mxu0 0.0
  %2327 = vmatprep.subr.mxu0 0.0
  %2328 = vmatpush1.msra.mxu0 0.0
  %2329 = vmatprep.subr.mxu0 0.0
  %2330 = vmatpush1.msra.mxu0 0.0
  %2331 = vmatprep.subr.mxu0 %v2161
  %2332 = vmatpush1.msra.mxu0 %v2160
  %2333 = vmatprep.subr.mxu0 %v2157
  %2334 = vmatpush1.msra.mxu0 %v2156
  %2335 = vmatprep.subr.mxu0 %v2153
  %2336 = vmatpush1.msra.mxu0 %v2152
  %2337 = vmatprep.subr.mxu0 %v2149
  %2338 = vmatpush1.msra.mxu0 %v2148
  %2339 = vmatprep.subr.mxu0 %v2145
  %2340 = vmatpush1.msra.mxu0 %v2144
  %2341 = vmatprep.subr.mxu0 %v2141
  %2342 = vmatpush1.msra.mxu0 %v2140
  %2343 = vmatprep.subr.mxu0 %v2137
  %2344 = vmatpush1.msra.mxu0 %v2136
  %2345 = vmatprep.subr.mxu0 %v2133
  %2346 = vmatpush1.msra.mxu0 %v2132
  %2347 = vmatprep.subr.mxu0 0.0
  %2348 = vmatpush2.msra.mxu0 0.0
  %2349 = vmatprep.subr.mxu0 0.0
  %2350 = vmatpush2.msra.mxu0 0.0
  %2351 = vmatprep.subr.mxu0 0.0
  %2352 = vmatpush2.msra.mxu0 0.0
  %2353 = vmatprep.subr.mxu0 0.0
  %2354 = vmatpush2.msra.mxu0 0.0
  %2355 = vmatprep.subr.mxu0 0.0
  %2356 = vmatpush2.msra.mxu0 0.0
  %2357 = vmatprep.subr.mxu0 0.0
  %2358 = vmatpush2.msra.mxu0 0.0
  %2359 = vmatprep.subr.mxu0 0.0
  %2360 = vmatpush2.msra.mxu0 0.0
  %2361 = vmatprep.subr.mxu0 0.0
  %2362 = vmatpush2.msra.mxu0 0.0
  %2363 = vmatprep.subr.mxu0 0.0
  %2364 = vmatpush2.msra.mxu0 0.0
  %2365 = vmatprep.subr.mxu0 0.0
  %2366 = vmatpush2.msra.mxu0 0.0
  %2367 = vmatprep.subr.mxu0 0.0
  %2368 = vmatpush2.msra.mxu0 0.0
  %2369 = vmatprep.subr.mxu0 0.0
  %2370 = vmatpush2.msra.mxu0 0.0
  %2371 = vmatprep.subr.mxu0 0.0
  %2372 = vmatpush2.msra.mxu0 0.0
  %2373 = vmatprep.subr.mxu0 0.0
  %2374 = vmatpush2.msra.mxu0 0.0
  %2375 = vmatprep.subr.mxu0 0.0
  %2376 = vmatpush2.msra.mxu0 0.0
  %2377 = vmatprep.subr.mxu0 0.0
  %2378 = vmatpush2.msra.mxu0 0.0
  %2379 = vmatprep.mubr.f32.mxu0 0.0
  %2380 = vmatmul.mubr.f32.gmra.mxu0 %v2171
  %v2381 = vpop.f32.mrf.mxu0
  %v2382 = vadd.f32 %v2311, %v2381
  %v2383 = vpop.f32.mrf.mxu0
  %v2384 = vadd.f32 %v2313, %v2383
  %2385 = vdwg.mxu0
  %2386 = vmatprep.subr.mxu0 %v1939
  %2387 = vmatpush1.msra.mxu0 %v1938
  %2388 = vmatprep.subr.mxu0 %v1935
  %2389 = vmatpush1.msra.mxu0 %v1934
  %2390 = vmatprep.subr.mxu0 %v1931
  %2391 = vmatpush1.msra.mxu0 %v1930
  %2392 = vmatprep.subr.mxu0 %v1927
  %2393 = vmatpush1.msra.mxu0 %v1926
  %2394 = vmatprep.subr.mxu0 %v1923
  %2395 = vmatpush1.msra.mxu0 %v1922
  %2396 = vmatprep.subr.mxu0 %v1919
  %2397 = vmatpush1.msra.mxu0 %v1918
  %2398 = vmatprep.subr.mxu0 %v1915
  %2399 = vmatpush1.msra.mxu0 %v1914
  %2400 = vmatprep.subr.mxu0 %v1911
  %2401 = vmatpush1.msra.mxu0 %v1910
  %2402 = vmatprep.subr.mxu0 %v1907
  %2403 = vmatpush1.msra.mxu0 %v1906
  %2404 = vmatprep.subr.mxu0 %v1903
  %2405 = vmatpush1.msra.mxu0 %v1902
  %2406 = vmatprep.subr.mxu0 %v1899
  %2407 = vmatpush1.msra.mxu0 %v1898
  %2408 = vmatprep.subr.mxu0 %v1895
  %2409 = vmatpush1.msra.mxu0 %v1894
  %2410 = vmatprep.subr.mxu0 %v1891
  %2411 = vmatpush1.msra.mxu0 %v1890
  %2412 = vmatprep.subr.mxu0 %v1887
  %2413 = vmatpush1.msra.mxu0 %v1886
  %2414 = vmatprep.subr.mxu0 %v1883
  %2415 = vmatpush1.msra.mxu0 %v1882
  %2416 = vmatprep.subr.mxu0 %v1879
  %2417 = vmatpush1.msra.mxu0 %v1878
  %2418 = vmatprep.subr.mxu0 %v2003
  %2419 = vmatpush2.msra.mxu0 %v2002
  %2420 = vmatprep.subr.mxu0 %v1999
  %2421 = vmatpush2.msra.mxu0 %v1998
  %2422 = vmatprep.subr.mxu0 %v1995
  %2423 = vmatpush2.msra.mxu0 %v1994
  %2424 = vmatprep.subr.mxu0 %v1991
  %2425 = vmatpush2.msra.mxu0 %v1990
  %2426 = vmatprep.subr.mxu0 %v1987
  %2427 = vmatpush2.msra.mxu0 %v1986
  %2428 = vmatprep.subr.mxu0 %v1983
  %2429 = vmatpush2.msra.mxu0 %v1982
  %2430 = vmatprep.subr.mxu0 %v1979
  %2431 = vmatpush2.msra.mxu0 %v1978
  %2432 = vmatprep.subr.mxu0 %v1975
  %2433 = vmatpush2.msra.mxu0 %v1974
  %2434 = vmatprep.subr.mxu0 %v1971
  %2435 = vmatpush2.msra.mxu0 %v1970
  %2436 = vmatprep.subr.mxu0 %v1967
  %2437 = vmatpush2.msra.mxu0 %v1966
  %2438 = vmatprep.subr.mxu0 %v1963
  %2439 = vmatpush2.msra.mxu0 %v1962
  %2440 = vmatprep.subr.mxu0 %v1959
  %2441 = vmatpush2.msra.mxu0 %v1958
  %2442 = vmatprep.subr.mxu0 %v1955
  %2443 = vmatpush2.msra.mxu0 %v1954
  %2444 = vmatprep.subr.mxu0 %v1951
  %2445 = vmatpush2.msra.mxu0 %v1950
  %2446 = vmatprep.subr.mxu0 %v1947
  %2447 = vmatpush2.msra.mxu0 %v1946
  %2448 = vmatprep.subr.mxu0 %v1943
  %2449 = vmatpush2.msra.mxu0 %v1942
  %2450 = vmatprep.mubr.f32.mxu0 %v1872
  %2451 = vmatmul.mubr.f32.gmra.mxu0 %v1871
  %v2452 = vpop.f32.mrf.mxu0
  %v2453 = vadd.f32 %v2168, %v2452
  %v2454 = vpop.f32.mrf.mxu0
  %v2455 = vadd.f32 %v2168, %v2454
  %2456 = vdwg.mxu0
  %2457 = vmatprep.subr.mxu0 %v2067
  %2458 = vmatpush1.msra.mxu0 %v2066
  %2459 = vmatprep.subr.mxu0 %v2063
  %2460 = vmatpush1.msra.mxu0 %v2062
  %2461 = vmatprep.subr.mxu0 %v2059
  %2462 = vmatpush1.msra.mxu0 %v2058
  %2463 = vmatprep.subr.mxu0 %v2055
  %2464 = vmatpush1.msra.mxu0 %v2054
  %2465 = vmatprep.subr.mxu0 %v2051
  %2466 = vmatpush1.msra.mxu0 %v2050
  %2467 = vmatprep.subr.mxu0 %v2047
  %2468 = vmatpush1.msra.mxu0 %v2046
  %2469 = vmatprep.subr.mxu0 %v2043
  %2470 = vmatpush1.msra.mxu0 %v2042
  %2471 = vmatprep.subr.mxu0 %v2039
  %2472 = vmatpush1.msra.mxu0 %v2038
  %2473 = vmatprep.subr.mxu0 %v2035
  %2474 = vmatpush1.msra.mxu0 %v2034
  %2475 = vmatprep.subr.mxu0 %v2031
  %2476 = vmatpush1.msra.mxu0 %v2030
  %2477 = vmatprep.subr.mxu0 %v2027
  %2478 = vmatpush1.msra.mxu0 %v2026
  %2479 = vmatprep.subr.mxu0 %v2023
  %2480 = vmatpush1.msra.mxu0 %v2022
  %2481 = vmatprep.subr.mxu0 %v2019
  %2482 = vmatpush1.msra.mxu0 %v2018
  %2483 = vmatprep.subr.mxu0 %v2015
  %2484 = vmatpush1.msra.mxu0 %v2014
  %2485 = vmatprep.subr.mxu0 %v2011
  %2486 = vmatpush1.msra.mxu0 %v2010
  %2487 = vmatprep.subr.mxu0 %v2007
  %2488 = vmatpush1.msra.mxu0 %v2006
  %2489 = vmatprep.subr.mxu0 %v2131
  %2490 = vmatpush2.msra.mxu0 %v2130
  %2491 = vmatprep.subr.mxu0 %v2127
  %2492 = vmatpush2.msra.mxu0 %v2126
  %2493 = vmatprep.subr.mxu0 %v2123
  %2494 = vmatpush2.msra.mxu0 %v2122
  %2495 = vmatprep.subr.mxu0 %v2119
  %2496 = vmatpush2.msra.mxu0 %v2118
  %2497 = vmatprep.subr.mxu0 %v2115
  %2498 = vmatpush2.msra.mxu0 %v2114
  %2499 = vmatprep.subr.mxu0 %v2111
  %2500 = vmatpush2.msra.mxu0 %v2110
  %2501 = vmatprep.subr.mxu0 %v2107
  %2502 = vmatpush2.msra.mxu0 %v2106
  %2503 = vmatprep.subr.mxu0 %v2103
  %2504 = vmatpush2.msra.mxu0 %v2102
  %2505 = vmatprep.subr.mxu0 %v2099
  %2506 = vmatpush2.msra.mxu0 %v2098
  %2507 = vmatprep.subr.mxu0 %v2095
  %2508 = vmatpush2.msra.mxu0 %v2094
  %2509 = vmatprep.subr.mxu0 %v2091
  %2510 = vmatpush2.msra.mxu0 %v2090
  %2511 = vmatprep.subr.mxu0 %v2087
  %2512 = vmatpush2.msra.mxu0 %v2086
  %2513 = vmatprep.subr.mxu0 %v2083
  %2514 = vmatpush2.msra.mxu0 %v2082
  %2515 = vmatprep.subr.mxu0 %v2079
  %2516 = vmatpush2.msra.mxu0 %v2078
  %2517 = vmatprep.subr.mxu0 %v2075
  %2518 = vmatpush2.msra.mxu0 %v2074
  %2519 = vmatprep.subr.mxu0 %v2071
  %2520 = vmatpush2.msra.mxu0 %v2070
  %2521 = vmatprep.mubr.f32.mxu0 %v1874
  %2522 = vmatmul.mubr.f32.gmra.mxu0 %v1873
  %v2523 = vpop.f32.mrf.mxu0
  %v2524 = vadd.f32 %v2453, %v2523
  %v2525 = vpop.f32.mrf.mxu0
  %v2526 = vadd.f32 %v2455, %v2525
  %2527 = vdwg.mxu0
  %2528 = vmatprep.subr.mxu0 0.0
  %2529 = vmatpush1.msra.mxu0 0.0
  %2530 = vmatprep.subr.mxu0 0.0
  %2531 = vmatpush1.msra.mxu0 0.0
  %2532 = vmatprep.subr.mxu0 0.0
  %2533 = vmatpush1.msra.mxu0 0.0
  %2534 = vmatprep.subr.mxu0 0.0
  %2535 = vmatpush1.msra.mxu0 0.0
  %2536 = vmatprep.subr.mxu0 0.0
  %2537 = vmatpush1.msra.mxu0 0.0
  %2538 = vmatprep.subr.mxu0 0.0
  %2539 = vmatpush1.msra.mxu0 0.0
  %2540 = vmatprep.subr.mxu0 0.0
  %2541 = vmatpush1.msra.mxu0 0.0
  %2542 = vmatprep.subr.mxu0 0.0
  %2543 = vmatpush1.msra.mxu0 0.0
  %2544 = vmatprep.subr.mxu0 %v2163
  %2545 = vmatpush1.msra.mxu0 %v2162
  %2546 = vmatprep.subr.mxu0 %v2159
  %2547 = vmatpush1.msra.mxu0 %v2158
  %2548 = vmatprep.subr.mxu0 %v2155
  %2549 = vmatpush1.msra.mxu0 %v2154
  %2550 = vmatprep.subr.mxu0 %v2151
  %2551 = vmatpush1.msra.mxu0 %v2150
  %2552 = vmatprep.subr.mxu0 %v2147
  %2553 = vmatpush1.msra.mxu0 %v2146
  %2554 = vmatprep.subr.mxu0 %v2143
  %2555 = vmatpush1.msra.mxu0 %v2142
  %2556 = vmatprep.subr.mxu0 %v2139
  %2557 = vmatpush1.msra.mxu0 %v2138
  %2558 = vmatprep.subr.mxu0 %v2135
  %2559 = vmatpush1.msra.mxu0 %v2134
  %2560 = vmatprep.subr.mxu0 0.0
  %2561 = vmatpush2.msra.mxu0 0.0
  %2562 = vmatprep.subr.mxu0 0.0
  %2563 = vmatpush2.msra.mxu0 0.0
  %2564 = vmatprep.subr.mxu0 0.0
  %2565 = vmatpush2.msra.mxu0 0.0
  %2566 = vmatprep.subr.mxu0 0.0
  %2567 = vmatpush2.msra.mxu0 0.0
  %2568 = vmatprep.subr.mxu0 0.0
  %2569 = vmatpush2.msra.mxu0 0.0
  %2570 = vmatprep.subr.mxu0 0.0
  %2571 = vmatpush2.msra.mxu0 0.0
  %2572 = vmatprep.subr.mxu0 0.0
  %2573 = vmatpush2.msra.mxu0 0.0
  %2574 = vmatprep.subr.mxu0 0.0
  %2575 = vmatpush2.msra.mxu0 0.0
  %2576 = vmatprep.subr.mxu0 0.0
  %2577 = vmatpush2.msra.mxu0 0.0
  %2578 = vmatprep.subr.mxu0 0.0
  %2579 = vmatpush2.msra.mxu0 0.0
  %2580 = vmatprep.subr.mxu0 0.0
  %2581 = vmatpush2.msra.mxu0 0.0
  %2582 = vmatprep.subr.mxu0 0.0
  %2583 = vmatpush2.msra.mxu0 0.0
  %2584 = vmatprep.subr.mxu0 0.0
  %2585 = vmatpush2.msra.mxu0 0.0
  %2586 = vmatprep.subr.mxu0 0.0
  %2587 = vmatpush2.msra.mxu0 0.0
  %2588 = vmatprep.subr.mxu0 0.0
  %2589 = vmatpush2.msra.mxu0 0.0
  %2590 = vmatprep.subr.mxu0 0.0
  %2591 = vmatpush2.msra.mxu0 0.0
  %2592 = vmatprep.mubr.f32.mxu0 0.0
  %2593 = vmatmul.mubr.f32.gmra.mxu0 %v2171
  %v2594 = vpop.f32.mrf.mxu0
  %v2595 = vadd.f32 %v2524, %v2594
  %v2596 = vpop.f32.mrf.mxu0
  %v2597 = vadd.f32 %v2526, %v2596
  %2598 = vdwg.mxu0
  %v2599 = vmax.f32 %v2382, 0.0
  %v2600 = vmax.f32 %v2384, 0.0
  %v2601 = vmax.f32 %v2595, 0.0
  %v2602 = vmax.f32 %v2597, 0.0
  %v2603 = vld [vmem:[%s0] sm:$0xff]
  %v2604 = vld [vmem:[%s0 + $0x8] sm:$0xff]
  %v2605 = vld [vmem:[%s1] sm:$0xff]
  %v2606 = vld [vmem:[%s1 + $0x8] sm:$0xff]
  %v2607 = vadd.f32 %v2599, %v2600
  %2608 = vadd.xlane.f32.xlu0 %v2607
  %v2609 = vpop.xlane.xlu0 %2608
  %v2610 = vrcp.pop 256.0
  %v2611 = vmul.f32 %v2609, %v2610
  %v2612 = vsub.f32 %v2599, %v2611
  %v2613 = vsub.f32 %v2600, %v2611
  %v2614 = vmul.f32 %v2612, %v2612
  %v2615 = vmul.f32 %v2613, %v2613
  %v2616 = vadd.f32 %v2614, %v2615
  %2617 = vadd.xlane.f32.xlu0 %v2616
  %v2618 = vpop.xlane.xlu0 %2617
  %v2619 = vmul.f32 %v2618, 0.003921569
  %v2620 = vadd.f32 %v2619, 0.0001
  %v2621 = vmul.f32 %v2620, 4.0
  %v2622 = vrcp.pop %v2621
  %v2623 = vmul.f32 %v2614, %v2622
  %v2624 = vmul.f32 %v2615, %v2622
  %v2625 = vadd.f32 %v2623, 0.5
  %v2626 = vadd.f32 %v2624, 0.5
  %v2627 = vxor.u32 %v2625, 2147483648
  %v2628 = vxor.u32 %v2626, 2147483648
  %v2629 = vmul.f32 %v2627, 1.442695
  %v2630 = vpow.pop %v2629
  %v2631 = vmul.f32 %v2628, 1.442695
  %v2632 = vpow.pop %v2631
  %v2633 = vadd.f32 %v2630, 1.0
  %v2634 = vadd.f32 %v2632, 1.0
  %v2635 = vrcp.pop %v2633
  %v2636 = vmul.f32 1.0, %v2635
  %v2637 = vrcp.pop %v2634
  %v2638 = vmul.f32 1.0, %v2637
  %v2639 = vmul.f32 %v2599, %v2636
  %v2640 = vmul.f32 %v2600, %v2638
  %v2641 = vadd.f32 %v2639, %v2603
  %v2642 = vadd.f32 %v2640, %v2604
  %v2643 = vadd.f32 %v2641, %v2605
  %v2644 = vadd.f32 %v2642, %v2606
  %v2645 = vadd.f32 %v2605, %v2606
  %2646 = vadd.xlane.f32.xlu0 %v2645
  %v2647 = vpop.xlane.xlu0 %2646
  %v2648 = vmul.f32 %v2647, %v2610
  %v2649 = vsub.f32 %v2605, %v2648
  %v2650 = vsub.f32 %v2606, %v2648
  %v2651 = vmul.f32 %v2649, %v2649
  %v2652 = vmul.f32 %v2650, %v2650
  %v2653 = vadd.f32 %v2651, %v2652
  %2654 = vadd.xlane.f32.xlu0 %v2653
  %v2655 = vpop.xlane.xlu0 %2654
  %v2656 = vmul.f32 %v2655, 0.003921569
  %v2657 = vadd.f32 %v2656, 0.0001
  %v2658 = vmul.f32 %v2657, 4.0
  %v2659 = vrcp.pop %v2658
  %v2660 = vmul.f32 %v2651, %v2659
  %v2661 = vmul.f32 %v2652, %v2659
  %v2662 = vadd.f32 %v2660, 0.5
  %v2663 = vadd.f32 %v2661, 0.5
  %v2664 = vxor.u32 %v2662, 2147483648
  %v2665 = vxor.u32 %v2663, 2147483648
  %v2666 = vmul.f32 %v2664, 1.442695
  %v2667 = vpow.pop %v2666
  %v2668 = vmul.f32 %v2665, 1.442695
  %v2669 = vpow.pop %v2668
  %v2670 = vadd.f32 %v2667, 1.0
  %v2671 = vadd.f32 %v2669, 1.0
  %v2672 = vrcp.pop %v2670
  %v2673 = vmul.f32 1.0, %v2672
  %v2674 = vrcp.pop %v2671
  %v2675 = vmul.f32 1.0, %v2674
  %v2676 = vmul.f32 %v2605, %v2673
  %v2677 = vmul.f32 %v2606, %v2675
  %v2678 = vmul.f32 %v2676, %v2599
  %v2679 = vmul.f32 %v2677, %v2600
  %v2680 = vadd.f32 %v2643, %v2678
  %v2681 = vadd.f32 %v2644, %v2679
  %v2682 = vadd.f32 %v2603, %v2604
  %2683 = vadd.xlane.f32.xlu0 %v2682
  %v2684 = vpop.xlane.xlu0 %2683
  %v2685 = vmul.f32 %v2684, %v2610
  %v2686 = vsub.f32 %v2603, %v2685
  %v2687 = vsub.f32 %v2604, %v2685
  %v2688 = vmul.f32 %v2686, %v2686
  %v2689 = vmul.f32 %v2687, %v2687
  %v2690 = vadd.f32 %v2688, %v2689
  %2691 = vadd.xlane.f32.xlu0 %v2690
  %v2692 = vpop.xlane.xlu0 %2691
  %v2693 = vmul.f32 %v2692, 0.003921569
  %v2694 = vadd.f32 %v2693, 0.0001
  %v2695 = vmul.f32 %v2694, 4.0
  %v2696 = vrcp.pop %v2695
  %v2697 = vmul.f32 %v2688, %v2696
  %v2698 = vmul.f32 %v2689, %v2696
  %v2699 = vadd.f32 %v2697, 0.5
  %v2700 = vadd.f32 %v2698, 0.5
  %v2701 = vxor.u32 %v2699, 2147483648
  %v2702 = vxor.u32 %v2700, 2147483648
  %v2703 = vmul.f32 %v2701, 1.442695
  %v2704 = vpow.pop %v2703
  %v2705 = vmul.f32 %v2702, 1.442695
  %v2706 = vpow.pop %v2705
  %v2707 = vadd.f32 %v2704, 1.0
  %v2708 = vadd.f32 %v2706, 1.0
  %v2709 = vrcp.pop %v2707
  %v2710 = vmul.f32 1.0, %v2709
  %v2711 = vrcp.pop %v2708
  %v2712 = vmul.f32 1.0, %v2711
  %v2713 = vmul.f32 %v2603, %v2710
  %v2714 = vmul.f32 %v2604, %v2712
  %v2715 = vmul.f32 %v2713, %v2599
  %v2716 = vmul.f32 %v2714, %v2600
  %v2717 = vadd.f32 %v2680, %v2715
  %v2718 = vadd.f32 %v2681, %v2716
  %2719 = vst [vmem:[#allocation3 + $0x8] sm:$0xff] %v2717
  %2720 = vst [vmem:[#allocation3 + $0x10] sm:$0xff] %v2718
  %v2721 = vld [vmem:[#allocation3] sm:$0xff]
  %v2722 = vld [vmem:[#allocation3 + $0x8] sm:$0xff]
  %v2723 = vld [vmem:[#allocation3 + $0x10] sm:$0xff]
  %v2724 = vld [vmem:[#allocation3 + $0x18] sm:$0xff]
  %2728 = vrot.lane.b32.xlu0 %v2721, 17
  %v2729 = vpop.permute.xlu0 %2728
  %2730 = vrot.lane.b32.xlu0 %v2722, 17
  %v2731 = vpop.permute.xlu0 %2730
  %2732 = vrot.lane.b32.xlu0 %v2723, 17
  %v2733 = vpop.permute.xlu0 %2732
  %v2734 = vsel %vm96, %v2729, %v2731
  %v2735 = vsel %vm96, %v2731, %v2733
  %v2738 = vsel %vm76, %v2734, 0.0
  %v2739 = vsel %vm77, %v2735, 0.0
  %2740 = vst [vmem:[#allocation5] sm:$0xff] %v2738
  %2741 = vst [vmem:[#allocation5 + $0x8] sm:$0xff] %v2739
  %2742 = vrot.lane.b32.xlu0 %v2721, 16
  %v2743 = vpop.permute.xlu0 %2742
  %2744 = vrot.lane.b32.xlu0 %v2722, 16
  %v2745 = vpop.permute.xlu0 %2744
  %2746 = vrot.lane.b32.xlu0 %v2723, 16
  %v2747 = vpop.permute.xlu0 %2746
  %v2748 = vsel %vm125, %v2743, %v2745
  %v2749 = vsel %vm125, %v2745, %v2747
  %2752 = vst [vmem:[#allocation5 + $0x20] sm:$0xff] %v2748
  %2753 = vst [vmem:[#allocation5 + $0x28] sm:$0xff] %v2749
  %2754 = vrot.lane.b32.xlu0 %v2721, 15
  %v2755 = vpop.permute.xlu0 %2754
  %2756 = vrot.lane.b32.xlu0 %v2722, 15
  %v2757 = vpop.permute.xlu0 %2756
  %2758 = vrot.lane.b32.xlu0 %v2723, 15
  %v2759 = vpop.permute.xlu0 %2758
  %v2760 = vsel %vm156, %v2755, %v2757
  %v2761 = vsel %vm156, %v2757, %v2759
  %v2764 = vsel %vm142, %v2760, 0.0
  %v2765 = vsel %vm143, %v2761, 0.0
  %2766 = vst [vmem:[#allocation5 + $0x40] sm:$0xff] %v2764
  %2767 = vst [vmem:[#allocation5 + $0x48] sm:$0xff] %v2765
  %2768 = vrot.lane.b32.xlu0 %v2721, 1
  %v2769 = vpop.permute.xlu0 %2768
  %2770 = vrot.lane.b32.xlu0 %v2722, 1
  %v2771 = vpop.permute.xlu0 %2770
  %2772 = vrot.lane.b32.xlu0 %v2723, 1
  %v2773 = vpop.permute.xlu0 %2772
  %v2774 = vsel %vm185, %v2769, %v2771
  %v2775 = vsel %vm185, %v2771, %v2773
  %v2778 = vsel %vm76, %v2774, 0.0
  %v2779 = vsel %vm77, %v2775, 0.0
  %2780 = vst [vmem:[#allocation5 + $0x60] sm:$0xff] %v2778
  %2781 = vst [vmem:[#allocation5 + $0x68] sm:$0xff] %v2779
  %2782 = vst [vmem:[#allocation5 + $0x80] sm:$0xff] %v2722
  %2783 = vst [vmem:[#allocation5 + $0x88] sm:$0xff] %v2723
  %2785 = vrot.lane.b32.xlu0 %v2722, 127
  %v2786 = vpop.permute.xlu0 %2785
  %2787 = vrot.lane.b32.xlu0 %v2723, 127
  %v2788 = vpop.permute.xlu0 %2787
  %2789 = vrot.lane.b32.xlu0 %v2724, 127
  %v2790 = vpop.permute.xlu0 %2789
  %v2791 = vsel %vm220, %v2786, %v2788
  %v2792 = vsel %vm220, %v2788, %v2790
  %v2795 = vsel %vm142, %v2791, 0.0
  %v2796 = vsel %vm143, %v2792, 0.0
  %2797 = vst [vmem:[#allocation5 + $0xa0] sm:$0xff] %v2795
  %2798 = vst [vmem:[#allocation5 + $0xa8] sm:$0xff] %v2796
  %2799 = vrot.lane.b32.xlu0 %v2722, 113
  %v2800 = vpop.permute.xlu0 %2799
  %2801 = vrot.lane.b32.xlu0 %v2723, 113
  %v2802 = vpop.permute.xlu0 %2801
  %2803 = vrot.lane.b32.xlu0 %v2724, 113
  %v2804 = vpop.permute.xlu0 %2803
  %v2805 = vsel %vm249, %v2800, %v2802
  %v2806 = vsel %vm249, %v2802, %v2804
  %v2809 = vsel %vm76, %v2805, 0.0
  %v2810 = vsel %vm77, %v2806, 0.0
  %2811 = vst [vmem:[#allocation5 + $0xc0] sm:$0xff] %v2809
  %2812 = vst [vmem:[#allocation5 + $0xc8] sm:$0xff] %v2810
  %2813 = vrot.lane.b32.xlu0 %v2722, 112
  %v2814 = vpop.permute.xlu0 %2813
  %2815 = vrot.lane.b32.xlu0 %v2723, 112
  %v2816 = vpop.permute.xlu0 %2815
  %2817 = vrot.lane.b32.xlu0 %v2724, 112
  %v2818 = vpop.permute.xlu0 %2817
  %v2819 = vsel %vm278, %v2814, %v2816
  %v2820 = vsel %vm278, %v2816, %v2818
  %2823 = vst [vmem:[#allocation5 + $0xe0] sm:$0xff] %v2819
  %2824 = vst [vmem:[#allocation5 + $0xe8] sm:$0xff] %v2820
  %2825 = vrot.lane.b32.xlu0 %v2722, 111
  %v2826 = vpop.permute.xlu0 %2825
  %2827 = vrot.lane.b32.xlu0 %v2723, 111
  %v2828 = vpop.permute.xlu0 %2827
  %2829 = vrot.lane.b32.xlu0 %v2724, 111
  %v2830 = vpop.permute.xlu0 %2829
  %v2831 = vsel %vm303, %v2826, %v2828
  %v2832 = vsel %vm303, %v2828, %v2830
  %v2835 = vsel %vm142, %v2831, 0.0
  %v2836 = vsel %vm143, %v2832, 0.0
  %2837 = vst [vmem:[#allocation5 + $0x100] sm:$0xff] %v2835
  %2838 = vst [vmem:[#allocation5 + $0x108] sm:$0xff] %v2836
  %v2839 = vld [vmem:[%s1001] sm:$0xff]
  %v2840 = vld [vmem:[%s1001 + $0x8] sm:$0xff]
  %v2841 = vld [vmem:[%s1006] sm:$0xff]
  %v2842 = vld [vmem:[%s1006 + $0x8] sm:$0xff]
  %v2843 = vadd.f32 %v2601, %v2602
  %2844 = vadd.xlane.f32.xlu0 %v2843
  %v2845 = vpop.xlane.xlu0 %2844
  %v2846 = vmul.f32 %v2845, %v2610
  %v2847 = vsub.f32 %v2601, %v2846
  %v2848 = vsub.f32 %v2602, %v2846
  %v2849 = vmul.f32 %v2847, %v2847
  %v2850 = vmul.f32 %v2848, %v2848
  %v2851 = vadd.f32 %v2849, %v2850
  %2852 = vadd.xlane.f32.xlu0 %v2851
  %v2853 = vpop.xlane.xlu0 %2852
  %v2854 = vmul.f32 %v2853, 0.003921569
  %v2855 = vadd.f32 %v2854, 0.0001
  %v2856 = vmul.f32 %v2855, 4.0
  %v2857 = vrcp.pop %v2856
  %v2858 = vmul.f32 %v2849, %v2857
  %v2859 = vmul.f32 %v2850, %v2857
  %v2860 = vadd.f32 %v2858, 0.5
  %v2861 = vadd.f32 %v2859, 0.5
  %v2862 = vxor.u32 %v2860, 2147483648
  %v2863 = vxor.u32 %v2861, 2147483648
  %v2864 = vmul.f32 %v2862, 1.442695
  %v2865 = vpow.pop %v2864
  %v2866 = vmul.f32 %v2863, 1.442695
  %v2867 = vpow.pop %v2866
  %v2868 = vadd.f32 %v2865, 1.0
  %v2869 = vadd.f32 %v2867, 1.0
  %v2870 = vrcp.pop %v2868
  %v2871 = vmul.f32 1.0, %v2870
  %v2872 = vrcp.pop %v2869
  %v2873 = vmul.f32 1.0, %v2872
  %v2874 = vmul.f32 %v2601, %v2871
  %v2875 = vmul.f32 %v2602, %v2873
  %v2876 = vadd.f32 %v2874, %v2839
  %v2877 = vadd.f32 %v2875, %v2840
  %v2878 = vadd.f32 %v2876, %v2841
  %v2879 = vadd.f32 %v2877, %v2842
  %v2880 = vadd.f32 %v2841, %v2842
  %2881 = vadd.xlane.f32.xlu0 %v2880
  %v2882 = vpop.xlane.xlu0 %2881
  %v2883 = vmul.f32 %v2882, %v2610
  %v2884 = vsub.f32 %v2841, %v2883
  %v2885 = vsub.f32 %v2842, %v2883
  %v2886 = vmul.f32 %v2884, %v2884
  %v2887 = vmul.f32 %v2885, %v2885
  %v2888 = vadd.f32 %v2886, %v2887
  %2889 = vadd.xlane.f32.xlu0 %v2888
  %v2890 = vpop.xlane.xlu0 %2889
  %v2891 = vmul.f32 %v2890, 0.003921569
  %v2892 = vadd.f32 %v2891, 0.0001
  %v2893 = vmul.f32 %v2892, 4.0
  %v2894 = vrcp.pop %v2893
  %v2895 = vmul.f32 %v2886, %v2894
  %v2896 = vmul.f32 %v2887, %v2894
  %v2897 = vadd.f32 %v2895, 0.5
  %v2898 = vadd.f32 %v2896, 0.5
  %v2899 = vxor.u32 %v2897, 2147483648
  %v2900 = vxor.u32 %v2898, 2147483648
  %v2901 = vmul.f32 %v2899, 1.442695
  %v2902 = vpow.pop %v2901
  %v2903 = vmul.f32 %v2900, 1.442695
  %v2904 = vpow.pop %v2903
  %v2905 = vadd.f32 %v2902, 1.0
  %v2906 = vadd.f32 %v2904, 1.0
  %v2907 = vrcp.pop %v2905
  %v2908 = vmul.f32 1.0, %v2907
  %v2909 = vrcp.pop %v2906
  %v2910 = vmul.f32 1.0, %v2909
  %v2911 = vmul.f32 %v2841, %v2908
  %v2912 = vmul.f32 %v2842, %v2910
  %v2913 = vmul.f32 %v2911, %v2601
  %v2914 = vmul.f32 %v2912, %v2602
  %v2915 = vadd.f32 %v2878, %v2913
  %v2916 = vadd.f32 %v2879, %v2914
  %v2917 = vadd.f32 %v2839, %v2840
  %2918 = vadd.xlane.f32.xlu0 %v2917
  %v2919 = vpop.xlane.xlu0 %2918
  %v2920 = vmul.f32 %v2919, %v2610
  %v2921 = vsub.f32 %v2839, %v2920
  %v2922 = vsub.f32 %v2840, %v2920
  %v2923 = vmul.f32 %v2921, %v2921
  %v2924 = vmul.f32 %v2922, %v2922
  %v2925 = vadd.f32 %v2923, %v2924
  %2926 = vadd.xlane.f32.xlu0 %v2925
  %v2927 = vpop.xlane.xlu0 %2926
  %v2928 = vmul.f32 %v2927, 0.003921569
  %v2929 = vadd.f32 %v2928, 0.0001
  %v2930 = vmul.f32 %v2929, 4.0
  %v2931 = vrcp.pop %v2930
  %v2932 = vmul.f32 %v2923, %v2931
  %v2933 = vmul.f32 %v2924, %v2931
  %v2934 = vadd.f32 %v2932, 0.5
  %v2935 = vadd.f32 %v2933, 0.5
  %v2936 = vxor.u32 %v2934, 2147483648
  %v2937 = vxor.u32 %v2935, 2147483648
  %v2938 = vmul.f32 %v2936, 1.442695
  %v2939 = vpow.pop %v2938
  %v2940 = vmul.f32 %v2937, 1.442695
  %v2941 = vpow.pop %v2940
  %v2942 = vadd.f32 %v2939, 1.0
  %v2943 = vadd.f32 %v2941, 1.0
  %v2944 = vrcp.pop %v2942
  %v2945 = vmul.f32 1.0, %v2944
  %v2946 = vrcp.pop %v2943
  %v2947 = vmul.f32 1.0, %v2946
  %v2948 = vmul.f32 %v2839, %v2945
  %v2949 = vmul.f32 %v2840, %v2947
  %v2950 = vmul.f32 %v2948, %v2601
  %v2951 = vmul.f32 %v2949, %v2602
  %v2952 = vadd.f32 %v2915, %v2950
  %v2953 = vadd.f32 %v2916, %v2951
  %2954 = vst [vmem:[#allocation3 + $0x8] sm:$0xff] %v2952
  %2955 = vst [vmem:[#allocation3 + $0x10] sm:$0xff] %v2953
  %v2956 = vld [vmem:[#allocation3] sm:$0xff]
  %v2957 = vld [vmem:[#allocation3 + $0x8] sm:$0xff]
  %v2958 = vld [vmem:[#allocation3 + $0x10] sm:$0xff]
  %v2959 = vld [vmem:[#allocation3 + $0x18] sm:$0xff]
  %2963 = vrot.lane.b32.xlu0 %v2956, 17
  %v2964 = vpop.permute.xlu0 %2963
  %2965 = vrot.lane.b32.xlu0 %v2957, 17
  %v2966 = vpop.permute.xlu0 %2965
  %2967 = vrot.lane.b32.xlu0 %v2958, 17
  %v2968 = vpop.permute.xlu0 %2967
  %v2969 = vsel %vm96, %v2964, %v2966
  %v2970 = vsel %vm96, %v2966, %v2968
  %v2973 = vsel %vm76, %v2969, 0.0
  %v2974 = vsel %vm77, %v2970, 0.0
  %2975 = vst [vmem:[#allocation5 + $0x10] sm:$0xff] %v2973
  %2976 = vst [vmem:[#allocation5 + $0x18] sm:$0xff] %v2974
  %2977 = vrot.lane.b32.xlu0 %v2956, 16
  %v2978 = vpop.permute.xlu0 %2977
  %2979 = vrot.lane.b32.xlu0 %v2957, 16
  %v2980 = vpop.permute.xlu0 %2979
  %2981 = vrot.lane.b32.xlu0 %v2958, 16
  %v2982 = vpop.permute.xlu0 %2981
  %v2983 = vsel %vm125, %v2978, %v2980
  %v2984 = vsel %vm125, %v2980, %v2982
  %2987 = vst [vmem:[#allocation5 + $0x30] sm:$0xff] %v2983
  %2988 = vst [vmem:[#allocation5 + $0x38] sm:$0xff] %v2984
  %2989 = vrot.lane.b32.xlu0 %v2956, 15
  %v2990 = vpop.permute.xlu0 %2989
  %2991 = vrot.lane.b32.xlu0 %v2957, 15
  %v2992 = vpop.permute.xlu0 %2991
  %2993 = vrot.lane.b32.xlu0 %v2958, 15
  %v2994 = vpop.permute.xlu0 %2993
  %v2995 = vsel %vm156, %v2990, %v2992
  %v2996 = vsel %vm156, %v2992, %v2994
  %v2999 = vsel %vm142, %v2995, 0.0
  %v3000 = vsel %vm143, %v2996, 0.0
  %3001 = vst [vmem:[#allocation5 + $0x50] sm:$0xff] %v2999
  %3002 = vst [vmem:[#allocation5 + $0x58] sm:$0xff] %v3000
  %3003 = vrot.lane.b32.xlu0 %v2956, 1
  %v3004 = vpop.permute.xlu0 %3003
  %3005 = vrot.lane.b32.xlu0 %v2957, 1
  %v3006 = vpop.permute.xlu0 %3005
  %3007 = vrot.lane.b32.xlu0 %v2958, 1
  %v3008 = vpop.permute.xlu0 %3007
  %v3009 = vsel %vm185, %v3004, %v3006
  %v3010 = vsel %vm185, %v3006, %v3008
  %v3013 = vsel %vm76, %v3009, 0.0
  %v3014 = vsel %vm77, %v3010, 0.0
  %3015 = vst [vmem:[#allocation5 + $0x70] sm:$0xff] %v3013
  %3016 = vst [vmem:[#allocation5 + $0x78] sm:$0xff] %v3014
  %3017 = vst [vmem:[#allocation5 + $0x90] sm:$0xff] %v2957
  %3018 = vst [vmem:[#allocation5 + $0x98] sm:$0xff] %v2958
  %3020 = vrot.lane.b32.xlu0 %v2957, 127
  %v3021 = vpop.permute.xlu0 %3020
  %3022 = vrot.lane.b32.xlu0 %v2958, 127
  %v3023 = vpop.permute.xlu0 %3022
  %3024 = vrot.lane.b32.xlu0 %v2959, 127
  %v3025 = vpop.permute.xlu0 %3024
  %v3026 = vsel %vm220, %v3021, %v3023
  %v3027 = vsel %vm220, %v3023, %v3025
  %v3030 = vsel %vm142, %v3026, 0.0
  %v3031 = vsel %vm143, %v3027, 0.0
  %3032 = vst [vmem:[#allocation5 + $0xb0] sm:$0xff] %v3030
  %3033 = vst [vmem:[#allocation5 + $0xb8] sm:$0xff] %v3031
  %3034 = vrot.lane.b32.xlu0 %v2957, 113
  %v3035 = vpop.permute.xlu0 %3034
  %3036 = vrot.lane.b32.xlu0 %v2958, 113
  %v3037 = vpop.permute.xlu0 %3036
  %3038 = vrot.lane.b32.xlu0 %v2959, 113
  %v3039 = vpop.permute.xlu0 %3038
  %v3040 = vsel %vm249, %v3035, %v3037
  %v3041 = vsel %vm249, %v3037, %v3039
  %v3044 = vsel %vm76, %v3040, 0.0
  %v3045 = vsel %vm77, %v3041, 0.0
  %3046 = vst [vmem:[#allocation5 + $0xd0] sm:$0xff] %v3044
  %3047 = vst [vmem:[#allocation5 + $0xd8] sm:$0xff] %v3045
  %3048 = vrot.lane.b32.xlu0 %v2957, 112
  %v3049 = vpop.permute.xlu0 %3048
  %3050 = vrot.lane.b32.xlu0 %v2958, 112
  %v3051 = vpop.permute.xlu0 %3050
  %3052 = vrot.lane.b32.xlu0 %v2959, 112
  %v3053 = vpop.permute.xlu0 %3052
  %v3054 = vsel %vm278, %v3049, %v3051
  %v3055 = vsel %vm278, %v3051, %v3053
  %3058 = vst [vmem:[#allocation5 + $0xf0] sm:$0xff] %v3054
  %3059 = vst [vmem:[#allocation5 + $0xf8] sm:$0xff] %v3055
  %3060 = vrot.lane.b32.xlu0 %v2957, 111
  %v3061 = vpop.permute.xlu0 %3060
  %3062 = vrot.lane.b32.xlu0 %v2958, 111
  %v3063 = vpop.permute.xlu0 %3062
  %3064 = vrot.lane.b32.xlu0 %v2959, 111
  %v3065 = vpop.permute.xlu0 %3064
  %v3066 = vsel %vm303, %v3061, %v3063
  %v3067 = vsel %vm303, %v3063, %v3065
  %v3070 = vsel %vm142, %v3066, 0.0
  %v3071 = vsel %vm143, %v3067, 0.0
  %3072 = vst [vmem:[#allocation5 + $0x110] sm:$0xff] %v3070
  %3073 = vst [vmem:[#allocation5 + $0x118] sm:$0xff] %v3071
  %v3074 = vld [vmem:[%s4] sm:$0xff]
  %v3075 = vld [vmem:[#allocation5] sm:$0xff]
  %v3076 = vld [vmem:[#allocation5 + $0x8] sm:$0xff]
  %v3077 = vld [vmem:[#allocation5 + $0x10] sm:$0xff]
  %v3078 = vld [vmem:[#allocation5 + $0x18] sm:$0xff]
  %v3079 = vld [vmem:[#allocation5 + $0x20] sm:$0xff]
  %v3080 = vld [vmem:[#allocation5 + $0x28] sm:$0xff]
  %v3081 = vld [vmem:[#allocation5 + $0x30] sm:$0xff]
  %v3082 = vld [vmem:[#allocation5 + $0x38] sm:$0xff]
  %v3083 = vld [vmem:[#allocation5 + $0x40] sm:$0xff]
  %v3084 = vld [vmem:[#allocation5 + $0x48] sm:$0xff]
  %v3085 = vld [vmem:[#allocation5 + $0x50] sm:$0xff]
  %v3086 = vld [vmem:[#allocation5 + $0x58] sm:$0xff]
  %v3087 = vld [vmem:[#allocation5 + $0x60] sm:$0xff]
  %v3088 = vld [vmem:[#allocation5 + $0x68] sm:$0xff]
  %v3089 = vld [vmem:[#allocation5 + $0x70] sm:$0xff]
  %v3090 = vld [vmem:[#allocation5 + $0x78] sm:$0xff]
  %v3091 = vld [vmem:[#allocation5 + $0x80] sm:$0xff]
  %v3092 = vld [vmem:[#allocation5 + $0x88] sm:$0xff]
  %v3093 = vld [vmem:[#allocation5 + $0x90] sm:$0xff]
  %v3094 = vld [vmem:[#allocation5 + $0x98] sm:$0xff]
  %v3095 = vld [vmem:[#allocation5 + $0xa0] sm:$0xff]
  %v3096 = vld [vmem:[#allocation5 + $0xa8] sm:$0xff]
  %v3097 = vld [vmem:[#allocation5 + $0xb0] sm:$0xff]
  %v3098 = vld [vmem:[#allocation5 + $0xb8] sm:$0xff]
  %v3099 = vld [vmem:[#allocation5 + $0xc0] sm:$0xff]
  %v3100 = vld [vmem:[#allocation5 + $0xc8] sm:$0xff]
  %v3101 = vld [vmem:[#allocation5 + $0xd0] sm:$0xff]
  %v3102 = vld [vmem:[#allocation5 + $0xd8] sm:$0xff]
  %v3103 = vld [vmem:[#allocation5 + $0xe0] sm:$0xff]
  %v3104 = vld [vmem:[#allocation5 + $0xe8] sm:$0xff]
  %v3105 = vld [vmem:[#allocation5 + $0xf0] sm:$0xff]
  %v3106 = vld [vmem:[#allocation5 + $0xf8] sm:$0xff]
  %v3107 = vld [vmem:[#allocation5 + $0x100] sm:$0xff]
  %v3108 = vld [vmem:[#allocation5 + $0x108] sm:$0xff]
  %v3109 = vld [vmem:[#allocation5 + $0x110] sm:$0xff]
  %v3110 = vld [vmem:[#allocation5 + $0x118] sm:$0xff]
  %v3111 = vld [vmem:[%s5] sm:$0xff]
  %3113 = vset.pattern.permute.xlu0 0
  %3114 = vperm.xlu0 %3113, %v3111
  %v3115 = vpop.permute.xlu0 %3114
  %vm3117 = vcmask 588800
  %v3119 = vsel %vm3117, %v3074, 0
  %3121 = vmatprep.subr.mxu0 0.0
  %3122 = vmatpush1.msra.mxu0 0.0
  %3123 = vmatprep.subr.mxu0 0.0
  %3124 = vmatpush1.msra.mxu0 0.0
  %3125 = vmatprep.subr.mxu0 0.0
  %3126 = vmatpush1.msra.mxu0 0.0
  %3127 = vmatprep.subr.mxu0 0.0
  %3128 = vmatpush1.msra.mxu0 0.0
  %3129 = vmatprep.subr.mxu0 0.0
  %3130 = vmatpush1.msra.mxu0 0.0
  %3131 = vmatprep.subr.mxu0 0.0
  %3132 = vmatpush1.msra.mxu0 0.0
  %3133 = vmatprep.subr.mxu0 0.0
  %3134 = vmatpush1.msra.mxu0 0.0
  %3135 = vmatprep.subr.mxu0 %v3108
  %3136 = vmatpush1.msra.mxu0 %v3107
  %3137 = vmatprep.subr.mxu0 %v3104
  %3138 = vmatpush1.msra.mxu0 %v3103
  %3139 = vmatprep.subr.mxu0 %v3100
  %3140 = vmatpush1.msra.mxu0 %v3099
  %3141 = vmatprep.subr.mxu0 %v3096
  %3142 = vmatpush1.msra.mxu0 %v3095
  %3143 = vmatprep.subr.mxu0 %v3092
  %3144 = vmatpush1.msra.mxu0 %v3091
  %3145 = vmatprep.subr.mxu0 %v3088
  %3146 = vmatpush1.msra.mxu0 %v3087
  %3147 = vmatprep.subr.mxu0 %v3084
  %3148 = vmatpush1.msra.mxu0 %v3083
  %3149 = vmatprep.subr.mxu0 %v3080
  %3150 = vmatpush1.msra.mxu0 %v3079
  %3151 = vmatprep.subr.mxu0 %v3076
  %3152 = vmatpush1.msra.mxu0 %v3075
  %3153 = vmatprep.subr.mxu0 0.0
  %3154 = vmatpush2.msra.mxu0 0.0
  %3155 = vmatprep.subr.mxu0 0.0
  %3156 = vmatpush2.msra.mxu0 0.0
  %3157 = vmatprep.subr.mxu0 0.0
  %3158 = vmatpush2.msra.mxu0 0.0
  %3159 = vmatprep.subr.mxu0 0.0
  %3160 = vmatpush2.msra.mxu0 0.0
  %3161 = vmatprep.subr.mxu0 0.0
  %3162 = vmatpush2.msra.mxu0 0.0
  %3163 = vmatprep.subr.mxu0 0.0
  %3164 = vmatpush2.msra.mxu0 0.0
  %3165 = vmatprep.subr.mxu0 0.0
  %3166 = vmatpush2.msra.mxu0 0.0
  %3167 = vmatprep.subr.mxu0 0.0
  %3168 = vmatpush2.msra.mxu0 0.0
  %3169 = vmatprep.subr.mxu0 0.0
  %3170 = vmatpush2.msra.mxu0 0.0
  %3171 = vmatprep.subr.mxu0 0.0
  %3172 = vmatpush2.msra.mxu0 0.0
  %3173 = vmatprep.subr.mxu0 0.0
  %3174 = vmatpush2.msra.mxu0 0.0
  %3175 = vmatprep.subr.mxu0 0.0
  %3176 = vmatpush2.msra.mxu0 0.0
  %3177 = vmatprep.subr.mxu0 0.0
  %3178 = vmatpush2.msra.mxu0 0.0
  %3179 = vmatprep.subr.mxu0 0.0
  %3180 = vmatpush2.msra.mxu0 0.0
  %3181 = vmatprep.subr.mxu0 0.0
  %3182 = vmatpush2.msra.mxu0 0.0
  %3183 = vmatprep.subr.mxu0 0.0
  %3184 = vmatpush2.msra.mxu0 0.0
  %3185 = vmatprep.mubr.f32.mxu0 0.0
  %3186 = vmatmul.mubr.f32.gmra.mxu0 %v3119
  %v3187 = vpop.f32.mrf.mxu0
  %v3188 = vadd.f32 %v3115, %v3187
  %v3189 = vpop.f32.mrf.mxu0
  %v3190 = vadd.f32 %v3115, %v3189
  %3191 = vdwg.mxu0
  %3192 = vmatprep.subr.mxu0 0.0
  %3193 = vmatpush1.msra.mxu0 0.0
  %3194 = vmatprep.subr.mxu0 0.0
  %3195 = vmatpush1.msra.mxu0 0.0
  %3196 = vmatprep.subr.mxu0 0.0
  %3197 = vmatpush1.msra.mxu0 0.0
  %3198 = vmatprep.subr.mxu0 0.0
  %3199 = vmatpush1.msra.mxu0 0.0
  %3200 = vmatprep.subr.mxu0 0.0
  %3201 = vmatpush1.msra.mxu0 0.0
  %3202 = vmatprep.subr.mxu0 0.0
  %3203 = vmatpush1.msra.mxu0 0.0
  %3204 = vmatprep.subr.mxu0 0.0
  %3205 = vmatpush1.msra.mxu0 0.0
  %3206 = vmatprep.subr.mxu0 %v3110
  %3207 = vmatpush1.msra.mxu0 %v3109
  %3208 = vmatprep.subr.mxu0 %v3106
  %3209 = vmatpush1.msra.mxu0 %v3105
  %3210 = vmatprep.subr.mxu0 %v3102
  %3211 = vmatpush1.msra.mxu0 %v3101
  %3212 = vmatprep.subr.mxu0 %v3098
  %3213 = vmatpush1.msra.mxu0 %v3097
  %3214 = vmatprep.subr.mxu0 %v3094
  %3215 = vmatpush1.msra.mxu0 %v3093
  %3216 = vmatprep.subr.mxu0 %v3090
  %3217 = vmatpush1.msra.mxu0 %v3089
  %3218 = vmatprep.subr.mxu0 %v3086
  %3219 = vmatpush1.msra.mxu0 %v3085
  %3220 = vmatprep.subr.mxu0 %v3082
  %3221 = vmatpush1.msra.mxu0 %v3081
  %3222 = vmatprep.subr.mxu0 %v3078
  %3223 = vmatpush1.msra.mxu0 %v3077
  %3224 = vmatprep.subr.mxu0 0.0
  %3225 = vmatpush2.msra.mxu0 0.0
  %3226 = vmatprep.subr.mxu0 0.0
  %3227 = vmatpush2.msra.mxu0 0.0
  %3228 = vmatprep.subr.mxu0 0.0
  %3229 = vmatpush2.msra.mxu0 0.0
  %3230 = vmatprep.subr.mxu0 0.0
  %3231 = vmatpush2.msra.mxu0 0.0
  %3232 = vmatprep.subr.mxu0 0.0
  %3233 = vmatpush2.msra.mxu0 0.0
  %3234 = vmatprep.subr.mxu0 0.0
  %3235 = vmatpush2.msra.mxu0 0.0
  %3236 = vmatprep.subr.mxu0 0.0
  %3237 = vmatpush2.msra.mxu0 0.0
  %3238 = vmatprep.subr.mxu0 0.0
  %3239 = vmatpush2.msra.mxu0 0.0
  %3240 = vmatprep.subr.mxu0 0.0
  %3241 = vmatpush2.msra.mxu0 0.0
  %3242 = vmatprep.subr.mxu0 0.0
  %3243 = vmatpush2.msra.mxu0 0.0
  %3244 = vmatprep.subr.mxu0 0.0
  %3245 = vmatpush2.msra.mxu0 0.0
  %3246 = vmatprep.subr.mxu0 0.0
  %3247 = vmatpush2.msra.mxu0 0.0
  %3248 = vmatprep.subr.mxu0 0.0
  %3249 = vmatpush2.msra.mxu0 0.0
  %3250 = vmatprep.subr.mxu0 0.0
  %3251 = vmatpush2.msra.mxu0 0.0
  %3252 = vmatprep.subr.mxu0 0.0
  %3253 = vmatpush2.msra.mxu0 0.0
  %3254 = vmatprep.subr.mxu0 0.0
  %3255 = vmatpush2.msra.mxu0 0.0
  %3256 = vmatprep.mubr.f32.mxu0 0.0
  %3257 = vmatmul.mubr.f32.gmra.mxu0 %v3119
  %v3258 = vpop.f32.mrf.mxu0
  %v3259 = vadd.f32 %v3115, %v3258
  %v3260 = vpop.f32.mrf.mxu0
  %v3261 = vadd.f32 %v3115, %v3260
  %3262 = vdwg.mxu0
  %v3263 = vmax.f32 %v3188, 0.0
  %v3264 = vmax.f32 %v3190, 0.0
  %v3265 = vmax.f32 %v3259, 0.0
  %v3266 = vmax.f32 %v3261, 0.0
  %v3267 = vadd.f32 %v3263, %v3264
  %3268 = vadd.xlane.f32.xlu0 %v3267
  %v3269 = vpop.xlane.xlu0 %3268
  %v3270 = vmul.f32 %v3269, %v2610
  %v3271 = vsub.f32 %v3263, %v3270
  %v3272 = vsub.f32 %v3264, %v3270
  %v3273 = vmul.f32 %v3271, %v3271
  %v3274 = vmul.f32 %v3272, %v3272
  %v3275 = vadd.f32 %v3273, %v3274
  %3276 = vadd.xlane.f32.xlu0 %v3275
  %v3277 = vpop.xlane.xlu0 %3276
  %v3278 = vmul.f32 %v3277, 0.003921569
  %v3279 = vadd.f32 %v3278, 0.0001
  %v3280 = vmul.f32 %v3279, 4.0
  %v3281 = vrcp.pop %v3280
  %v3282 = vmul.f32 %v3273, %v3281
  %v3283 = vmul.f32 %v3274, %v3281
  %v3284 = vadd.f32 %v3282, 0.5
  %v3285 = vadd.f32 %v3283, 0.5
  %v3286 = vxor.u32 %v3284, 2147483648
  %v3287 = vxor.u32 %v3285, 2147483648
  %v3288 = vmul.f32 %v3286, 1.442695
  %v3289 = vpow.pop %v3288
  %v3290 = vmul.f32 %v3287, 1.442695
  %v3291 = vpow.pop %v3290
  %v3292 = vadd.f32 %v3289, 1.0
  %v3293 = vadd.f32 %v3291, 1.0
  %v3294 = vrcp.pop %v3292
  %v3295 = vmul.f32 1.0, %v3294
  %v3296 = vrcp.pop %v3293
  %v3297 = vmul.f32 1.0, %v3296
  %v3298 = vmul.f32 %v3263, %v3295
  %v3299 = vmul.f32 %v3264, %v3297
  %3300 = vst [vmem:[%s6] sm:$0xff] %v3298
  %3301 = vst [vmem:[%s6 + $0x8] sm:$0xff] %v3299
  %v3302 = vadd.f32 %v3265, %v3266
  %3303 = vadd.xlane.f32.xlu0 %v3302
  %v3304 = vpop.xlane.xlu0 %3303
  %v3305 = vmul.f32 %v3304, %v2610
  %v3306 = vsub.f32 %v3265, %v3305
  %v3307 = vsub.f32 %v3266, %v3305
  %v3308 = vmul.f32 %v3306, %v3306
  %v3309 = vmul.f32 %v3307, %v3307
  %v3310 = vadd.f32 %v3308, %v3309
  %3311 = vadd.xlane.f32.xlu0 %v3310
  %v3312 = vpop.xlane.xlu0 %3311
  %v3313 = vmul.f32 %v3312, 0.003921569
  %v3314 = vadd.f32 %v3313, 0.0001
  %v3315 = vmul.f32 %v3314, 4.0
  %v3316 = vrcp.pop %v3315
  %v3317 = vmul.f32 %v3308, %v3316
  %v3318 = vmul.f32 %v3309, %v3316
  %v3319 = vadd.f32 %v3317, 0.5
  %v3320 = vadd.f32 %v3318, 0.5
  %v3321 = vxor.u32 %v3319, 2147483648
  %v3322 = vxor.u32 %v3320, 2147483648
  %v3323 = vmul.f32 %v3321, 1.442695
  %v3324 = vpow.pop %v3323
  %v3325 = vmul.f32 %v3322, 1.442695
  %v3326 = vpow.pop %v3325
  %v3327 = vadd.f32 %v3324, 1.0
  %v3328 = vadd.f32 %v3326, 1.0
  %v3329 = vrcp.pop %v3327
  %v3330 = vmul.f32 1.0, %v3329
  %v3331 = vrcp.pop %v3328
  %v3332 = vmul.f32 1.0, %v3331
  %v3333 = vmul.f32 %v3265, %v3330
  %v3334 = vmul.f32 %v3266, %v3332
  %s3335 = scalar_lea.vmem %s6, 16
  %3336 = vst [vmem:[%s3335] sm:$0xff] %v3333
  %3337 = vst [vmem:[%s3335 + $0x8] sm:$0xff] %v3334
  // Predicated region
  $region26: #{bfam_forward.1} parent=0 // pred_check
    _
  $region27: #{bfam_forward.1} parent=0 // pred_check_branch
    %3339 = sbr.rel (0) target = $region29
  $region28: #{bfam_forward.1} parent=0 // pred_region
    _
  $region29: #{bfam_forward.1} parent=0 // pred_fallthru
    _
  // Predicated region
  $region30: #{bfam_forward.1} parent=0 // pred_check
    _
  $region31: #{bfam_forward.1} parent=0 // pred_check_branch
    %3341 = sbr.rel (0) target = $region33
  $region32: #{bfam_forward.1} parent=0 // pred_region
    _
  $region33: #{bfam_forward.1} parent=0 // pred_fallthru
    _

</llo_original>
